<compile_context>
chip_gen: v7x
topology: tpu7x:2x2x1
jax: 0.10.0
libtpu: 0.0.40
codegen_flags: <defaults>
</compile_context>

<pallas_src>
import functools

import jax
import jax.numpy as jnp
import numpy as np
from jax.experimental import pallas as pl
from jax.experimental.pallas import tpu as pltpu


# --------------------------------------------------------------------------
# Host-side combinadic tables (mirrors Mapping.compute_combinations)
# --------------------------------------------------------------------------
def compute_combinations(M, N):
    c = np.zeros((M + 1, N + 1), dtype=np.int64)
    c[:, 0] = 1
    for m in range(1, M + 1):
        for n in range(1, min(m, N) + 1):
            c[m, n] = c[m - 1, n - 1] + c[m - 1, n]
    return c


def build_tables(M, n_up, n_down):
    """Per-site tables for the fused kernel, in the interleaved site layout
    (even interleaved site = spin-up, odd interleaved site = spin-down).

    Returns:
      AU  : (S, S) bf16  AU[j', j] = 1 if j' even and j' < j   (strict up-prefix)
      AD  : (S, S) bf16  AD[j', j] = 1 if j' odd  and j' < j   (strict down-prefix)
      ttu : (n_up+1, S)   f32  ttu[n, j] = comb_up[M-1-j//2, n]        (j even, else 0)
      ttd : (n_down+1, S) f32  ttd[n, j] = comb_down[M-1-(j-1)//2, n]  (j odd,  else 0)
    All values are 0/1 (AU/AD) or small integers exactly representable in bf16/f32.
    """
    S = 2 * M
    comb_up = compute_combinations(M, n_up)
    comb_down = compute_combinations(M, n_down)

    AU = np.zeros((S, S), dtype=np.float32)
    AD = np.zeros((S, S), dtype=np.float32)
    for j in range(S):
        for jp in range(j):
            if jp % 2 == 0:
                AU[jp, j] = 1.0
            else:
                AD[jp, j] = 1.0

    ttu = np.zeros((n_up + 1, S), dtype=np.float32)
    ttd = np.zeros((n_down + 1, S), dtype=np.float32)
    for j in range(S):
        if j % 2 == 0:
            i = j // 2
            for n in range(n_up + 1):
                ttu[n, j] = float(comb_up[M - 1 - i, n])
        else:
            i = (j - 1) // 2
            for n in range(n_down + 1):
                ttd[n, j] = float(comb_down[M - 1 - i, n])

    return (jnp.asarray(AU, dtype=jnp.bfloat16),
            jnp.asarray(AD, dtype=jnp.bfloat16),
            jnp.asarray(ttu),
            jnp.asarray(ttd))


def _round_up(a, b):
    return ((a + b - 1) // b) * b


# --------------------------------------------------------------------------
# Fused kernel: combinadic indexing + validity + table gather (one pass)
# --------------------------------------------------------------------------
def _fused_kernel(x_ref, au_ref, ad_ref, ttu_ref, ttd_ref, wf_ref, out_ref,
                  *, Sd, n_up, n_down, C):
    xb = x_ref[...]                                   # (TB, S) bf16, 0/1
    xf = xb.astype(jnp.float32)
    TB, S = xf.shape
    Nf_pad = wf_ref.shape[1]

    # exclusive prefix counts of up/down particles before each interleaved site
    # (0/1 bf16 matmul with f32 accumulation -> exact)
    csu = jnp.dot(xb, au_ref[...], preferred_element_type=jnp.float32)   # (TB, S)
    csd = jnp.dot(xb, ad_ref[...], preferred_element_type=jnp.float32)   # (TB, S)
    leftu = float(n_up) - csu
    leftd = float(n_down) - csd

    # combinadic lookup tt[left, j] via a float select/accumulate chain (exact)
    ttu = ttu_ref[...]
    ttd = ttd_ref[...]
    valsu = jnp.zeros_like(leftu)
    for n in range(n_up + 1):
        valsu = valsu + jnp.where(leftu == float(n), ttu[n:n + 1, :], 0.0)
    valsd = jnp.zeros_like(leftd)
    for n in range(n_down + 1):
        valsd = valsd + jnp.where(leftd == float(n), ttd[n:n + 1, :], 0.0)

    idx_u = jnp.sum(xf * valsu, axis=1, keepdims=True)                   # (TB, 1)
    idx_d = jnp.sum(xf * valsd, axis=1, keepdims=True)                   # (TB, 1)

    # validity: exactly n_up particles on even sites and n_down on odd sites
    lane = jax.lax.broadcasted_iota(jnp.int32, (1, S), 1)
    evenf = (lane % 2 == 0).astype(jnp.float32)                          # (1, S)
    sum_u = jnp.sum(xf * evenf, axis=1, keepdims=True)
    sum_d = jnp.sum(xf, axis=1, keepdims=True) - sum_u
    validf = jnp.logical_and(sum_u == float(n_up),
                             sum_d == float(n_down)).astype(jnp.float32)  # (TB, 1)

    # torch semantics: wave_function[i_up*valid, i_down*valid], then zero if invalid
    flat_i = ((idx_u * validf) * float(Sd) + idx_d * validf).astype(jnp.int32)

    # exact gather from the VMEM-resident flattened table: one-hot select + reduce
    col = jax.lax.broadcasted_iota(jnp.int32, (TB, Nf_pad), 1)
    onehot = (col == flat_i)                                             # (TB, Nf_pad)
    cols = []
    for c in range(C):
        g = jnp.sum(jnp.where(onehot, wf_ref[c:c + 1, :], 0.0),
                    axis=1, keepdims=True)                               # (TB, 1)
        cols.append(g * validf)
    for _ in range(8 - C):
        cols.append(jnp.zeros((TB, 1), jnp.float32))

    out_ref[...] = jnp.transpose(jnp.concatenate(cols, axis=1))          # (8, TB)


# --------------------------------------------------------------------------
# Full forward (Real / Complex WaveFunction)
# --------------------------------------------------------------------------
def wave_function_forward(x, wf_real, wf_imag, tables, n_up, n_down):
    """x: (B, L1, L2, orbit) 0/1 occupancy.
    Returns complex64 (B,) if wf_imag is not None, else float32 (B,)."""
    AU, AD, ttu, ttd = tables
    S = AU.shape[0]
    B = x.shape[0]
    x_flat = jnp.reshape(x, (B, -1)).astype(jnp.bfloat16)                # (B, S) 0/1

    if wf_imag is None:
        wf_stack = wf_real[None].astype(jnp.float32)                     # (1, Su, Sd)
    else:
        wf_stack = jnp.stack([wf_real, wf_imag], axis=0).astype(jnp.float32)  # (2, Su, Sd)
    C, Su, Sd = wf_stack.shape
    Nf = Su * Sd
    Nf_pad = _round_up(Nf, 128)
    wf_flat = jnp.reshape(wf_stack, (C, Nf))
    if Nf_pad != Nf:
        wf_flat = jnp.pad(wf_flat, ((0, 0), (0, Nf_pad - Nf)))

    # Batch tiling: big tiles, but keep the grid length >= 2 when possible so
    # v7x's two TensorCores both get work.  Cap the tile so the gather
    # intermediates (~6 x (TB, Nf_pad) f32) stay well under the scoped VMEM limit.
    TB = max(128, min(512, _round_up(pl.cdiv(B, 2), 128)))
    cap = max(128, ((20 * 1024 * 1024) // (Nf_pad * 4 * 6)) // 128 * 128)
    TB = min(TB, cap)
    B_pad = _round_up(B, TB)
    if B_pad != B:
        x_flat = jnp.pad(x_flat, ((0, B_pad - B), (0, 0)))               # padded rows -> invalid

    kernel = functools.partial(_fused_kernel, Sd=Sd, n_up=n_up, n_down=n_down, C=C)
    out = pl.pallas_call(
        kernel,
        out_shape=jax.ShapeDtypeStruct((8, B_pad), jnp.float32),
        grid_spec=pltpu.PrefetchScalarGridSpec(
            num_scalar_prefetch=0,
            grid=(B_pad // TB,),
            in_specs=[
                pl.BlockSpec((TB, S), lambda t: (t, 0)),
                pl.BlockSpec((S, S), lambda t: (0, 0)),
                pl.BlockSpec((S, S), lambda t: (0, 0)),
                pl.BlockSpec((n_up + 1, S), lambda t: (0, 0)),
                pl.BlockSpec((n_down + 1, S), lambda t: (0, 0)),
                pl.BlockSpec((C, Nf_pad), lambda t: (0, 0)),
            ],
            out_specs=pl.BlockSpec((8, TB), lambda t: (0, t)),
        ),
        compiler_params=pltpu.CompilerParams(
            dimension_semantics=("parallel",),
            vmem_limit_bytes=32 * 1024 * 1024,
        ),
    )(x_flat, AU, AD, ttu, ttd, wf_flat)

    if wf_imag is None:
        return out[0, :B]
    return jax.lax.complex(out[0, :B], out[1, :B])


# --------------------------------------------------------------------------
# numpy reference (mirrors the PyTorch module exactly)
# --------------------------------------------------------------------------
def ref_forward(x_np, wf_np, M, n_up, n_down, comb_up, comb_down):
    B = x_np.shape[0]
    xf = x_np.reshape(B, -1)
    xu, xd = xf[:, 0::2], xf[:, 1::2]
    out = np.zeros(B, dtype=np.float64)
    for b in range(B):
        if xu[b].sum() == n_up and xd[b].sum() == n_down:
            iu, left = 0, n_up
            for i in range(M):
                iu += int(comb_up[M - 1 - i, left]) * int(xu[b, i])
                left -= int(xu[b, i])
            idn, left = 0, n_down
            for i in range(M):
                idn += int(comb_down[M - 1 - i, left]) * int(xd[b, i])
                left -= int(xd[b, i])
            out[b] = wf_np[iu, idn]
    return out


if __name__ == "__main__":
    # WaveFunction(L1=4, L2=4, orbit=1, dimension=2, is_complex=True, spin_up=3, spin_down=2)
    L1, L2, orbit = 4, 4, 1
    spin_up, spin_down = 3, 2          # intentionally different -> distinct tables
    B = 320

    sites = L1 * L2 * orbit
    M = sites // 2                     # half_site = 8
    comb_up = compute_combinations(M, spin_up)
    comb_down = compute_combinations(M, spin_down)
    space_up = int(comb_up[M, spin_up])        # C(8,3) = 56
    space_down = int(comb_down[M, spin_down])  # C(8,2) = 28

    tables = build_tables(M, spin_up, spin_down)

    key = jax.random.PRNGKey(0)
    k_wr, k_wi, k_x = jax.random.split(key, 3)
    wf_real = jax.random.normal(k_wr, (space_up, space_down), dtype=jnp.float32)
    wf_imag = jax.random.normal(k_wi, (space_up, space_down), dtype=jnp.float32)

    x = jax.random.bernoulli(k_x, 0.4, (B, L1, L2, orbit)).astype(jnp.int32)
    # force two known-valid configurations (3 up on even sites, 2 down on odd sites)
    x0 = np.zeros(sites, dtype=np.int32); x0[[0, 2, 4, 1, 3]] = 1
    x1 = np.zeros(sites, dtype=np.int32); x1[[2, 8, 14, 5, 11]] = 1
    x = x.at[0].set(jnp.asarray(x0.reshape(L1, L2, orbit)))
    x = x.at[1].set(jnp.asarray(x1.reshape(L1, L2, orbit)))

    # forward: complex (ComplexWaveFunction) and real-only (RealWaveFunction)
    out_c = wave_function_forward(x, wf_real, wf_imag, tables, spin_up, spin_down)
    out_r = wave_function_forward(x, wf_real, None, tables, spin_up, spin_down)
    out_c, out_r = jax.block_until_ready((out_c, out_r))

    # correctness check vs numpy reference
    x_np = np.asarray(x)
    ref_r = ref_forward(x_np, np.asarray(wf_real), M, spin_up, spin_down, comb_up, comb_down)
    ref_i = ref_forward(x_np, np.asarray(wf_imag), M, spin_up, spin_down, comb_up, comb_down)
    np.testing.assert_allclose(np.asarray(out_r), ref_r.astype(np.float32),
                               rtol=1e-6, atol=1e-6)
    np.testing.assert_allclose(np.asarray(out_c), (ref_r + 1j * ref_i).astype(np.complex64),
                               rtol=1e-6, atol=1e-6)

    print("KERNEL_OK")
</pallas_src>

<mosaic_0001>
module attributes {stable_mosaic.version = 11 : i64} {
  func.func @_fused_kernel(%arg0: i32, %arg1: memref<256x16xbf16, #tpu.memory_space<vmem>>, %arg2: memref<16x16xbf16, #tpu.memory_space<vmem>>, %arg3: memref<16x16xbf16, #tpu.memory_space<vmem>>, %arg4: memref<4x16xf32, #tpu.memory_space<vmem>>, %arg5: memref<3x16xf32, #tpu.memory_space<vmem>>, %arg6: memref<2x1664xf32, #tpu.memory_space<vmem>>, %arg7: memref<8x256xf32, #tpu.memory_space<vmem>>) attributes {dimension_semantics = [#tpu.dimension_semantics<parallel>], iteration_bounds = array<i64: 2>, scalar_prefetch = 0 : i64, scratch_operands = 0 : i64, tpu.core_type = #tpu.core_type<tc>, window_params = [{transform_indices = @transform_0, window_bounds = array<i64: 256, 16>}, {pipeline_mode = #tpu.pipeline_mode<synchronous>, transform_indices = @transform_1, window_bounds = array<i64: 16, 16>}, {pipeline_mode = #tpu.pipeline_mode<synchronous>, transform_indices = @transform_2, window_bounds = array<i64: 16, 16>}, {pipeline_mode = #tpu.pipeline_mode<synchronous>, transform_indices = @transform_3, window_bounds = array<i64: 4, 16>}, {pipeline_mode = #tpu.pipeline_mode<synchronous>, transform_indices = @transform_4, window_bounds = array<i64: 3, 16>}, {pipeline_mode = #tpu.pipeline_mode<synchronous>, transform_indices = @transform_5, window_bounds = array<i64: 2, 1664>}, {transform_indices = @transform_6, window_bounds = array<i64: 8, 256>}]} {
    %c0 = arith.constant 0 : index
    %c0_0 = arith.constant 0 : index
    %0 = vector.load %arg1[%c0, %c0_0] : memref<256x16xbf16, #tpu.memory_space<vmem>>, vector<256x16xbf16>
    %1 = arith.extf %0 : vector<256x16xbf16> to vector<256x16xf32>
    %c0_1 = arith.constant 0 : index
    %c0_2 = arith.constant 0 : index
    %2 = vector.load %arg2[%c0_1, %c0_2] : memref<16x16xbf16, #tpu.memory_space<vmem>>, vector<16x16xbf16>
    %cst = arith.constant dense<0.000000e+00> : vector<256x16xf32>
    %3 = tpu.matmul %0, %2, %cst {dimension_numbers = #tpu.dot_dimension_numbers<[1], [0], [0], [1], [0, 0, 1, 1], [], []>} : vector<256x16xbf16>, vector<16x16xbf16>, vector<256x16xf32> -> vector<256x16xf32>
    %c0_3 = arith.constant 0 : index
    %c0_4 = arith.constant 0 : index
    %4 = vector.load %arg3[%c0_3, %c0_4] : memref<16x16xbf16, #tpu.memory_space<vmem>>, vector<16x16xbf16>
    %cst_5 = arith.constant dense<0.000000e+00> : vector<256x16xf32>
    %5 = tpu.matmul %0, %4, %cst_5 {dimension_numbers = #tpu.dot_dimension_numbers<[1], [0], [0], [1], [0, 0, 1, 1], [], []>} : vector<256x16xbf16>, vector<16x16xbf16>, vector<256x16xf32> -> vector<256x16xf32>
    %cst_6 = arith.constant 3.000000e+00 : f32
    %6 = vector.broadcast %cst_6 : f32 to vector<256x16xf32>
    %7 = arith.subf %6, %3 : vector<256x16xf32>
    %cst_7 = arith.constant 2.000000e+00 : f32
    %8 = vector.broadcast %cst_7 : f32 to vector<256x16xf32>
    %9 = arith.subf %8, %5 : vector<256x16xf32>
    %c0_8 = arith.constant 0 : index
    %c0_9 = arith.constant 0 : index
    %10 = vector.load %arg4[%c0_8, %c0_9] : memref<4x16xf32, #tpu.memory_space<vmem>>, vector<4x16xf32>
    %c0_10 = arith.constant 0 : index
    %c0_11 = arith.constant 0 : index
    %11 = vector.load %arg5[%c0_10, %c0_11] : memref<3x16xf32, #tpu.memory_space<vmem>>, vector<3x16xf32>
    %cst_12 = arith.constant 0.000000e+00 : f32
    %12 = vector.broadcast %cst_12 : f32 to vector<256x16xf32>
    %cst_13 = arith.constant 0.000000e+00 : f32
    %13 = vector.broadcast %cst_13 : f32 to vector<256x16xf32>
    %14 = arith.cmpf oeq, %7, %13 : vector<256x16xf32>
    %15 = vector.extract_strided_slice %10 {offsets = [0, 0], sizes = [1, 16], strides = [1, 1]} : vector<4x16xf32> to vector<1x16xf32>
    %cst_14 = arith.constant 0.000000e+00 : f32
    %16 = vector.shape_cast %15 : vector<1x16xf32> to vector<1x16xf32>
    %17 = vector.broadcast %16 : vector<1x16xf32> to vector<256x16xf32>
    %18 = vector.broadcast %cst_14 : f32 to vector<256x16xf32>
    %19 = arith.select %14, %17, %18 : vector<256x16xi1>, vector<256x16xf32>
    %20 = arith.addf %12, %19 : vector<256x16xf32>
    %cst_15 = arith.constant 1.000000e+00 : f32
    %21 = vector.broadcast %cst_15 : f32 to vector<256x16xf32>
    %22 = arith.cmpf oeq, %7, %21 : vector<256x16xf32>
    %23 = vector.extract_strided_slice %10 {offsets = [1, 0], sizes = [1, 16], strides = [1, 1]} : vector<4x16xf32> to vector<1x16xf32>
    %cst_16 = arith.constant 0.000000e+00 : f32
    %24 = vector.shape_cast %23 : vector<1x16xf32> to vector<1x16xf32>
    %25 = vector.broadcast %24 : vector<1x16xf32> to vector<256x16xf32>
    %26 = vector.broadcast %cst_16 : f32 to vector<256x16xf32>
    %27 = arith.select %22, %25, %26 : vector<256x16xi1>, vector<256x16xf32>
    %28 = arith.addf %20, %27 : vector<256x16xf32>
    %cst_17 = arith.constant 2.000000e+00 : f32
    %29 = vector.broadcast %cst_17 : f32 to vector<256x16xf32>
    %30 = arith.cmpf oeq, %7, %29 : vector<256x16xf32>
    %31 = vector.extract_strided_slice %10 {offsets = [2, 0], sizes = [1, 16], strides = [1, 1]} : vector<4x16xf32> to vector<1x16xf32>
    %cst_18 = arith.constant 0.000000e+00 : f32
    %32 = vector.shape_cast %31 : vector<1x16xf32> to vector<1x16xf32>
    %33 = vector.broadcast %32 : vector<1x16xf32> to vector<256x16xf32>
    %34 = vector.broadcast %cst_18 : f32 to vector<256x16xf32>
    %35 = arith.select %30, %33, %34 : vector<256x16xi1>, vector<256x16xf32>
    %36 = arith.addf %28, %35 : vector<256x16xf32>
    %cst_19 = arith.constant 3.000000e+00 : f32
    %37 = vector.broadcast %cst_19 : f32 to vector<256x16xf32>
    %38 = arith.cmpf oeq, %7, %37 : vector<256x16xf32>
    %39 = vector.extract_strided_slice %10 {offsets = [3, 0], sizes = [1, 16], strides = [1, 1]} : vector<4x16xf32> to vector<1x16xf32>
    %cst_20 = arith.constant 0.000000e+00 : f32
    %40 = vector.shape_cast %39 : vector<1x16xf32> to vector<1x16xf32>
    %41 = vector.broadcast %40 : vector<1x16xf32> to vector<256x16xf32>
    %42 = vector.broadcast %cst_20 : f32 to vector<256x16xf32>
    %43 = arith.select %38, %41, %42 : vector<256x16xi1>, vector<256x16xf32>
    %44 = arith.addf %36, %43 : vector<256x16xf32>
    %cst_21 = arith.constant 0.000000e+00 : f32
    %45 = vector.broadcast %cst_21 : f32 to vector<256x16xf32>
    %cst_22 = arith.constant 0.000000e+00 : f32
    %46 = vector.broadcast %cst_22 : f32 to vector<256x16xf32>
    %47 = arith.cmpf oeq, %9, %46 : vector<256x16xf32>
    %48 = vector.extract_strided_slice %11 {offsets = [0, 0], sizes = [1, 16], strides = [1, 1]} : vector<3x16xf32> to vector<1x16xf32>
    %cst_23 = arith.constant 0.000000e+00 : f32
    %49 = vector.shape_cast %48 : vector<1x16xf32> to vector<1x16xf32>
    %50 = vector.broadcast %49 : vector<1x16xf32> to vector<256x16xf32>
    %51 = vector.broadcast %cst_23 : f32 to vector<256x16xf32>
    %52 = arith.select %47, %50, %51 : vector<256x16xi1>, vector<256x16xf32>
    %53 = arith.addf %45, %52 : vector<256x16xf32>
    %cst_24 = arith.constant 1.000000e+00 : f32
    %54 = vector.broadcast %cst_24 : f32 to vector<256x16xf32>
    %55 = arith.cmpf oeq, %9, %54 : vector<256x16xf32>
    %56 = vector.extract_strided_slice %11 {offsets = [1, 0], sizes = [1, 16], strides = [1, 1]} : vector<3x16xf32> to vector<1x16xf32>
    %cst_25 = arith.constant 0.000000e+00 : f32
    %57 = vector.shape_cast %56 : vector<1x16xf32> to vector<1x16xf32>
    %58 = vector.broadcast %57 : vector<1x16xf32> to vector<256x16xf32>
    %59 = vector.broadcast %cst_25 : f32 to vector<256x16xf32>
    %60 = arith.select %55, %58, %59 : vector<256x16xi1>, vector<256x16xf32>
    %61 = arith.addf %53, %60 : vector<256x16xf32>
    %cst_26 = arith.constant 2.000000e+00 : f32
    %62 = vector.broadcast %cst_26 : f32 to vector<256x16xf32>
    %63 = arith.cmpf oeq, %9, %62 : vector<256x16xf32>
    %64 = vector.extract_strided_slice %11 {offsets = [2, 0], sizes = [1, 16], strides = [1, 1]} : vector<3x16xf32> to vector<1x16xf32>
    %cst_27 = arith.constant 0.000000e+00 : f32
    %65 = vector.shape_cast %64 : vector<1x16xf32> to vector<1x16xf32>
    %66 = vector.broadcast %65 : vector<1x16xf32> to vector<256x16xf32>
    %67 = vector.broadcast %cst_27 : f32 to vector<256x16xf32>
    %68 = arith.select %63, %66, %67 : vector<256x16xi1>, vector<256x16xf32>
    %69 = arith.addf %61, %68 : vector<256x16xf32>
    %70 = arith.mulf %1, %44 : vector<256x16xf32>
    %cst_28 = arith.constant dense<0.000000e+00> : vector<256xf32>
    %71 = vector.multi_reduction <add>, %70, %cst_28 [1] : vector<256x16xf32> to vector<256xf32>
    %72 = vector.shape_cast %71 : vector<256xf32> to vector<256x1xf32>
    %73 = arith.mulf %1, %69 : vector<256x16xf32>
    %cst_29 = arith.constant dense<0.000000e+00> : vector<256xf32>
    %74 = vector.multi_reduction <add>, %73, %cst_29 [1] : vector<256x16xf32> to vector<256xf32>
    %75 = vector.shape_cast %74 : vector<256xf32> to vector<256x1xf32>
    %76 = tpu.iota {dimensions = array<i32: 1>} : vector<1x16xi32>
    %c2_i32 = arith.constant 2 : i32
    %c0_i32 = arith.constant 0 : i32
    %77 = arith.cmpi eq, %c2_i32, %c0_i32 : i32
    %c1_i32 = arith.constant 1 : i32
    %78 = arith.select %77, %c1_i32, %c2_i32 : i32
    %79 = vector.broadcast %78 : i32 to vector<1x16xi32>
    %80 = arith.remsi %76, %79 : vector<1x16xi32>
    %c0_i32_30 = arith.constant 0 : i32
    %81 = vector.broadcast %c0_i32_30 : i32 to vector<1x16xi32>
    %82 = arith.cmpi ne, %80, %81 : vector<1x16xi32>
    %c0_i32_31 = arith.constant 0 : i32
    %83 = vector.broadcast %c0_i32_31 : i32 to vector<1x16xi32>
    %84 = arith.cmpi slt, %80, %83 : vector<1x16xi32>
    %c0_i32_32 = arith.constant 0 : i32
    %85 = arith.cmpi slt, %78, %c0_i32_32 : i32
    %86 = vector.broadcast %85 : i1 to vector<1x16xi1>
    %87 = vector.broadcast %86 : vector<1x16xi1> to vector<1x16xi1>
    %88 = arith.xori %84, %87 : vector<1x16xi1>
    %89 = arith.andi %88, %82 : vector<1x16xi1>
    %90 = vector.broadcast %78 : i32 to vector<1x16xi32>
    %91 = arith.addi %80, %90 : vector<1x16xi32>
    %92 = arith.select %89, %91, %80 : vector<1x16xi1>, vector<1x16xi32>
    %c0_i32_33 = arith.constant 0 : i32
    %93 = vector.broadcast %c0_i32_33 : i32 to vector<1x16xi32>
    %94 = arith.cmpi eq, %92, %93 : vector<1x16xi32>
    %95 = arith.extui %94 : vector<1x16xi1> to vector<1x16xi32>
    %96 = arith.sitofp %95 : vector<1x16xi32> to vector<1x16xf32>
    %97 = vector.broadcast %96 : vector<1x16xf32> to vector<256x16xf32>
    %98 = arith.mulf %1, %97 : vector<256x16xf32>
    %cst_34 = arith.constant dense<0.000000e+00> : vector<256xf32>
    %99 = vector.multi_reduction <add>, %98, %cst_34 [1] : vector<256x16xf32> to vector<256xf32>
    %100 = vector.shape_cast %99 : vector<256xf32> to vector<256x1xf32>
    %cst_35 = arith.constant dense<0.000000e+00> : vector<256xf32>
    %101 = vector.multi_reduction <add>, %1, %cst_35 [1] : vector<256x16xf32> to vector<256xf32>
    %102 = vector.shape_cast %101 : vector<256xf32> to vector<256x1xf32>
    %103 = arith.subf %102, %100 : vector<256x1xf32>
    %cst_36 = arith.constant 3.000000e+00 : f32
    %104 = vector.broadcast %cst_36 : f32 to vector<256x1xf32>
    %105 = arith.cmpf oeq, %100, %104 : vector<256x1xf32>
    %cst_37 = arith.constant 2.000000e+00 : f32
    %106 = vector.broadcast %cst_37 : f32 to vector<256x1xf32>
    %107 = arith.cmpf oeq, %103, %106 : vector<256x1xf32>
    %108 = arith.andi %105, %107 : vector<256x1xi1>
    %109 = arith.extui %108 : vector<256x1xi1> to vector<256x1xi32>
    %110 = arith.sitofp %109 : vector<256x1xi32> to vector<256x1xf32>
    %111 = arith.mulf %72, %110 : vector<256x1xf32>
    %cst_38 = arith.constant 2.800000e+01 : f32
    %112 = vector.broadcast %cst_38 : f32 to vector<256x1xf32>
    %113 = arith.mulf %111, %112 : vector<256x1xf32>
    %114 = arith.mulf %75, %110 : vector<256x1xf32>
    %115 = arith.addf %113, %114 : vector<256x1xf32>
    %116 = arith.fptosi %115 : vector<256x1xf32> to vector<256x1xi32>
    %117 = tpu.iota {dimensions = array<i32: 1>} : vector<256x1664xi32>
    %118 = vector.broadcast %116 : vector<256x1xi32> to vector<256x1664xi32>
    %119 = arith.cmpi eq, %117, %118 : vector<256x1664xi32>
    %c0_39 = arith.constant 0 : index
    %c0_40 = arith.constant 0 : index
    %120 = vector.load %arg6[%c0_39, %c0_40] : memref<2x1664xf32, #tpu.memory_space<vmem>>, vector<1x1664xf32>
    %cst_41 = arith.constant 0.000000e+00 : f32
    %121 = vector.shape_cast %120 : vector<1x1664xf32> to vector<1x1664xf32>
    %122 = vector.broadcast %121 : vector<1x1664xf32> to vector<256x1664xf32>
    %123 = vector.broadcast %cst_41 : f32 to vector<256x1664xf32>
    %124 = arith.select %119, %122, %123 : vector<256x1664xi1>, vector<256x1664xf32>
    %cst_42 = arith.constant dense<0.000000e+00> : vector<256xf32>
    %125 = vector.multi_reduction <add>, %124, %cst_42 [1] : vector<256x1664xf32> to vector<256xf32>
    %126 = vector.shape_cast %125 : vector<256xf32> to vector<256x1xf32>
    %127 = arith.mulf %126, %110 : vector<256x1xf32>
    %c1 = arith.constant 1 : index
    %c0_43 = arith.constant 0 : index
    %128 = vector.load %arg6[%c1, %c0_43] : memref<2x1664xf32, #tpu.memory_space<vmem>>, vector<1x1664xf32>
    %cst_44 = arith.constant 0.000000e+00 : f32
    %129 = vector.shape_cast %128 : vector<1x1664xf32> to vector<1x1664xf32>
    %130 = vector.broadcast %129 : vector<1x1664xf32> to vector<256x1664xf32>
    %131 = vector.broadcast %cst_44 : f32 to vector<256x1664xf32>
    %132 = arith.select %119, %130, %131 : vector<256x1664xi1>, vector<256x1664xf32>
    %cst_45 = arith.constant dense<0.000000e+00> : vector<256xf32>
    %133 = vector.multi_reduction <add>, %132, %cst_45 [1] : vector<256x1664xf32> to vector<256xf32>
    %134 = vector.shape_cast %133 : vector<256xf32> to vector<256x1xf32>
    %135 = arith.mulf %134, %110 : vector<256x1xf32>
    %cst_46 = arith.constant 0.000000e+00 : f32
    %136 = vector.broadcast %cst_46 : f32 to vector<256x1xf32>
    %cst_47 = arith.constant 0.000000e+00 : f32
    %137 = vector.broadcast %cst_47 : f32 to vector<256x1xf32>
    %cst_48 = arith.constant 0.000000e+00 : f32
    %138 = vector.broadcast %cst_48 : f32 to vector<256x1xf32>
    %cst_49 = arith.constant 0.000000e+00 : f32
    %139 = vector.broadcast %cst_49 : f32 to vector<256x1xf32>
    %cst_50 = arith.constant 0.000000e+00 : f32
    %140 = vector.broadcast %cst_50 : f32 to vector<256x1xf32>
    %cst_51 = arith.constant 0.000000e+00 : f32
    %141 = vector.broadcast %cst_51 : f32 to vector<256x1xf32>
    %142 = tpu.concatenate %127, %135, %136, %137, %138, %139, %140, %141 in 1 : vector<256x1xf32>, vector<256x1xf32>, vector<256x1xf32>, vector<256x1xf32>, vector<256x1xf32>, vector<256x1xf32>, vector<256x1xf32>, vector<256x1xf32> -> vector<256x8xf32>
    %143 = tpu.transpose %142, [1, 0] : vector<256x8xf32> -> vector<8x256xf32>
    %c0_52 = arith.constant 0 : index
    %c0_53 = arith.constant 0 : index
    %144 = vector.load %arg7[%c0_52, %c0_53] : memref<8x256xf32, #tpu.memory_space<vmem>>, vector<8x256xf32>
    tpu.vector_store %arg7[%c0_52, %c0_53], %143 {strides = array<i32>} : memref<8x256xf32, #tpu.memory_space<vmem>>, vector<8x256xf32>,
    return
  }
  func.func @transform_0(%arg0: i32) -> (i32, i32) {
    %c0_i32 = arith.constant 0 : i32
    %c0_i32_0 = arith.constant 0 : i32
    return %arg0, %c0_i32 : i32, i32
  }
  func.func @transform_1(%arg0: i32) -> (i32, i32) {
    %c0_i32 = arith.constant 0 : i32
    %c0_i32_0 = arith.constant 0 : i32
    %c0_i32_1 = arith.constant 0 : i32
    return %c0_i32, %c0_i32_0 : i32, i32
  }
  func.func @transform_2(%arg0: i32) -> (i32, i32) {
    %c0_i32 = arith.constant 0 : i32
    %c0_i32_0 = arith.constant 0 : i32
    %c0_i32_1 = arith.constant 0 : i32
    return %c0_i32, %c0_i32_0 : i32, i32
  }
  func.func @transform_3(%arg0: i32) -> (i32, i32) {
    %c0_i32 = arith.constant 0 : i32
    %c0_i32_0 = arith.constant 0 : i32
    %c0_i32_1 = arith.constant 0 : i32
    return %c0_i32, %c0_i32_0 : i32, i32
  }
  func.func @transform_4(%arg0: i32) -> (i32, i32) {
    %c0_i32 = arith.constant 0 : i32
    %c0_i32_0 = arith.constant 0 : i32
    %c0_i32_1 = arith.constant 0 : i32
    return %c0_i32, %c0_i32_0 : i32, i32
  }
  func.func @transform_5(%arg0: i32) -> (i32, i32) {
    %c0_i32 = arith.constant 0 : i32
    %c0_i32_0 = arith.constant 0 : i32
    %c0_i32_1 = arith.constant 0 : i32
    return %c0_i32, %c0_i32_0 : i32, i32
  }
  func.func @transform_6(%arg0: i32) -> (i32, i32) {
    %c0_i32 = arith.constant 0 : i32
    %c0_i32_0 = arith.constant 0 : i32
    return %c0_i32, %arg0 : i32, i32
  }
}

</mosaic_0001>

<llo_original>
// kernel: tpu_custom_call.1
$region0: #{tpu_custom_call.1}
  #allocation0 [shape = 'u32[]', space=smem, size = 0x4, offset = 0x4, fixed_abs, tag = 'smem constant byte address 0x4 - core index']
  #allocation1 [shape = 'u32[144,128]{1,0:T(1,128)}', space=vmem, size = 0x12000, scoped, tag = 'internal scratch']
  %s0 = inlined_call_operand.vmem [shape: bf16[512,16], index: 0, kind: input, shape index: {}]
  %s1 = inlined_call_operand.vmem [shape: bf16[16,16], index: 1, kind: input, shape index: {}]
  %s2 = inlined_call_operand.vmem [shape: bf16[16,16], index: 2, kind: input, shape index: {}]
  %s3 = inlined_call_operand.vmem [shape: f32[4,16], index: 3, kind: input, shape index: {}]
  %s4 = inlined_call_operand.vmem [shape: f32[3,16], index: 4, kind: input, shape index: {}]
  %s5 = inlined_call_operand.vmem [shape: f32[2,1664], index: 5, kind: input, shape index: {}]
  %s6 = inlined_call_operand.hbm [shape: f32[8,512], index: 6, kind: output, shape index: {}]
  %s7 = sld [smem:[#allocation0]]
  $region57: #{tpu_custom_call.1} parent=0
    _
  %s9 = ssub.s32 1, %s7
  %s10 = scalar_select 0, %s9, %s7
  $region1: #{tpu_custom_call.1} parent=0
    #allocation2 [shape = 'u8[16384]{0}', space=vmem, size = 0x4000, scoped, tag = 'output window, operand 0']
    #allocation3 [shape = 's32[2]{0}', space=sflag, size = 0x8, scoped, tag = 'scoped memory for tpu_custom_call.1']
    %11 = vsyncpa [#allocation3], 0
    %s12 = scalar_lea.sflag [#allocation3], 1
    %13 = vsyncpa %s12, 0
    loop: start=0, step=1, limit=4
    $region2: #{tpu_custom_call.1} parent=1 // loop_pre_header
      _
    $region3: #{tpu_custom_call.1} parent=1 // loop_header
      %s15 = sphi 0, %s19
      %p16 = scmp.ge.s32.totalorder %s15, 4
      %s25 = sphi 0, %s27
      %s28 = sphi 0, %s25
      %s29 = sphi 0, %s28
      %s45 = sphi 0, %s29
      %s49 = sphi 0, %s49
      %s51 = sphi 0, %s49
      %s52 = sphi 0, %s51
      %s66 = sphi 0, %s52
      %s70 = sphi 0, %s70
      %s72 = sphi 0, %s70
      %s73 = sphi 0, %s72
      %s87 = sphi 0, %s73
      %s91 = sphi 0, %s91
      %s93 = sphi 0, %s91
      %s94 = sphi 0, %s93
      %s108 = sphi 0, %s94
      %s112 = sphi 0, %s112
      %s114 = sphi 0, %s112
      %s115 = sphi 0, %s114
      %s129 = sphi 0, %s115
      %s133 = sphi 0, %s133
      %s135 = sphi 0, %s133
      %s136 = sphi 0, %s135
      %s150 = sphi 0, %s136
      %s156 = sphi 0, %s158
      %s159 = sphi 0, %s156
      %s160 = sphi 0, %s159
      %s176 = sphi 0, %s160
    $region4: #{tpu_custom_call.1} parent=1 // loop_header_branch
      %18 = sbr.rel (%p16) target = $region8
    $region5: #{tpu_custom_call.1} parent=1 // loop_body
      %s20 = ssub.s32 %s15, 1
      %s21 = ssub.s32 %s15, 2
      %s22 = sadd.s32 %s15, 1
      %s23 = ssub.s32 %s15, %s22
      %p24 = scmp.eq.s32.totalorder %s23, 0
      %s26 = sadd.s32 %s25, 1
      %s27 = scalar_select %p24, %s25, %s26
      %p30 = pneg %p24
      %p31 = scmp.eq.s32.totalorder %s15, 1
      %p32 = por %p30, %p31
      %p33 = scmp.ne.s32.totalorder %s25, %s28
      %p34 = scmp.eq.s32.totalorder %s15, 0
      %p35 = por %p33, %p34
      %p36 = scmp.ne.s32.totalorder %s25, %s28
      %p37 = scmp.eq.s32.totalorder %s20, 1
      %p38 = por %p36, %p37
      %p39 = scmp.ne.s32.totalorder %s28, %s29
      %p40 = scmp.eq.s32.totalorder %s20, 0
      %p41 = por %p39, %p40
      %p42 = scmp.ne.s32.totalorder %s28, %s29
      %p43 = scmp.eq.s32.totalorder %s21, 1
      %p44 = por %p42, %p43
      %p46 = scmp.ne.s32.totalorder %s29, %s45
      %p47 = scmp.eq.s32.totalorder %s21, 0
      %p48 = por %p46, %p47
      %s50 = sadd.s32 %s49, 1
      %p53 = scmp.eq.s32.totalorder %s15, 1
      %p54 = scmp.ne.s32.totalorder %s49, %s51
      %p55 = scmp.eq.s32.totalorder %s15, 0
      %p56 = por %p54, %p55
      %p57 = scmp.ne.s32.totalorder %s49, %s51
      %p58 = scmp.eq.s32.totalorder %s20, 1
      %p59 = por %p57, %p58
      %p60 = scmp.ne.s32.totalorder %s51, %s52
      %p61 = scmp.eq.s32.totalorder %s20, 0
      %p62 = por %p60, %p61
      %p63 = scmp.ne.s32.totalorder %s51, %s52
      %p64 = scmp.eq.s32.totalorder %s21, 1
      %p65 = por %p63, %p64
      %p67 = scmp.ne.s32.totalorder %s52, %s66
      %p68 = scmp.eq.s32.totalorder %s21, 0
      %p69 = por %p67, %p68
      %s71 = sadd.s32 %s70, 1
      %p74 = scmp.eq.s32.totalorder %s15, 1
      %p75 = scmp.ne.s32.totalorder %s70, %s72
      %p76 = scmp.eq.s32.totalorder %s15, 0
      %p77 = por %p75, %p76
      %p78 = scmp.ne.s32.totalorder %s70, %s72
      %p79 = scmp.eq.s32.totalorder %s20, 1
      %p80 = por %p78, %p79
      %p81 = scmp.ne.s32.totalorder %s72, %s73
      %p82 = scmp.eq.s32.totalorder %s20, 0
      %p83 = por %p81, %p82
      %p84 = scmp.ne.s32.totalorder %s72, %s73
      %p85 = scmp.eq.s32.totalorder %s21, 1
      %p86 = por %p84, %p85
      %p88 = scmp.ne.s32.totalorder %s73, %s87
      %p89 = scmp.eq.s32.totalorder %s21, 0
      %p90 = por %p88, %p89
      %s92 = sadd.s32 %s91, 1
      %p95 = scmp.eq.s32.totalorder %s15, 1
      %p96 = scmp.ne.s32.totalorder %s91, %s93
      %p97 = scmp.eq.s32.totalorder %s15, 0
      %p98 = por %p96, %p97
      %p99 = scmp.ne.s32.totalorder %s91, %s93
      %p100 = scmp.eq.s32.totalorder %s20, 1
      %p101 = por %p99, %p100
      %p102 = scmp.ne.s32.totalorder %s93, %s94
      %p103 = scmp.eq.s32.totalorder %s20, 0
      %p104 = por %p102, %p103
      %p105 = scmp.ne.s32.totalorder %s93, %s94
      %p106 = scmp.eq.s32.totalorder %s21, 1
      %p107 = por %p105, %p106
      %p109 = scmp.ne.s32.totalorder %s94, %s108
      %p110 = scmp.eq.s32.totalorder %s21, 0
      %p111 = por %p109, %p110
      %s113 = sadd.s32 %s112, 1
      %p116 = scmp.eq.s32.totalorder %s15, 1
      %p117 = scmp.ne.s32.totalorder %s112, %s114
      %p118 = scmp.eq.s32.totalorder %s15, 0
      %p119 = por %p117, %p118
      %p120 = scmp.ne.s32.totalorder %s112, %s114
      %p121 = scmp.eq.s32.totalorder %s20, 1
      %p122 = por %p120, %p121
      %p123 = scmp.ne.s32.totalorder %s114, %s115
      %p124 = scmp.eq.s32.totalorder %s20, 0
      %p125 = por %p123, %p124
      %p126 = scmp.ne.s32.totalorder %s114, %s115
      %p127 = scmp.eq.s32.totalorder %s21, 1
      %p128 = por %p126, %p127
      %p130 = scmp.ne.s32.totalorder %s115, %s129
      %p131 = scmp.eq.s32.totalorder %s21, 0
      %p132 = por %p130, %p131
      %s134 = sadd.s32 %s133, 1
      %p137 = scmp.eq.s32.totalorder %s15, 1
      %p138 = scmp.ne.s32.totalorder %s133, %s135
      %p139 = scmp.eq.s32.totalorder %s15, 0
      %p140 = por %p138, %p139
      %p141 = scmp.ne.s32.totalorder %s133, %s135
      %p142 = scmp.eq.s32.totalorder %s20, 1
      %p143 = por %p141, %p142
      %p144 = scmp.ne.s32.totalorder %s135, %s136
      %p145 = scmp.eq.s32.totalorder %s20, 0
      %p146 = por %p144, %p145
      %p147 = scmp.ne.s32.totalorder %s135, %s136
      %p148 = scmp.eq.s32.totalorder %s21, 1
      %p149 = por %p147, %p148
      %p151 = scmp.ne.s32.totalorder %s136, %s150
      %p152 = scmp.eq.s32.totalorder %s21, 0
      %p153 = por %p151, %p152
      %s154 = ssub.s32 %s15, %s22
      %p155 = scmp.eq.s32.totalorder %s154, 0
      %s157 = sadd.s32 %s156, 1
      %s158 = scalar_select %p155, %s156, %s157
      %p161 = pneg %p155
      %p162 = scmp.eq.s32.totalorder %s15, 1
      %p163 = por %p161, %p162
      %p164 = scmp.ne.s32.totalorder %s156, %s159
      %p165 = scmp.eq.s32.totalorder %s15, 0
      %p166 = por %p164, %p165
      %p167 = scmp.ne.s32.totalorder %s156, %s159
      %p168 = scmp.eq.s32.totalorder %s20, 1
      %p169 = por %p167, %p168
      %p170 = scmp.ne.s32.totalorder %s159, %s160
      %p171 = scmp.eq.s32.totalorder %s20, 0
      %p172 = por %p170, %p171
      %p173 = scmp.ne.s32.totalorder %s159, %s160
      %p174 = scmp.eq.s32.totalorder %s21, 1
      %p175 = por %p173, %p174
      %p177 = scmp.ne.s32.totalorder %s160, %s176
      %p178 = scmp.eq.s32.totalorder %s21, 0
      %p179 = por %p177, %p178
      %p180 = scmp.le.s32.totalorder 1, %s15
      %p181 = scmp.lt.s32.totalorder %s15, 3
      %p182 = pnand %p180, %p181
      %p183 = pneg %p182
      // Predicated region
      $region9: #{tpu_custom_call.1} parent=5 // pred_check
        _
      $region10: #{tpu_custom_call.1} parent=5 // pred_check_branch
        %185 = sbr.rel (%p182) target = $region12
      $region11: #{tpu_custom_call.1} parent=5 // pred_region
        %s186 = ssub.s32 %s15, 1
        // Predicated region
        $region13: #{tpu_custom_call.1} parent=11 // pred_check
          %p187 = pneg %p62
        $region14: #{tpu_custom_call.1} parent=11 // pred_check_branch
          %189 = sbr.rel (%p187) target = $region16
        $region15: #{tpu_custom_call.1} parent=11 // pred_region
          _
        $region16: #{tpu_custom_call.1} parent=11 // pred_fallthru
          _
        // Predicated region
        $region17: #{tpu_custom_call.1} parent=11 // pred_check
          %p190 = pneg %p83
        $region18: #{tpu_custom_call.1} parent=11 // pred_check_branch
          %192 = sbr.rel (%p190) target = $region20
        $region19: #{tpu_custom_call.1} parent=11 // pred_region
          _
        $region20: #{tpu_custom_call.1} parent=11 // pred_fallthru
          _
        // Predicated region
        $region21: #{tpu_custom_call.1} parent=11 // pred_check
          %p193 = pneg %p104
        $region22: #{tpu_custom_call.1} parent=11 // pred_check_branch
          %195 = sbr.rel (%p193) target = $region24
        $region23: #{tpu_custom_call.1} parent=11 // pred_region
          _
        $region24: #{tpu_custom_call.1} parent=11 // pred_fallthru
          _
        // Predicated region
        $region25: #{tpu_custom_call.1} parent=11 // pred_check
          %p196 = pneg %p125
        $region26: #{tpu_custom_call.1} parent=11 // pred_check_branch
          %198 = sbr.rel (%p196) target = $region28
        $region27: #{tpu_custom_call.1} parent=11 // pred_region
          _
        $region28: #{tpu_custom_call.1} parent=11 // pred_fallthru
          _
        // Predicated region
        $region29: #{tpu_custom_call.1} parent=11 // pred_check
          %p199 = pneg %p146
        $region30: #{tpu_custom_call.1} parent=11 // pred_check_branch
          %201 = sbr.rel (%p199) target = $region32
        $region31: #{tpu_custom_call.1} parent=11 // pred_region
          _
        $region32: #{tpu_custom_call.1} parent=11 // pred_fallthru
          _
      $region12: #{tpu_custom_call.1} parent=5 // pred_fallthru
        _
      %p202 = scmp.lt.s32.totalorder %s15, 2
      // Predicated region
      $region33: #{tpu_custom_call.1} parent=5 // pred_check
        %p203 = pneg %p202
      $region34: #{tpu_custom_call.1} parent=5 // pred_check_branch
        %205 = sbr.rel (%p203) target = $region36
      $region35: #{tpu_custom_call.1} parent=5 // pred_region
        // Predicated region
        $region37: #{tpu_custom_call.1} parent=35 // pred_check
          %p206 = pneg %p35
        $region38: #{tpu_custom_call.1} parent=35 // pred_check_branch
          %208 = sbr.rel (%p206) target = $region40
        $region39: #{tpu_custom_call.1} parent=35 // pred_region
          %s209 = smul.u32 32, %s15
          %p210 = scmp.lt.s32.totalorder %s209, 63
          %s211 = scalar_select %p210, %s209, 63
          %s212 = smul.addr %s211, 4
          %s213 = scalar_lea.vmem %s0, %s212
          %s214 = smul.u32 32, %s15
        $region40: #{tpu_custom_call.1} parent=35 // pred_fallthru
          _
      $region36: #{tpu_custom_call.1} parent=5 // pred_fallthru
        _
      %p215 = scmp.le.s32.totalorder 1, %s15
      %p216 = scmp.lt.s32.totalorder %s15, 3
      %p217 = pnand %p215, %p216
      %p218 = pneg %p217
      // Predicated region
      $region41: #{tpu_custom_call.1} parent=5 // pred_check
        _
      $region42: #{tpu_custom_call.1} parent=5 // pred_check_branch
        %220 = sbr.rel (%p217) target = $region44
      $region43: #{tpu_custom_call.1} parent=5 // pred_region
        %s221 = ssub.s32 %s15, 1
        %s222 = smul.u32 32, %s20
        %p223 = scmp.lt.s32.totalorder %s222, 63
        %s224 = scalar_select %p223, %s222, 63
        %s225 = smul.addr %s224, 4
        %s226 = scalar_lea.vmem %s0, %s225
        %p227 = pneg %p41
        %p228 = pneg %p38
        %p229 = pneg %p62
        %p230 = pneg %p59
        %p231 = pneg %p83
        %p232 = pneg %p80
        %p233 = pneg %p104
        %p234 = pneg %p101
        %p235 = pneg %p125
        %p236 = pneg %p122
        %p237 = pneg %p146
        %p238 = pneg %p143
        %p239 = pneg %p172
        %p240 = pneg %p169
        %s241 = sand.u32 %s159, 1
        %s242 = scalar_lea.sflag [#allocation3], %s241
        %s243 = sand.u32 %s159, 1
        %s244 = smul.addr %s243, 16
        %s245 = scalar_lea.vmem [#allocation2], %s244
        %s246 = smul.u32 32, %s20
        %p247 = scmp.lt.s32.totalorder %s246, 63
        %s248 = scalar_select %p247, %s246, 63
        %s249 = smul.addr %s248, 4
        %s250 = scalar_lea.vmem %s0, %s249
        %s251 = smul.u32 32, %s20
        %s252 = smul.u32 2, %s20
        %v254 = vld [vmem:[%s250] sm:$0xf]
        %v255 = vld [vmem:[%s250 + $0x4] sm:$0xf]
        %v256 = vld [vmem:[%s250 + $0x8] sm:$0xf]
        %v257 = vld [vmem:[%s250 + $0xc] sm:$0xf]
        %v258 = vld [vmem:[%s250 + $0x10] sm:$0xf]
        %v259 = vld [vmem:[%s250 + $0x14] sm:$0xf]
        %v260 = vld [vmem:[%s250 + $0x18] sm:$0xf]
        %v261 = vld [vmem:[%s250 + $0x1c] sm:$0xf]
        %v262 = vld [vmem:[%s250 + $0x20] sm:$0xf]
        %v263 = vld [vmem:[%s250 + $0x24] sm:$0xf]
        %v264 = vld [vmem:[%s250 + $0x28] sm:$0xf]
        %v265 = vld [vmem:[%s250 + $0x2c] sm:$0xf]
        %v266 = vld [vmem:[%s250 + $0x30] sm:$0xf]
        %v267 = vld [vmem:[%s250 + $0x34] sm:$0xf]
        %v268 = vld [vmem:[%s250 + $0x38] sm:$0xf]
        %v269 = vld [vmem:[%s250 + $0x3c] sm:$0xf]
        %v270 = vld [vmem:[%s250 + $0x40] sm:$0xf]
        %v271 = vld [vmem:[%s250 + $0x44] sm:$0xf]
        %v272 = vld [vmem:[%s250 + $0x48] sm:$0xf]
        %v273 = vld [vmem:[%s250 + $0x4c] sm:$0xf]
        %v274 = vld [vmem:[%s250 + $0x50] sm:$0xf]
        %v275 = vld [vmem:[%s250 + $0x54] sm:$0xf]
        %v276 = vld [vmem:[%s250 + $0x58] sm:$0xf]
        %v277 = vld [vmem:[%s250 + $0x5c] sm:$0xf]
        %v278 = vld [vmem:[%s250 + $0x60] sm:$0xf]
        %v279 = vld [vmem:[%s250 + $0x64] sm:$0xf]
        %v280 = vld [vmem:[%s250 + $0x68] sm:$0xf]
        %v281 = vld [vmem:[%s250 + $0x6c] sm:$0xf]
        %v282 = vld [vmem:[%s250 + $0x70] sm:$0xf]
        %v283 = vld [vmem:[%s250 + $0x74] sm:$0xf]
        %v284 = vld [vmem:[%s250 + $0x78] sm:$0xf]
        %v285 = vld [vmem:[%s250 + $0x7c] sm:$0xf]
        %v286 = vunpack.c.l.bf16 %v254
        %v287 = vunpack.c.l.bf16 %v255
        %v288 = vunpack.c.l.bf16 %v256
        %v289 = vunpack.c.l.bf16 %v257
        %v290 = vunpack.c.l.bf16 %v258
        %v291 = vunpack.c.l.bf16 %v259
        %v292 = vunpack.c.l.bf16 %v260
        %v293 = vunpack.c.l.bf16 %v261
        %v294 = vunpack.c.l.bf16 %v262
        %v295 = vunpack.c.l.bf16 %v263
        %v296 = vunpack.c.l.bf16 %v264
        %v297 = vunpack.c.l.bf16 %v265
        %v298 = vunpack.c.l.bf16 %v266
        %v299 = vunpack.c.l.bf16 %v267
        %v300 = vunpack.c.l.bf16 %v268
        %v301 = vunpack.c.l.bf16 %v269
        %v302 = vunpack.c.l.bf16 %v270
        %v303 = vunpack.c.l.bf16 %v271
        %v304 = vunpack.c.l.bf16 %v272
        %v305 = vunpack.c.l.bf16 %v273
        %v306 = vunpack.c.l.bf16 %v274
        %v307 = vunpack.c.l.bf16 %v275
        %v308 = vunpack.c.l.bf16 %v276
        %v309 = vunpack.c.l.bf16 %v277
        %v310 = vunpack.c.l.bf16 %v278
        %v311 = vunpack.c.l.bf16 %v279
        %v312 = vunpack.c.l.bf16 %v280
        %v313 = vunpack.c.l.bf16 %v281
        %v314 = vunpack.c.l.bf16 %v282
        %v315 = vunpack.c.l.bf16 %v283
        %v316 = vunpack.c.l.bf16 %v284
        %v317 = vunpack.c.l.bf16 %v285
        %v318 = vld [vmem:[%s1] sm:$0xf]
        %v319 = vld [vmem:[%s1 + $0x4] sm:$0xf]
        %v352 = vunpack.c.l.b16 %v254
        %v353 = vunpack.c.l.b16 %v255
        %v354 = vunpack.c.l.b16 %v256
        %v355 = vunpack.c.l.b16 %v257
        %v356 = vunpack.c.l.b16 %v258
        %v357 = vunpack.c.l.b16 %v259
        %v358 = vunpack.c.l.b16 %v260
        %v359 = vunpack.c.l.b16 %v261
        %v360 = vunpack.c.l.b16 %v262
        %v361 = vunpack.c.l.b16 %v263
        %v362 = vunpack.c.l.b16 %v264
        %v363 = vunpack.c.l.b16 %v265
        %v364 = vunpack.c.l.b16 %v266
        %v365 = vunpack.c.l.b16 %v267
        %v366 = vunpack.c.l.b16 %v268
        %v367 = vunpack.c.l.b16 %v269
        %v368 = vunpack.c.l.b16 %v270
        %v369 = vunpack.c.l.b16 %v271
        %v370 = vunpack.c.l.b16 %v272
        %v371 = vunpack.c.l.b16 %v273
        %v372 = vunpack.c.l.b16 %v274
        %v373 = vunpack.c.l.b16 %v275
        %v374 = vunpack.c.l.b16 %v276
        %v375 = vunpack.c.l.b16 %v277
        %v376 = vunpack.c.l.b16 %v278
        %v377 = vunpack.c.l.b16 %v279
        %v378 = vunpack.c.l.b16 %v280
        %v379 = vunpack.c.l.b16 %v281
        %v380 = vunpack.c.l.b16 %v282
        %v381 = vunpack.c.l.b16 %v283
        %v382 = vunpack.c.l.b16 %v284
        %v383 = vunpack.c.l.b16 %v285
        %v384 = vpack.c.b16 %v353, %v352
        %v385 = vpack.c.b16 %v355, %v354
        %v386 = vpack.c.b16 %v357, %v356
        %v387 = vpack.c.b16 %v359, %v358
        %v388 = vpack.c.b16 %v361, %v360
        %v389 = vpack.c.b16 %v363, %v362
        %v390 = vpack.c.b16 %v365, %v364
        %v391 = vpack.c.b16 %v367, %v366
        %v392 = vpack.c.b16 %v369, %v368
        %v393 = vpack.c.b16 %v371, %v370
        %v394 = vpack.c.b16 %v373, %v372
        %v395 = vpack.c.b16 %v375, %v374
        %v396 = vpack.c.b16 %v377, %v376
        %v397 = vpack.c.b16 %v379, %v378
        %v398 = vpack.c.b16 %v381, %v380
        %v399 = vpack.c.b16 %v383, %v382
        %v402 = vunpack.c.l.b16 %v318
        %v403 = vunpack.c.l.b16 %v319
        %v404 = vpack.c.b16 %v403, %v402
        %vm406 = vcmask 130048
        %v408 = vsel %vm406, %v384, 0
        %v411 = vsel %vm406, %v385, 0
        %v414 = vsel %vm406, %v386, 0
        %v417 = vsel %vm406, %v387, 0
        %v420 = vsel %vm406, %v388, 0
        %v423 = vsel %vm406, %v389, 0
        %v426 = vsel %vm406, %v390, 0
        %v429 = vsel %vm406, %v391, 0
        %v432 = vsel %vm406, %v392, 0
        %v435 = vsel %vm406, %v393, 0
        %v438 = vsel %vm406, %v394, 0
        %v441 = vsel %vm406, %v395, 0
        %v444 = vsel %vm406, %v396, 0
        %v447 = vsel %vm406, %v397, 0
        %v450 = vsel %vm406, %v398, 0
        %v453 = vsel %vm406, %v399, 0
        %455 = vmatprep.subr.bf16.mxu0 0
        %456 = vmatpush1.bf16.msra.mxu0 %v404
        %457 = vmatprep.subr.bf16.mxu0 0
        %458 = vmatpush1.bf16.msra.mxu0 0
        %459 = vmatprep.subr.bf16.mxu0 0
        %460 = vmatpush1.bf16.msra.mxu0 0
        %461 = vmatprep.subr.bf16.mxu0 0
        %462 = vmatpush1.bf16.msra.mxu0 0
        %463 = vmatprep.subr.bf16.mxu0 0
        %464 = vmatpush1.bf16.msra.mxu0 0
        %465 = vmatprep.subr.bf16.mxu0 0
        %466 = vmatpush1.bf16.msra.mxu0 0
        %467 = vmatprep.subr.bf16.mxu0 0
        %468 = vmatpush1.bf16.msra.mxu0 0
        %469 = vmatprep.subr.bf16.mxu0 0
        %470 = vmatpush1.bf16.msra.mxu0 0
        %471 = vmatprep.subr.bf16.mxu0 0
        %472 = vmatpush1.bf16.msra.mxu0 0
        %473 = vmatprep.subr.bf16.mxu0 0
        %474 = vmatpush1.bf16.msra.mxu0 0
        %475 = vmatprep.subr.bf16.mxu0 0
        %476 = vmatpush1.bf16.msra.mxu0 0
        %477 = vmatprep.subr.bf16.mxu0 0
        %478 = vmatpush1.bf16.msra.mxu0 0
        %479 = vmatprep.subr.bf16.mxu0 0
        %480 = vmatpush1.bf16.msra.mxu0 0
        %481 = vmatprep.subr.bf16.mxu0 0
        %482 = vmatpush1.bf16.msra.mxu0 0
        %483 = vmatprep.subr.bf16.mxu0 0
        %484 = vmatpush1.bf16.msra.mxu0 0
        %485 = vmatprep.subr.bf16.mxu0 0
        %486 = vmatpush1.bf16.msra.mxu0 0
        %487 = vmatprep.mubr.bf16.mxu0 0
        %488 = vmatmul.mubr.bf16.gmra.mrb[0].mxu0 %v408
        %v489 = vpop.f32.mrb[0].mxu0
        %v490 = vadd.f32 0.0, %v489
        %v491 = vpop.f32.mrb[0].mxu0
        %v492 = vpop.f32.mrb[0].mxu0
        %v493 = vadd.f32 0.0, %v492
        %v494 = vpop.f32.mrb[0].mxu0
        %495 = vmatprep.mubr.bf16.mxu0 0
        %496 = vmatmul.mubr.bf16.gmra.mrb[0].mxu0 %v411
        %v497 = vpop.f32.mrb[0].mxu0
        %v498 = vadd.f32 0.0, %v497
        %v499 = vpop.f32.mrb[0].mxu0
        %v500 = vpop.f32.mrb[0].mxu0
        %v501 = vadd.f32 0.0, %v500
        %v502 = vpop.f32.mrb[0].mxu0
        %503 = vmatprep.mubr.bf16.mxu0 0
        %504 = vmatmul.mubr.bf16.gmra.mrb[0].mxu0 %v414
        %v505 = vpop.f32.mrb[0].mxu0
        %v506 = vadd.f32 0.0, %v505
        %v507 = vpop.f32.mrb[0].mxu0
        %v508 = vpop.f32.mrb[0].mxu0
        %v509 = vadd.f32 0.0, %v508
        %v510 = vpop.f32.mrb[0].mxu0
        %511 = vmatprep.mubr.bf16.mxu0 0
        %512 = vmatmul.mubr.bf16.gmra.mrb[0].mxu0 %v417
        %v513 = vpop.f32.mrb[0].mxu0
        %v514 = vadd.f32 0.0, %v513
        %v515 = vpop.f32.mrb[0].mxu0
        %v516 = vpop.f32.mrb[0].mxu0
        %v517 = vadd.f32 0.0, %v516
        %v518 = vpop.f32.mrb[0].mxu0
        %519 = vmatprep.mubr.bf16.mxu0 0
        %520 = vmatmul.mubr.bf16.gmra.mrb[0].mxu0 %v420
        %v521 = vpop.f32.mrb[0].mxu0
        %v522 = vadd.f32 0.0, %v521
        %v523 = vpop.f32.mrb[0].mxu0
        %v524 = vpop.f32.mrb[0].mxu0
        %v525 = vadd.f32 0.0, %v524
        %v526 = vpop.f32.mrb[0].mxu0
        %527 = vmatprep.mubr.bf16.mxu0 0
        %528 = vmatmul.mubr.bf16.gmra.mrb[0].mxu0 %v423
        %v529 = vpop.f32.mrb[0].mxu0
        %v530 = vadd.f32 0.0, %v529
        %v531 = vpop.f32.mrb[0].mxu0
        %v532 = vpop.f32.mrb[0].mxu0
        %v533 = vadd.f32 0.0, %v532
        %v534 = vpop.f32.mrb[0].mxu0
        %535 = vmatprep.mubr.bf16.mxu0 0
        %536 = vmatmul.mubr.bf16.gmra.mrb[0].mxu0 %v426
        %v537 = vpop.f32.mrb[0].mxu0
        %v538 = vadd.f32 0.0, %v537
        %v539 = vpop.f32.mrb[0].mxu0
        %v540 = vpop.f32.mrb[0].mxu0
        %v541 = vadd.f32 0.0, %v540
        %v542 = vpop.f32.mrb[0].mxu0
        %543 = vmatprep.mubr.bf16.mxu0 0
        %544 = vmatmul.mubr.bf16.gmra.mrb[0].mxu0 %v429
        %v545 = vpop.f32.mrb[0].mxu0
        %v546 = vadd.f32 0.0, %v545
        %v547 = vpop.f32.mrb[0].mxu0
        %v548 = vpop.f32.mrb[0].mxu0
        %v549 = vadd.f32 0.0, %v548
        %v550 = vpop.f32.mrb[0].mxu0
        %551 = vmatprep.mubr.bf16.mxu0 0
        %552 = vmatmul.mubr.bf16.gmra.mrb[0].mxu0 %v432
        %v553 = vpop.f32.mrb[0].mxu0
        %v554 = vadd.f32 0.0, %v553
        %v555 = vpop.f32.mrb[0].mxu0
        %v556 = vpop.f32.mrb[0].mxu0
        %v557 = vadd.f32 0.0, %v556
        %v558 = vpop.f32.mrb[0].mxu0
        %559 = vmatprep.mubr.bf16.mxu0 0
        %560 = vmatmul.mubr.bf16.gmra.mrb[0].mxu0 %v435
        %v561 = vpop.f32.mrb[0].mxu0
        %v562 = vadd.f32 0.0, %v561
        %v563 = vpop.f32.mrb[0].mxu0
        %v564 = vpop.f32.mrb[0].mxu0
        %v565 = vadd.f32 0.0, %v564
        %v566 = vpop.f32.mrb[0].mxu0
        %567 = vmatprep.mubr.bf16.mxu0 0
        %568 = vmatmul.mubr.bf16.gmra.mrb[0].mxu0 %v438
        %v569 = vpop.f32.mrb[0].mxu0
        %v570 = vadd.f32 0.0, %v569
        %v571 = vpop.f32.mrb[0].mxu0
        %v572 = vpop.f32.mrb[0].mxu0
        %v573 = vadd.f32 0.0, %v572
        %v574 = vpop.f32.mrb[0].mxu0
        %575 = vmatprep.mubr.bf16.mxu0 0
        %576 = vmatmul.mubr.bf16.gmra.mrb[0].mxu0 %v441
        %v577 = vpop.f32.mrb[0].mxu0
        %v578 = vadd.f32 0.0, %v577
        %v579 = vpop.f32.mrb[0].mxu0
        %v580 = vpop.f32.mrb[0].mxu0
        %v581 = vadd.f32 0.0, %v580
        %v582 = vpop.f32.mrb[0].mxu0
        %583 = vmatprep.mubr.bf16.mxu0 0
        %584 = vmatmul.mubr.bf16.gmra.mrb[0].mxu0 %v444
        %v585 = vpop.f32.mrb[0].mxu0
        %v586 = vadd.f32 0.0, %v585
        %v587 = vpop.f32.mrb[0].mxu0
        %v588 = vpop.f32.mrb[0].mxu0
        %v589 = vadd.f32 0.0, %v588
        %v590 = vpop.f32.mrb[0].mxu0
        %591 = vmatprep.mubr.bf16.mxu0 0
        %592 = vmatmul.mubr.bf16.gmra.mrb[0].mxu0 %v447
        %v593 = vpop.f32.mrb[0].mxu0
        %v594 = vadd.f32 0.0, %v593
        %v595 = vpop.f32.mrb[0].mxu0
        %v596 = vpop.f32.mrb[0].mxu0
        %v597 = vadd.f32 0.0, %v596
        %v598 = vpop.f32.mrb[0].mxu0
        %599 = vmatprep.mubr.bf16.mxu0 0
        %600 = vmatmul.mubr.bf16.gmra.mrb[0].mxu0 %v450
        %v601 = vpop.f32.mrb[0].mxu0
        %v602 = vadd.f32 0.0, %v601
        %v603 = vpop.f32.mrb[0].mxu0
        %v604 = vpop.f32.mrb[0].mxu0
        %v605 = vadd.f32 0.0, %v604
        %v606 = vpop.f32.mrb[0].mxu0
        %607 = vmatprep.mubr.bf16.mxu0 0
        %608 = vmatmul.mubr.bf16.gmra.mrb[0].mxu0 %v453
        %v609 = vpop.f32.mrb[0].mxu0
        %v610 = vadd.f32 0.0, %v609
        %v611 = vpop.f32.mrb[0].mxu0
        %v612 = vpop.f32.mrb[0].mxu0
        %v613 = vadd.f32 0.0, %v612
        %v614 = vpop.f32.mrb[0].mxu0
        %615 = vdwg.mxu0
        %v616 = vld [vmem:[%s2] sm:$0xf]
        %v617 = vld [vmem:[%s2 + $0x4] sm:$0xf]
        %v620 = vunpack.c.l.b16 %v616
        %v621 = vunpack.c.l.b16 %v617
        %v622 = vpack.c.b16 %v621, %v620
        %624 = vmatprep.subr.bf16.mxu0 0
        %625 = vmatpush1.bf16.msra.mxu0 %v622
        %626 = vmatprep.subr.bf16.mxu0 0
        %627 = vmatpush1.bf16.msra.mxu0 0
        %628 = vmatprep.subr.bf16.mxu0 0
        %629 = vmatpush1.bf16.msra.mxu0 0
        %630 = vmatprep.subr.bf16.mxu0 0
        %631 = vmatpush1.bf16.msra.mxu0 0
        %632 = vmatprep.subr.bf16.mxu0 0
        %633 = vmatpush1.bf16.msra.mxu0 0
        %634 = vmatprep.subr.bf16.mxu0 0
        %635 = vmatpush1.bf16.msra.mxu0 0
        %636 = vmatprep.subr.bf16.mxu0 0
        %637 = vmatpush1.bf16.msra.mxu0 0
        %638 = vmatprep.subr.bf16.mxu0 0
        %639 = vmatpush1.bf16.msra.mxu0 0
        %640 = vmatprep.subr.bf16.mxu0 0
        %641 = vmatpush1.bf16.msra.mxu0 0
        %642 = vmatprep.subr.bf16.mxu0 0
        %643 = vmatpush1.bf16.msra.mxu0 0
        %644 = vmatprep.subr.bf16.mxu0 0
        %645 = vmatpush1.bf16.msra.mxu0 0
        %646 = vmatprep.subr.bf16.mxu0 0
        %647 = vmatpush1.bf16.msra.mxu0 0
        %648 = vmatprep.subr.bf16.mxu0 0
        %649 = vmatpush1.bf16.msra.mxu0 0
        %650 = vmatprep.subr.bf16.mxu0 0
        %651 = vmatpush1.bf16.msra.mxu0 0
        %652 = vmatprep.subr.bf16.mxu0 0
        %653 = vmatpush1.bf16.msra.mxu0 0
        %654 = vmatprep.subr.bf16.mxu0 0
        %655 = vmatpush1.bf16.msra.mxu0 0
        %656 = vmatprep.mubr.bf16.mxu0 0
        %657 = vmatmul.mubr.bf16.gmra.mrb[0].mxu0 %v408
        %v658 = vpop.f32.mrb[0].mxu0
        %v659 = vadd.f32 0.0, %v658
        %v660 = vpop.f32.mrb[0].mxu0
        %v661 = vpop.f32.mrb[0].mxu0
        %v662 = vadd.f32 0.0, %v661
        %v663 = vpop.f32.mrb[0].mxu0
        %664 = vmatprep.mubr.bf16.mxu0 0
        %665 = vmatmul.mubr.bf16.gmra.mrb[0].mxu0 %v411
        %v666 = vpop.f32.mrb[0].mxu0
        %v667 = vadd.f32 0.0, %v666
        %v668 = vpop.f32.mrb[0].mxu0
        %v669 = vpop.f32.mrb[0].mxu0
        %v670 = vadd.f32 0.0, %v669
        %v671 = vpop.f32.mrb[0].mxu0
        %672 = vmatprep.mubr.bf16.mxu0 0
        %673 = vmatmul.mubr.bf16.gmra.mrb[0].mxu0 %v414
        %v674 = vpop.f32.mrb[0].mxu0
        %v675 = vadd.f32 0.0, %v674
        %v676 = vpop.f32.mrb[0].mxu0
        %v677 = vpop.f32.mrb[0].mxu0
        %v678 = vadd.f32 0.0, %v677
        %v679 = vpop.f32.mrb[0].mxu0
        %680 = vmatprep.mubr.bf16.mxu0 0
        %681 = vmatmul.mubr.bf16.gmra.mrb[0].mxu0 %v417
        %v682 = vpop.f32.mrb[0].mxu0
        %v683 = vadd.f32 0.0, %v682
        %v684 = vpop.f32.mrb[0].mxu0
        %v685 = vpop.f32.mrb[0].mxu0
        %v686 = vadd.f32 0.0, %v685
        %v687 = vpop.f32.mrb[0].mxu0
        %688 = vmatprep.mubr.bf16.mxu0 0
        %689 = vmatmul.mubr.bf16.gmra.mrb[0].mxu0 %v420
        %v690 = vpop.f32.mrb[0].mxu0
        %v691 = vadd.f32 0.0, %v690
        %v692 = vpop.f32.mrb[0].mxu0
        %v693 = vpop.f32.mrb[0].mxu0
        %v694 = vadd.f32 0.0, %v693
        %v695 = vpop.f32.mrb[0].mxu0
        %696 = vmatprep.mubr.bf16.mxu0 0
        %697 = vmatmul.mubr.bf16.gmra.mrb[0].mxu0 %v423
        %v698 = vpop.f32.mrb[0].mxu0
        %v699 = vadd.f32 0.0, %v698
        %v700 = vpop.f32.mrb[0].mxu0
        %v701 = vpop.f32.mrb[0].mxu0
        %v702 = vadd.f32 0.0, %v701
        %v703 = vpop.f32.mrb[0].mxu0
        %704 = vmatprep.mubr.bf16.mxu0 0
        %705 = vmatmul.mubr.bf16.gmra.mrb[0].mxu0 %v426
        %v706 = vpop.f32.mrb[0].mxu0
        %v707 = vadd.f32 0.0, %v706
        %v708 = vpop.f32.mrb[0].mxu0
        %v709 = vpop.f32.mrb[0].mxu0
        %v710 = vadd.f32 0.0, %v709
        %v711 = vpop.f32.mrb[0].mxu0
        %712 = vmatprep.mubr.bf16.mxu0 0
        %713 = vmatmul.mubr.bf16.gmra.mrb[0].mxu0 %v429
        %v714 = vpop.f32.mrb[0].mxu0
        %v715 = vadd.f32 0.0, %v714
        %v716 = vpop.f32.mrb[0].mxu0
        %v717 = vpop.f32.mrb[0].mxu0
        %v718 = vadd.f32 0.0, %v717
        %v719 = vpop.f32.mrb[0].mxu0
        %720 = vmatprep.mubr.bf16.mxu0 0
        %721 = vmatmul.mubr.bf16.gmra.mrb[0].mxu0 %v432
        %v722 = vpop.f32.mrb[0].mxu0
        %v723 = vadd.f32 0.0, %v722
        %v724 = vpop.f32.mrb[0].mxu0
        %v725 = vpop.f32.mrb[0].mxu0
        %v726 = vadd.f32 0.0, %v725
        %v727 = vpop.f32.mrb[0].mxu0
        %728 = vmatprep.mubr.bf16.mxu0 0
        %729 = vmatmul.mubr.bf16.gmra.mrb[0].mxu0 %v435
        %v730 = vpop.f32.mrb[0].mxu0
        %v731 = vadd.f32 0.0, %v730
        %v732 = vpop.f32.mrb[0].mxu0
        %v733 = vpop.f32.mrb[0].mxu0
        %v734 = vadd.f32 0.0, %v733
        %v735 = vpop.f32.mrb[0].mxu0
        %736 = vmatprep.mubr.bf16.mxu0 0
        %737 = vmatmul.mubr.bf16.gmra.mrb[0].mxu0 %v438
        %v738 = vpop.f32.mrb[0].mxu0
        %v739 = vadd.f32 0.0, %v738
        %v740 = vpop.f32.mrb[0].mxu0
        %v741 = vpop.f32.mrb[0].mxu0
        %v742 = vadd.f32 0.0, %v741
        %v743 = vpop.f32.mrb[0].mxu0
        %744 = vmatprep.mubr.bf16.mxu0 0
        %745 = vmatmul.mubr.bf16.gmra.mrb[0].mxu0 %v441
        %v746 = vpop.f32.mrb[0].mxu0
        %v747 = vadd.f32 0.0, %v746
        %v748 = vpop.f32.mrb[0].mxu0
        %v749 = vpop.f32.mrb[0].mxu0
        %v750 = vadd.f32 0.0, %v749
        %v751 = vpop.f32.mrb[0].mxu0
        %752 = vmatprep.mubr.bf16.mxu0 0
        %753 = vmatmul.mubr.bf16.gmra.mrb[0].mxu0 %v444
        %v754 = vpop.f32.mrb[0].mxu0
        %v755 = vadd.f32 0.0, %v754
        %v756 = vpop.f32.mrb[0].mxu0
        %v757 = vpop.f32.mrb[0].mxu0
        %v758 = vadd.f32 0.0, %v757
        %v759 = vpop.f32.mrb[0].mxu0
        %760 = vmatprep.mubr.bf16.mxu0 0
        %761 = vmatmul.mubr.bf16.gmra.mrb[0].mxu0 %v447
        %v762 = vpop.f32.mrb[0].mxu0
        %v763 = vadd.f32 0.0, %v762
        %v764 = vpop.f32.mrb[0].mxu0
        %v765 = vpop.f32.mrb[0].mxu0
        %v766 = vadd.f32 0.0, %v765
        %v767 = vpop.f32.mrb[0].mxu0
        %768 = vmatprep.mubr.bf16.mxu0 0
        %769 = vmatmul.mubr.bf16.gmra.mrb[0].mxu0 %v450
        %v770 = vpop.f32.mrb[0].mxu0
        %v771 = vadd.f32 0.0, %v770
        %v772 = vpop.f32.mrb[0].mxu0
        %v773 = vpop.f32.mrb[0].mxu0
        %v774 = vadd.f32 0.0, %v773
        %v775 = vpop.f32.mrb[0].mxu0
        %776 = vmatprep.mubr.bf16.mxu0 0
        %777 = vmatmul.mubr.bf16.gmra.mrb[0].mxu0 %v453
        %v778 = vpop.f32.mrb[0].mxu0
        %v779 = vadd.f32 0.0, %v778
        %v780 = vpop.f32.mrb[0].mxu0
        %v781 = vpop.f32.mrb[0].mxu0
        %v782 = vadd.f32 0.0, %v781
        %v783 = vpop.f32.mrb[0].mxu0
        %784 = vdwg.mxu0
        %v785 = vsub.f32 3.0, %v490
        %v786 = vsub.f32 3.0, %v493
        %v787 = vsub.f32 3.0, %v498
        %v788 = vsub.f32 3.0, %v501
        %v789 = vsub.f32 3.0, %v506
        %v790 = vsub.f32 3.0, %v509
        %v791 = vsub.f32 3.0, %v514
        %v792 = vsub.f32 3.0, %v517
        %v793 = vsub.f32 3.0, %v522
        %v794 = vsub.f32 3.0, %v525
        %v795 = vsub.f32 3.0, %v530
        %v796 = vsub.f32 3.0, %v533
        %v797 = vsub.f32 3.0, %v538
        %v798 = vsub.f32 3.0, %v541
        %v799 = vsub.f32 3.0, %v546
        %v800 = vsub.f32 3.0, %v549
        %v801 = vsub.f32 3.0, %v554
        %v802 = vsub.f32 3.0, %v557
        %v803 = vsub.f32 3.0, %v562
        %v804 = vsub.f32 3.0, %v565
        %v805 = vsub.f32 3.0, %v570
        %v806 = vsub.f32 3.0, %v573
        %v807 = vsub.f32 3.0, %v578
        %v808 = vsub.f32 3.0, %v581
        %v809 = vsub.f32 3.0, %v586
        %v810 = vsub.f32 3.0, %v589
        %v811 = vsub.f32 3.0, %v594
        %v812 = vsub.f32 3.0, %v597
        %v813 = vsub.f32 3.0, %v602
        %v814 = vsub.f32 3.0, %v605
        %v815 = vsub.f32 3.0, %v610
        %v816 = vsub.f32 3.0, %v613
        %v817 = vsub.f32 2.0, %v659
        %v818 = vsub.f32 2.0, %v662
        %v819 = vsub.f32 2.0, %v667
        %v820 = vsub.f32 2.0, %v670
        %v821 = vsub.f32 2.0, %v675
        %v822 = vsub.f32 2.0, %v678
        %v823 = vsub.f32 2.0, %v683
        %v824 = vsub.f32 2.0, %v686
        %v825 = vsub.f32 2.0, %v691
        %v826 = vsub.f32 2.0, %v694
        %v827 = vsub.f32 2.0, %v699
        %v828 = vsub.f32 2.0, %v702
        %v829 = vsub.f32 2.0, %v707
        %v830 = vsub.f32 2.0, %v710
        %v831 = vsub.f32 2.0, %v715
        %v832 = vsub.f32 2.0, %v718
        %v833 = vsub.f32 2.0, %v723
        %v834 = vsub.f32 2.0, %v726
        %v835 = vsub.f32 2.0, %v731
        %v836 = vsub.f32 2.0, %v734
        %v837 = vsub.f32 2.0, %v739
        %v838 = vsub.f32 2.0, %v742
        %v839 = vsub.f32 2.0, %v747
        %v840 = vsub.f32 2.0, %v750
        %v841 = vsub.f32 2.0, %v755
        %v842 = vsub.f32 2.0, %v758
        %v843 = vsub.f32 2.0, %v763
        %v844 = vsub.f32 2.0, %v766
        %v845 = vsub.f32 2.0, %v771
        %v846 = vsub.f32 2.0, %v774
        %v847 = vsub.f32 2.0, %v779
        %v848 = vsub.f32 2.0, %v782
        %v849 = vld [vmem:[%s3] sm:$0xf]
        %v850 = vld [vmem:[%s4] sm:$0x7]
        %vm851 = vcmp.eq.f32.partialorder %v785, 0.0
        %vm852 = vcmp.eq.f32.partialorder %v786, 0.0
        %vm853 = vcmp.eq.f32.partialorder %v787, 0.0
        %vm854 = vcmp.eq.f32.partialorder %v788, 0.0
        %vm855 = vcmp.eq.f32.partialorder %v789, 0.0
        %vm856 = vcmp.eq.f32.partialorder %v790, 0.0
        %vm857 = vcmp.eq.f32.partialorder %v791, 0.0
        %vm858 = vcmp.eq.f32.partialorder %v792, 0.0
        %vm859 = vcmp.eq.f32.partialorder %v793, 0.0
        %vm860 = vcmp.eq.f32.partialorder %v794, 0.0
        %vm861 = vcmp.eq.f32.partialorder %v795, 0.0
        %vm862 = vcmp.eq.f32.partialorder %v796, 0.0
        %vm863 = vcmp.eq.f32.partialorder %v797, 0.0
        %vm864 = vcmp.eq.f32.partialorder %v798, 0.0
        %vm865 = vcmp.eq.f32.partialorder %v799, 0.0
        %vm866 = vcmp.eq.f32.partialorder %v800, 0.0
        %vm867 = vcmp.eq.f32.partialorder %v801, 0.0
        %vm868 = vcmp.eq.f32.partialorder %v802, 0.0
        %vm869 = vcmp.eq.f32.partialorder %v803, 0.0
        %vm870 = vcmp.eq.f32.partialorder %v804, 0.0
        %vm871 = vcmp.eq.f32.partialorder %v805, 0.0
        %vm872 = vcmp.eq.f32.partialorder %v806, 0.0
        %vm873 = vcmp.eq.f32.partialorder %v807, 0.0
        %vm874 = vcmp.eq.f32.partialorder %v808, 0.0
        %vm875 = vcmp.eq.f32.partialorder %v809, 0.0
        %vm876 = vcmp.eq.f32.partialorder %v810, 0.0
        %vm877 = vcmp.eq.f32.partialorder %v811, 0.0
        %vm878 = vcmp.eq.f32.partialorder %v812, 0.0
        %vm879 = vcmp.eq.f32.partialorder %v813, 0.0
        %vm880 = vcmp.eq.f32.partialorder %v814, 0.0
        %vm881 = vcmp.eq.f32.partialorder %v815, 0.0
        %vm882 = vcmp.eq.f32.partialorder %v816, 0.0
        %v883 = vlaneseq
        %v884 = vshrl.u32 %v883, 7
        %v885 = vsub.s32 0, %v884
        %v886 = vrot.slane %v849, %v885
        %v887 = vsel %vm851, %v886, 0.0
        %v888 = vsel %vm852, %v886, 0.0
        %v889 = vsel %vm853, %v886, 0.0
        %v890 = vsel %vm854, %v886, 0.0
        %v891 = vsel %vm855, %v886, 0.0
        %v892 = vsel %vm856, %v886, 0.0
        %v893 = vsel %vm857, %v886, 0.0
        %v894 = vsel %vm858, %v886, 0.0
        %v895 = vsel %vm859, %v886, 0.0
        %v896 = vsel %vm860, %v886, 0.0
        %v897 = vsel %vm861, %v886, 0.0
        %v898 = vsel %vm862, %v886, 0.0
        %v899 = vsel %vm863, %v886, 0.0
        %v900 = vsel %vm864, %v886, 0.0
        %v901 = vsel %vm865, %v886, 0.0
        %v902 = vsel %vm866, %v886, 0.0
        %v903 = vsel %vm867, %v886, 0.0
        %v904 = vsel %vm868, %v886, 0.0
        %v905 = vsel %vm869, %v886, 0.0
        %v906 = vsel %vm870, %v886, 0.0
        %v907 = vsel %vm871, %v886, 0.0
        %v908 = vsel %vm872, %v886, 0.0
        %v909 = vsel %vm873, %v886, 0.0
        %v910 = vsel %vm874, %v886, 0.0
        %v911 = vsel %vm875, %v886, 0.0
        %v912 = vsel %vm876, %v886, 0.0
        %v913 = vsel %vm877, %v886, 0.0
        %v914 = vsel %vm878, %v886, 0.0
        %v915 = vsel %vm879, %v886, 0.0
        %v916 = vsel %vm880, %v886, 0.0
        %v917 = vsel %vm881, %v886, 0.0
        %v918 = vsel %vm882, %v886, 0.0
        %v919 = vadd.f32 %v887, 0.0
        %v920 = vadd.f32 %v888, 0.0
        %v921 = vadd.f32 %v889, 0.0
        %v922 = vadd.f32 %v890, 0.0
        %v923 = vadd.f32 %v891, 0.0
        %v924 = vadd.f32 %v892, 0.0
        %v925 = vadd.f32 %v893, 0.0
        %v926 = vadd.f32 %v894, 0.0
        %v927 = vadd.f32 %v895, 0.0
        %v928 = vadd.f32 %v896, 0.0
        %v929 = vadd.f32 %v897, 0.0
        %v930 = vadd.f32 %v898, 0.0
        %v931 = vadd.f32 %v899, 0.0
        %v932 = vadd.f32 %v900, 0.0
        %v933 = vadd.f32 %v901, 0.0
        %v934 = vadd.f32 %v902, 0.0
        %v935 = vadd.f32 %v903, 0.0
        %v936 = vadd.f32 %v904, 0.0
        %v937 = vadd.f32 %v905, 0.0
        %v938 = vadd.f32 %v906, 0.0
        %v939 = vadd.f32 %v907, 0.0
        %v940 = vadd.f32 %v908, 0.0
        %v941 = vadd.f32 %v909, 0.0
        %v942 = vadd.f32 %v910, 0.0
        %v943 = vadd.f32 %v911, 0.0
        %v944 = vadd.f32 %v912, 0.0
        %v945 = vadd.f32 %v913, 0.0
        %v946 = vadd.f32 %v914, 0.0
        %v947 = vadd.f32 %v915, 0.0
        %v948 = vadd.f32 %v916, 0.0
        %v949 = vadd.f32 %v917, 0.0
        %v950 = vadd.f32 %v918, 0.0
        %vm951 = vcmp.eq.f32.partialorder %v785, 1.0
        %vm952 = vcmp.eq.f32.partialorder %v786, 1.0
        %vm953 = vcmp.eq.f32.partialorder %v787, 1.0
        %vm954 = vcmp.eq.f32.partialorder %v788, 1.0
        %vm955 = vcmp.eq.f32.partialorder %v789, 1.0
        %vm956 = vcmp.eq.f32.partialorder %v790, 1.0
        %vm957 = vcmp.eq.f32.partialorder %v791, 1.0
        %vm958 = vcmp.eq.f32.partialorder %v792, 1.0
        %vm959 = vcmp.eq.f32.partialorder %v793, 1.0
        %vm960 = vcmp.eq.f32.partialorder %v794, 1.0
        %vm961 = vcmp.eq.f32.partialorder %v795, 1.0
        %vm962 = vcmp.eq.f32.partialorder %v796, 1.0
        %vm963 = vcmp.eq.f32.partialorder %v797, 1.0
        %vm964 = vcmp.eq.f32.partialorder %v798, 1.0
        %vm965 = vcmp.eq.f32.partialorder %v799, 1.0
        %vm966 = vcmp.eq.f32.partialorder %v800, 1.0
        %vm967 = vcmp.eq.f32.partialorder %v801, 1.0
        %vm968 = vcmp.eq.f32.partialorder %v802, 1.0
        %vm969 = vcmp.eq.f32.partialorder %v803, 1.0
        %vm970 = vcmp.eq.f32.partialorder %v804, 1.0
        %vm971 = vcmp.eq.f32.partialorder %v805, 1.0
        %vm972 = vcmp.eq.f32.partialorder %v806, 1.0
        %vm973 = vcmp.eq.f32.partialorder %v807, 1.0
        %vm974 = vcmp.eq.f32.partialorder %v808, 1.0
        %vm975 = vcmp.eq.f32.partialorder %v809, 1.0
        %vm976 = vcmp.eq.f32.partialorder %v810, 1.0
        %vm977 = vcmp.eq.f32.partialorder %v811, 1.0
        %vm978 = vcmp.eq.f32.partialorder %v812, 1.0
        %vm979 = vcmp.eq.f32.partialorder %v813, 1.0
        %vm980 = vcmp.eq.f32.partialorder %v814, 1.0
        %vm981 = vcmp.eq.f32.partialorder %v815, 1.0
        %vm982 = vcmp.eq.f32.partialorder %v816, 1.0
        %v983 = vlaneseq
        %v984 = vshrl.u32 %v983, 7
        %v985 = vsub.s32 1, %v984
        %v986 = vrot.slane %v849, %v985
        %v987 = vsel %vm951, %v986, 0.0
        %v988 = vsel %vm952, %v986, 0.0
        %v989 = vsel %vm953, %v986, 0.0
        %v990 = vsel %vm954, %v986, 0.0
        %v991 = vsel %vm955, %v986, 0.0
        %v992 = vsel %vm956, %v986, 0.0
        %v993 = vsel %vm957, %v986, 0.0
        %v994 = vsel %vm958, %v986, 0.0
        %v995 = vsel %vm959, %v986, 0.0
        %v996 = vsel %vm960, %v986, 0.0
        %v997 = vsel %vm961, %v986, 0.0
        %v998 = vsel %vm962, %v986, 0.0
        %v999 = vsel %vm963, %v986, 0.0
        %v1000 = vsel %vm964, %v986, 0.0
        %v1001 = vsel %vm965, %v986, 0.0
        %v1002 = vsel %vm966, %v986, 0.0
        %v1003 = vsel %vm967, %v986, 0.0
        %v1004 = vsel %vm968, %v986, 0.0
        %v1005 = vsel %vm969, %v986, 0.0
        %v1006 = vsel %vm970, %v986, 0.0
        %v1007 = vsel %vm971, %v986, 0.0
        %v1008 = vsel %vm972, %v986, 0.0
        %v1009 = vsel %vm973, %v986, 0.0
        %v1010 = vsel %vm974, %v986, 0.0
        %v1011 = vsel %vm975, %v986, 0.0
        %v1012 = vsel %vm976, %v986, 0.0
        %v1013 = vsel %vm977, %v986, 0.0
        %v1014 = vsel %vm978, %v986, 0.0
        %v1015 = vsel %vm979, %v986, 0.0
        %v1016 = vsel %vm980, %v986, 0.0
        %v1017 = vsel %vm981, %v986, 0.0
        %v1018 = vsel %vm982, %v986, 0.0
        %v1019 = vadd.f32 %v919, %v987
        %v1020 = vadd.f32 %v920, %v988
        %v1021 = vadd.f32 %v921, %v989
        %v1022 = vadd.f32 %v922, %v990
        %v1023 = vadd.f32 %v923, %v991
        %v1024 = vadd.f32 %v924, %v992
        %v1025 = vadd.f32 %v925, %v993
        %v1026 = vadd.f32 %v926, %v994
        %v1027 = vadd.f32 %v927, %v995
        %v1028 = vadd.f32 %v928, %v996
        %v1029 = vadd.f32 %v929, %v997
        %v1030 = vadd.f32 %v930, %v998
        %v1031 = vadd.f32 %v931, %v999
        %v1032 = vadd.f32 %v932, %v1000
        %v1033 = vadd.f32 %v933, %v1001
        %v1034 = vadd.f32 %v934, %v1002
        %v1035 = vadd.f32 %v935, %v1003
        %v1036 = vadd.f32 %v936, %v1004
        %v1037 = vadd.f32 %v937, %v1005
        %v1038 = vadd.f32 %v938, %v1006
        %v1039 = vadd.f32 %v939, %v1007
        %v1040 = vadd.f32 %v940, %v1008
        %v1041 = vadd.f32 %v941, %v1009
        %v1042 = vadd.f32 %v942, %v1010
        %v1043 = vadd.f32 %v943, %v1011
        %v1044 = vadd.f32 %v944, %v1012
        %v1045 = vadd.f32 %v945, %v1013
        %v1046 = vadd.f32 %v946, %v1014
        %v1047 = vadd.f32 %v947, %v1015
        %v1048 = vadd.f32 %v948, %v1016
        %v1049 = vadd.f32 %v949, %v1017
        %v1050 = vadd.f32 %v950, %v1018
        %vm1051 = vcmp.eq.f32.partialorder %v785, 2.0
        %vm1052 = vcmp.eq.f32.partialorder %v786, 2.0
        %vm1053 = vcmp.eq.f32.partialorder %v787, 2.0
        %vm1054 = vcmp.eq.f32.partialorder %v788, 2.0
        %vm1055 = vcmp.eq.f32.partialorder %v789, 2.0
        %vm1056 = vcmp.eq.f32.partialorder %v790, 2.0
        %vm1057 = vcmp.eq.f32.partialorder %v791, 2.0
        %vm1058 = vcmp.eq.f32.partialorder %v792, 2.0
        %vm1059 = vcmp.eq.f32.partialorder %v793, 2.0
        %vm1060 = vcmp.eq.f32.partialorder %v794, 2.0
        %vm1061 = vcmp.eq.f32.partialorder %v795, 2.0
        %vm1062 = vcmp.eq.f32.partialorder %v796, 2.0
        %vm1063 = vcmp.eq.f32.partialorder %v797, 2.0
        %vm1064 = vcmp.eq.f32.partialorder %v798, 2.0
        %vm1065 = vcmp.eq.f32.partialorder %v799, 2.0
        %vm1066 = vcmp.eq.f32.partialorder %v800, 2.0
        %vm1067 = vcmp.eq.f32.partialorder %v801, 2.0
        %vm1068 = vcmp.eq.f32.partialorder %v802, 2.0
        %vm1069 = vcmp.eq.f32.partialorder %v803, 2.0
        %vm1070 = vcmp.eq.f32.partialorder %v804, 2.0
        %vm1071 = vcmp.eq.f32.partialorder %v805, 2.0
        %vm1072 = vcmp.eq.f32.partialorder %v806, 2.0
        %vm1073 = vcmp.eq.f32.partialorder %v807, 2.0
        %vm1074 = vcmp.eq.f32.partialorder %v808, 2.0
        %vm1075 = vcmp.eq.f32.partialorder %v809, 2.0
        %vm1076 = vcmp.eq.f32.partialorder %v810, 2.0
        %vm1077 = vcmp.eq.f32.partialorder %v811, 2.0
        %vm1078 = vcmp.eq.f32.partialorder %v812, 2.0
        %vm1079 = vcmp.eq.f32.partialorder %v813, 2.0
        %vm1080 = vcmp.eq.f32.partialorder %v814, 2.0
        %vm1081 = vcmp.eq.f32.partialorder %v815, 2.0
        %vm1082 = vcmp.eq.f32.partialorder %v816, 2.0
        %v1083 = vlaneseq
        %v1084 = vshrl.u32 %v1083, 7
        %v1085 = vsub.s32 2, %v1084
        %v1086 = vrot.slane %v849, %v1085
        %v1087 = vsel %vm1051, %v1086, 0.0
        %v1088 = vsel %vm1052, %v1086, 0.0
        %v1089 = vsel %vm1053, %v1086, 0.0
        %v1090 = vsel %vm1054, %v1086, 0.0
        %v1091 = vsel %vm1055, %v1086, 0.0
        %v1092 = vsel %vm1056, %v1086, 0.0
        %v1093 = vsel %vm1057, %v1086, 0.0
        %v1094 = vsel %vm1058, %v1086, 0.0
        %v1095 = vsel %vm1059, %v1086, 0.0
        %v1096 = vsel %vm1060, %v1086, 0.0
        %v1097 = vsel %vm1061, %v1086, 0.0
        %v1098 = vsel %vm1062, %v1086, 0.0
        %v1099 = vsel %vm1063, %v1086, 0.0
        %v1100 = vsel %vm1064, %v1086, 0.0
        %v1101 = vsel %vm1065, %v1086, 0.0
        %v1102 = vsel %vm1066, %v1086, 0.0
        %v1103 = vsel %vm1067, %v1086, 0.0
        %v1104 = vsel %vm1068, %v1086, 0.0
        %v1105 = vsel %vm1069, %v1086, 0.0
        %v1106 = vsel %vm1070, %v1086, 0.0
        %v1107 = vsel %vm1071, %v1086, 0.0
        %v1108 = vsel %vm1072, %v1086, 0.0
        %v1109 = vsel %vm1073, %v1086, 0.0
        %v1110 = vsel %vm1074, %v1086, 0.0
        %v1111 = vsel %vm1075, %v1086, 0.0
        %v1112 = vsel %vm1076, %v1086, 0.0
        %v1113 = vsel %vm1077, %v1086, 0.0
        %v1114 = vsel %vm1078, %v1086, 0.0
        %v1115 = vsel %vm1079, %v1086, 0.0
        %v1116 = vsel %vm1080, %v1086, 0.0
        %v1117 = vsel %vm1081, %v1086, 0.0
        %v1118 = vsel %vm1082, %v1086, 0.0
        %v1119 = vadd.f32 %v1019, %v1087
        %v1120 = vadd.f32 %v1020, %v1088
        %v1121 = vadd.f32 %v1021, %v1089
        %v1122 = vadd.f32 %v1022, %v1090
        %v1123 = vadd.f32 %v1023, %v1091
        %v1124 = vadd.f32 %v1024, %v1092
        %v1125 = vadd.f32 %v1025, %v1093
        %v1126 = vadd.f32 %v1026, %v1094
        %v1127 = vadd.f32 %v1027, %v1095
        %v1128 = vadd.f32 %v1028, %v1096
        %v1129 = vadd.f32 %v1029, %v1097
        %v1130 = vadd.f32 %v1030, %v1098
        %v1131 = vadd.f32 %v1031, %v1099
        %v1132 = vadd.f32 %v1032, %v1100
        %v1133 = vadd.f32 %v1033, %v1101
        %v1134 = vadd.f32 %v1034, %v1102
        %v1135 = vadd.f32 %v1035, %v1103
        %v1136 = vadd.f32 %v1036, %v1104
        %v1137 = vadd.f32 %v1037, %v1105
        %v1138 = vadd.f32 %v1038, %v1106
        %v1139 = vadd.f32 %v1039, %v1107
        %v1140 = vadd.f32 %v1040, %v1108
        %v1141 = vadd.f32 %v1041, %v1109
        %v1142 = vadd.f32 %v1042, %v1110
        %v1143 = vadd.f32 %v1043, %v1111
        %v1144 = vadd.f32 %v1044, %v1112
        %v1145 = vadd.f32 %v1045, %v1113
        %v1146 = vadd.f32 %v1046, %v1114
        %v1147 = vadd.f32 %v1047, %v1115
        %v1148 = vadd.f32 %v1048, %v1116
        %v1149 = vadd.f32 %v1049, %v1117
        %v1150 = vadd.f32 %v1050, %v1118
        %vm1151 = vcmp.eq.f32.partialorder %v785, 3.0
        %vm1152 = vcmp.eq.f32.partialorder %v786, 3.0
        %vm1153 = vcmp.eq.f32.partialorder %v787, 3.0
        %vm1154 = vcmp.eq.f32.partialorder %v788, 3.0
        %vm1155 = vcmp.eq.f32.partialorder %v789, 3.0
        %vm1156 = vcmp.eq.f32.partialorder %v790, 3.0
        %vm1157 = vcmp.eq.f32.partialorder %v791, 3.0
        %vm1158 = vcmp.eq.f32.partialorder %v792, 3.0
        %vm1159 = vcmp.eq.f32.partialorder %v793, 3.0
        %vm1160 = vcmp.eq.f32.partialorder %v794, 3.0
        %vm1161 = vcmp.eq.f32.partialorder %v795, 3.0
        %vm1162 = vcmp.eq.f32.partialorder %v796, 3.0
        %vm1163 = vcmp.eq.f32.partialorder %v797, 3.0
        %vm1164 = vcmp.eq.f32.partialorder %v798, 3.0
        %vm1165 = vcmp.eq.f32.partialorder %v799, 3.0
        %vm1166 = vcmp.eq.f32.partialorder %v800, 3.0
        %vm1167 = vcmp.eq.f32.partialorder %v801, 3.0
        %vm1168 = vcmp.eq.f32.partialorder %v802, 3.0
        %vm1169 = vcmp.eq.f32.partialorder %v803, 3.0
        %vm1170 = vcmp.eq.f32.partialorder %v804, 3.0
        %vm1171 = vcmp.eq.f32.partialorder %v805, 3.0
        %vm1172 = vcmp.eq.f32.partialorder %v806, 3.0
        %vm1173 = vcmp.eq.f32.partialorder %v807, 3.0
        %vm1174 = vcmp.eq.f32.partialorder %v808, 3.0
        %vm1175 = vcmp.eq.f32.partialorder %v809, 3.0
        %vm1176 = vcmp.eq.f32.partialorder %v810, 3.0
        %vm1177 = vcmp.eq.f32.partialorder %v811, 3.0
        %vm1178 = vcmp.eq.f32.partialorder %v812, 3.0
        %vm1179 = vcmp.eq.f32.partialorder %v813, 3.0
        %vm1180 = vcmp.eq.f32.partialorder %v814, 3.0
        %vm1181 = vcmp.eq.f32.partialorder %v815, 3.0
        %vm1182 = vcmp.eq.f32.partialorder %v816, 3.0
        %v1183 = vlaneseq
        %v1184 = vshrl.u32 %v1183, 7
        %v1185 = vsub.s32 3, %v1184
        %v1186 = vrot.slane %v849, %v1185
        %v1187 = vsel %vm1151, %v1186, 0.0
        %v1188 = vsel %vm1152, %v1186, 0.0
        %v1189 = vsel %vm1153, %v1186, 0.0
        %v1190 = vsel %vm1154, %v1186, 0.0
        %v1191 = vsel %vm1155, %v1186, 0.0
        %v1192 = vsel %vm1156, %v1186, 0.0
        %v1193 = vsel %vm1157, %v1186, 0.0
        %v1194 = vsel %vm1158, %v1186, 0.0
        %v1195 = vsel %vm1159, %v1186, 0.0
        %v1196 = vsel %vm1160, %v1186, 0.0
        %v1197 = vsel %vm1161, %v1186, 0.0
        %v1198 = vsel %vm1162, %v1186, 0.0
        %v1199 = vsel %vm1163, %v1186, 0.0
        %v1200 = vsel %vm1164, %v1186, 0.0
        %v1201 = vsel %vm1165, %v1186, 0.0
        %v1202 = vsel %vm1166, %v1186, 0.0
        %v1203 = vsel %vm1167, %v1186, 0.0
        %v1204 = vsel %vm1168, %v1186, 0.0
        %v1205 = vsel %vm1169, %v1186, 0.0
        %v1206 = vsel %vm1170, %v1186, 0.0
        %v1207 = vsel %vm1171, %v1186, 0.0
        %v1208 = vsel %vm1172, %v1186, 0.0
        %v1209 = vsel %vm1173, %v1186, 0.0
        %v1210 = vsel %vm1174, %v1186, 0.0
        %v1211 = vsel %vm1175, %v1186, 0.0
        %v1212 = vsel %vm1176, %v1186, 0.0
        %v1213 = vsel %vm1177, %v1186, 0.0
        %v1214 = vsel %vm1178, %v1186, 0.0
        %v1215 = vsel %vm1179, %v1186, 0.0
        %v1216 = vsel %vm1180, %v1186, 0.0
        %v1217 = vsel %vm1181, %v1186, 0.0
        %v1218 = vsel %vm1182, %v1186, 0.0
        %v1219 = vadd.f32 %v1119, %v1187
        %v1220 = vadd.f32 %v1120, %v1188
        %v1221 = vadd.f32 %v1121, %v1189
        %v1222 = vadd.f32 %v1122, %v1190
        %v1223 = vadd.f32 %v1123, %v1191
        %v1224 = vadd.f32 %v1124, %v1192
        %v1225 = vadd.f32 %v1125, %v1193
        %v1226 = vadd.f32 %v1126, %v1194
        %v1227 = vadd.f32 %v1127, %v1195
        %v1228 = vadd.f32 %v1128, %v1196
        %v1229 = vadd.f32 %v1129, %v1197
        %v1230 = vadd.f32 %v1130, %v1198
        %v1231 = vadd.f32 %v1131, %v1199
        %v1232 = vadd.f32 %v1132, %v1200
        %v1233 = vadd.f32 %v1133, %v1201
        %v1234 = vadd.f32 %v1134, %v1202
        %v1235 = vadd.f32 %v1135, %v1203
        %v1236 = vadd.f32 %v1136, %v1204
        %v1237 = vadd.f32 %v1137, %v1205
        %v1238 = vadd.f32 %v1138, %v1206
        %v1239 = vadd.f32 %v1139, %v1207
        %v1240 = vadd.f32 %v1140, %v1208
        %v1241 = vadd.f32 %v1141, %v1209
        %v1242 = vadd.f32 %v1142, %v1210
        %v1243 = vadd.f32 %v1143, %v1211
        %v1244 = vadd.f32 %v1144, %v1212
        %v1245 = vadd.f32 %v1145, %v1213
        %v1246 = vadd.f32 %v1146, %v1214
        %v1247 = vadd.f32 %v1147, %v1215
        %v1248 = vadd.f32 %v1148, %v1216
        %v1249 = vadd.f32 %v1149, %v1217
        %v1250 = vadd.f32 %v1150, %v1218
        %vm1251 = vcmp.eq.f32.partialorder %v817, 0.0
        %vm1252 = vcmp.eq.f32.partialorder %v818, 0.0
        %vm1253 = vcmp.eq.f32.partialorder %v819, 0.0
        %vm1254 = vcmp.eq.f32.partialorder %v820, 0.0
        %vm1255 = vcmp.eq.f32.partialorder %v821, 0.0
        %vm1256 = vcmp.eq.f32.partialorder %v822, 0.0
        %vm1257 = vcmp.eq.f32.partialorder %v823, 0.0
        %vm1258 = vcmp.eq.f32.partialorder %v824, 0.0
        %vm1259 = vcmp.eq.f32.partialorder %v825, 0.0
        %vm1260 = vcmp.eq.f32.partialorder %v826, 0.0
        %vm1261 = vcmp.eq.f32.partialorder %v827, 0.0
        %vm1262 = vcmp.eq.f32.partialorder %v828, 0.0
        %vm1263 = vcmp.eq.f32.partialorder %v829, 0.0
        %vm1264 = vcmp.eq.f32.partialorder %v830, 0.0
        %vm1265 = vcmp.eq.f32.partialorder %v831, 0.0
        %vm1266 = vcmp.eq.f32.partialorder %v832, 0.0
        %vm1267 = vcmp.eq.f32.partialorder %v833, 0.0
        %vm1268 = vcmp.eq.f32.partialorder %v834, 0.0
        %vm1269 = vcmp.eq.f32.partialorder %v835, 0.0
        %vm1270 = vcmp.eq.f32.partialorder %v836, 0.0
        %vm1271 = vcmp.eq.f32.partialorder %v837, 0.0
        %vm1272 = vcmp.eq.f32.partialorder %v838, 0.0
        %vm1273 = vcmp.eq.f32.partialorder %v839, 0.0
        %vm1274 = vcmp.eq.f32.partialorder %v840, 0.0
        %vm1275 = vcmp.eq.f32.partialorder %v841, 0.0
        %vm1276 = vcmp.eq.f32.partialorder %v842, 0.0
        %vm1277 = vcmp.eq.f32.partialorder %v843, 0.0
        %vm1278 = vcmp.eq.f32.partialorder %v844, 0.0
        %vm1279 = vcmp.eq.f32.partialorder %v845, 0.0
        %vm1280 = vcmp.eq.f32.partialorder %v846, 0.0
        %vm1281 = vcmp.eq.f32.partialorder %v847, 0.0
        %vm1282 = vcmp.eq.f32.partialorder %v848, 0.0
        %v1283 = vlaneseq
        %v1284 = vshrl.u32 %v1283, 7
        %v1285 = vsub.s32 0, %v1284
        %v1286 = vrot.slane %v850, %v1285
        %v1287 = vsel %vm1251, %v1286, 0.0
        %v1288 = vsel %vm1252, %v1286, 0.0
        %v1289 = vsel %vm1253, %v1286, 0.0
        %v1290 = vsel %vm1254, %v1286, 0.0
        %v1291 = vsel %vm1255, %v1286, 0.0
        %v1292 = vsel %vm1256, %v1286, 0.0
        %v1293 = vsel %vm1257, %v1286, 0.0
        %v1294 = vsel %vm1258, %v1286, 0.0
        %v1295 = vsel %vm1259, %v1286, 0.0
        %v1296 = vsel %vm1260, %v1286, 0.0
        %v1297 = vsel %vm1261, %v1286, 0.0
        %v1298 = vsel %vm1262, %v1286, 0.0
        %v1299 = vsel %vm1263, %v1286, 0.0
        %v1300 = vsel %vm1264, %v1286, 0.0
        %v1301 = vsel %vm1265, %v1286, 0.0
        %v1302 = vsel %vm1266, %v1286, 0.0
        %v1303 = vsel %vm1267, %v1286, 0.0
        %v1304 = vsel %vm1268, %v1286, 0.0
        %v1305 = vsel %vm1269, %v1286, 0.0
        %v1306 = vsel %vm1270, %v1286, 0.0
        %v1307 = vsel %vm1271, %v1286, 0.0
        %v1308 = vsel %vm1272, %v1286, 0.0
        %v1309 = vsel %vm1273, %v1286, 0.0
        %v1310 = vsel %vm1274, %v1286, 0.0
        %v1311 = vsel %vm1275, %v1286, 0.0
        %v1312 = vsel %vm1276, %v1286, 0.0
        %v1313 = vsel %vm1277, %v1286, 0.0
        %v1314 = vsel %vm1278, %v1286, 0.0
        %v1315 = vsel %vm1279, %v1286, 0.0
        %v1316 = vsel %vm1280, %v1286, 0.0
        %v1317 = vsel %vm1281, %v1286, 0.0
        %v1318 = vsel %vm1282, %v1286, 0.0
        %v1319 = vadd.f32 %v1287, 0.0
        %v1320 = vadd.f32 %v1288, 0.0
        %v1321 = vadd.f32 %v1289, 0.0
        %v1322 = vadd.f32 %v1290, 0.0
        %v1323 = vadd.f32 %v1291, 0.0
        %v1324 = vadd.f32 %v1292, 0.0
        %v1325 = vadd.f32 %v1293, 0.0
        %v1326 = vadd.f32 %v1294, 0.0
        %v1327 = vadd.f32 %v1295, 0.0
        %v1328 = vadd.f32 %v1296, 0.0
        %v1329 = vadd.f32 %v1297, 0.0
        %v1330 = vadd.f32 %v1298, 0.0
        %v1331 = vadd.f32 %v1299, 0.0
        %v1332 = vadd.f32 %v1300, 0.0
        %v1333 = vadd.f32 %v1301, 0.0
        %v1334 = vadd.f32 %v1302, 0.0
        %v1335 = vadd.f32 %v1303, 0.0
        %v1336 = vadd.f32 %v1304, 0.0
        %v1337 = vadd.f32 %v1305, 0.0
        %v1338 = vadd.f32 %v1306, 0.0
        %v1339 = vadd.f32 %v1307, 0.0
        %v1340 = vadd.f32 %v1308, 0.0
        %v1341 = vadd.f32 %v1309, 0.0
        %v1342 = vadd.f32 %v1310, 0.0
        %v1343 = vadd.f32 %v1311, 0.0
        %v1344 = vadd.f32 %v1312, 0.0
        %v1345 = vadd.f32 %v1313, 0.0
        %v1346 = vadd.f32 %v1314, 0.0
        %v1347 = vadd.f32 %v1315, 0.0
        %v1348 = vadd.f32 %v1316, 0.0
        %v1349 = vadd.f32 %v1317, 0.0
        %v1350 = vadd.f32 %v1318, 0.0
        %vm1351 = vcmp.eq.f32.partialorder %v817, 1.0
        %vm1352 = vcmp.eq.f32.partialorder %v818, 1.0
        %vm1353 = vcmp.eq.f32.partialorder %v819, 1.0
        %vm1354 = vcmp.eq.f32.partialorder %v820, 1.0
        %vm1355 = vcmp.eq.f32.partialorder %v821, 1.0
        %vm1356 = vcmp.eq.f32.partialorder %v822, 1.0
        %vm1357 = vcmp.eq.f32.partialorder %v823, 1.0
        %vm1358 = vcmp.eq.f32.partialorder %v824, 1.0
        %vm1359 = vcmp.eq.f32.partialorder %v825, 1.0
        %vm1360 = vcmp.eq.f32.partialorder %v826, 1.0
        %vm1361 = vcmp.eq.f32.partialorder %v827, 1.0
        %vm1362 = vcmp.eq.f32.partialorder %v828, 1.0
        %vm1363 = vcmp.eq.f32.partialorder %v829, 1.0
        %vm1364 = vcmp.eq.f32.partialorder %v830, 1.0
        %vm1365 = vcmp.eq.f32.partialorder %v831, 1.0
        %vm1366 = vcmp.eq.f32.partialorder %v832, 1.0
        %vm1367 = vcmp.eq.f32.partialorder %v833, 1.0
        %vm1368 = vcmp.eq.f32.partialorder %v834, 1.0
        %vm1369 = vcmp.eq.f32.partialorder %v835, 1.0
        %vm1370 = vcmp.eq.f32.partialorder %v836, 1.0
        %vm1371 = vcmp.eq.f32.partialorder %v837, 1.0
        %vm1372 = vcmp.eq.f32.partialorder %v838, 1.0
        %vm1373 = vcmp.eq.f32.partialorder %v839, 1.0
        %vm1374 = vcmp.eq.f32.partialorder %v840, 1.0
        %vm1375 = vcmp.eq.f32.partialorder %v841, 1.0
        %vm1376 = vcmp.eq.f32.partialorder %v842, 1.0
        %vm1377 = vcmp.eq.f32.partialorder %v843, 1.0
        %vm1378 = vcmp.eq.f32.partialorder %v844, 1.0
        %vm1379 = vcmp.eq.f32.partialorder %v845, 1.0
        %vm1380 = vcmp.eq.f32.partialorder %v846, 1.0
        %vm1381 = vcmp.eq.f32.partialorder %v847, 1.0
        %vm1382 = vcmp.eq.f32.partialorder %v848, 1.0
        %v1383 = vlaneseq
        %v1384 = vshrl.u32 %v1383, 7
        %v1385 = vsub.s32 1, %v1384
        %v1386 = vrot.slane %v850, %v1385
        %v1387 = vsel %vm1351, %v1386, 0.0
        %v1388 = vsel %vm1352, %v1386, 0.0
        %v1389 = vsel %vm1353, %v1386, 0.0
        %v1390 = vsel %vm1354, %v1386, 0.0
        %v1391 = vsel %vm1355, %v1386, 0.0
        %v1392 = vsel %vm1356, %v1386, 0.0
        %v1393 = vsel %vm1357, %v1386, 0.0
        %v1394 = vsel %vm1358, %v1386, 0.0
        %v1395 = vsel %vm1359, %v1386, 0.0
        %v1396 = vsel %vm1360, %v1386, 0.0
        %v1397 = vsel %vm1361, %v1386, 0.0
        %v1398 = vsel %vm1362, %v1386, 0.0
        %v1399 = vsel %vm1363, %v1386, 0.0
        %v1400 = vsel %vm1364, %v1386, 0.0
        %v1401 = vsel %vm1365, %v1386, 0.0
        %v1402 = vsel %vm1366, %v1386, 0.0
        %v1403 = vsel %vm1367, %v1386, 0.0
        %v1404 = vsel %vm1368, %v1386, 0.0
        %v1405 = vsel %vm1369, %v1386, 0.0
        %v1406 = vsel %vm1370, %v1386, 0.0
        %v1407 = vsel %vm1371, %v1386, 0.0
        %v1408 = vsel %vm1372, %v1386, 0.0
        %v1409 = vsel %vm1373, %v1386, 0.0
        %v1410 = vsel %vm1374, %v1386, 0.0
        %v1411 = vsel %vm1375, %v1386, 0.0
        %v1412 = vsel %vm1376, %v1386, 0.0
        %v1413 = vsel %vm1377, %v1386, 0.0
        %v1414 = vsel %vm1378, %v1386, 0.0
        %v1415 = vsel %vm1379, %v1386, 0.0
        %v1416 = vsel %vm1380, %v1386, 0.0
        %v1417 = vsel %vm1381, %v1386, 0.0
        %v1418 = vsel %vm1382, %v1386, 0.0
        %v1419 = vadd.f32 %v1319, %v1387
        %v1420 = vadd.f32 %v1320, %v1388
        %v1421 = vadd.f32 %v1321, %v1389
        %v1422 = vadd.f32 %v1322, %v1390
        %v1423 = vadd.f32 %v1323, %v1391
        %v1424 = vadd.f32 %v1324, %v1392
        %v1425 = vadd.f32 %v1325, %v1393
        %v1426 = vadd.f32 %v1326, %v1394
        %v1427 = vadd.f32 %v1327, %v1395
        %v1428 = vadd.f32 %v1328, %v1396
        %v1429 = vadd.f32 %v1329, %v1397
        %v1430 = vadd.f32 %v1330, %v1398
        %v1431 = vadd.f32 %v1331, %v1399
        %v1432 = vadd.f32 %v1332, %v1400
        %v1433 = vadd.f32 %v1333, %v1401
        %v1434 = vadd.f32 %v1334, %v1402
        %v1435 = vadd.f32 %v1335, %v1403
        %v1436 = vadd.f32 %v1336, %v1404
        %v1437 = vadd.f32 %v1337, %v1405
        %v1438 = vadd.f32 %v1338, %v1406
        %v1439 = vadd.f32 %v1339, %v1407
        %v1440 = vadd.f32 %v1340, %v1408
        %v1441 = vadd.f32 %v1341, %v1409
        %v1442 = vadd.f32 %v1342, %v1410
        %v1443 = vadd.f32 %v1343, %v1411
        %v1444 = vadd.f32 %v1344, %v1412
        %v1445 = vadd.f32 %v1345, %v1413
        %v1446 = vadd.f32 %v1346, %v1414
        %v1447 = vadd.f32 %v1347, %v1415
        %v1448 = vadd.f32 %v1348, %v1416
        %v1449 = vadd.f32 %v1349, %v1417
        %v1450 = vadd.f32 %v1350, %v1418
        %vm1451 = vcmp.eq.f32.partialorder %v817, 2.0
        %vm1452 = vcmp.eq.f32.partialorder %v818, 2.0
        %vm1453 = vcmp.eq.f32.partialorder %v819, 2.0
        %vm1454 = vcmp.eq.f32.partialorder %v820, 2.0
        %vm1455 = vcmp.eq.f32.partialorder %v821, 2.0
        %vm1456 = vcmp.eq.f32.partialorder %v822, 2.0
        %vm1457 = vcmp.eq.f32.partialorder %v823, 2.0
        %vm1458 = vcmp.eq.f32.partialorder %v824, 2.0
        %vm1459 = vcmp.eq.f32.partialorder %v825, 2.0
        %vm1460 = vcmp.eq.f32.partialorder %v826, 2.0
        %vm1461 = vcmp.eq.f32.partialorder %v827, 2.0
        %vm1462 = vcmp.eq.f32.partialorder %v828, 2.0
        %vm1463 = vcmp.eq.f32.partialorder %v829, 2.0
        %vm1464 = vcmp.eq.f32.partialorder %v830, 2.0
        %vm1465 = vcmp.eq.f32.partialorder %v831, 2.0
        %vm1466 = vcmp.eq.f32.partialorder %v832, 2.0
        %vm1467 = vcmp.eq.f32.partialorder %v833, 2.0
        %vm1468 = vcmp.eq.f32.partialorder %v834, 2.0
        %vm1469 = vcmp.eq.f32.partialorder %v835, 2.0
        %vm1470 = vcmp.eq.f32.partialorder %v836, 2.0
        %vm1471 = vcmp.eq.f32.partialorder %v837, 2.0
        %vm1472 = vcmp.eq.f32.partialorder %v838, 2.0
        %vm1473 = vcmp.eq.f32.partialorder %v839, 2.0
        %vm1474 = vcmp.eq.f32.partialorder %v840, 2.0
        %vm1475 = vcmp.eq.f32.partialorder %v841, 2.0
        %vm1476 = vcmp.eq.f32.partialorder %v842, 2.0
        %vm1477 = vcmp.eq.f32.partialorder %v843, 2.0
        %vm1478 = vcmp.eq.f32.partialorder %v844, 2.0
        %vm1479 = vcmp.eq.f32.partialorder %v845, 2.0
        %vm1480 = vcmp.eq.f32.partialorder %v846, 2.0
        %vm1481 = vcmp.eq.f32.partialorder %v847, 2.0
        %vm1482 = vcmp.eq.f32.partialorder %v848, 2.0
        %v1483 = vlaneseq
        %v1484 = vshrl.u32 %v1483, 7
        %v1485 = vsub.s32 2, %v1484
        %v1486 = vrot.slane %v850, %v1485
        %v1487 = vsel %vm1451, %v1486, 0.0
        %v1488 = vsel %vm1452, %v1486, 0.0
        %v1489 = vsel %vm1453, %v1486, 0.0
        %v1490 = vsel %vm1454, %v1486, 0.0
        %v1491 = vsel %vm1455, %v1486, 0.0
        %v1492 = vsel %vm1456, %v1486, 0.0
        %v1493 = vsel %vm1457, %v1486, 0.0
        %v1494 = vsel %vm1458, %v1486, 0.0
        %v1495 = vsel %vm1459, %v1486, 0.0
        %v1496 = vsel %vm1460, %v1486, 0.0
        %v1497 = vsel %vm1461, %v1486, 0.0
        %v1498 = vsel %vm1462, %v1486, 0.0
        %v1499 = vsel %vm1463, %v1486, 0.0
        %v1500 = vsel %vm1464, %v1486, 0.0
        %v1501 = vsel %vm1465, %v1486, 0.0
        %v1502 = vsel %vm1466, %v1486, 0.0
        %v1503 = vsel %vm1467, %v1486, 0.0
        %v1504 = vsel %vm1468, %v1486, 0.0
        %v1505 = vsel %vm1469, %v1486, 0.0
        %v1506 = vsel %vm1470, %v1486, 0.0
        %v1507 = vsel %vm1471, %v1486, 0.0
        %v1508 = vsel %vm1472, %v1486, 0.0
        %v1509 = vsel %vm1473, %v1486, 0.0
        %v1510 = vsel %vm1474, %v1486, 0.0
        %v1511 = vsel %vm1475, %v1486, 0.0
        %v1512 = vsel %vm1476, %v1486, 0.0
        %v1513 = vsel %vm1477, %v1486, 0.0
        %v1514 = vsel %vm1478, %v1486, 0.0
        %v1515 = vsel %vm1479, %v1486, 0.0
        %v1516 = vsel %vm1480, %v1486, 0.0
        %v1517 = vsel %vm1481, %v1486, 0.0
        %v1518 = vsel %vm1482, %v1486, 0.0
        %v1519 = vadd.f32 %v1419, %v1487
        %v1520 = vadd.f32 %v1420, %v1488
        %v1521 = vadd.f32 %v1421, %v1489
        %v1522 = vadd.f32 %v1422, %v1490
        %v1523 = vadd.f32 %v1423, %v1491
        %v1524 = vadd.f32 %v1424, %v1492
        %v1525 = vadd.f32 %v1425, %v1493
        %v1526 = vadd.f32 %v1426, %v1494
        %v1527 = vadd.f32 %v1427, %v1495
        %v1528 = vadd.f32 %v1428, %v1496
        %v1529 = vadd.f32 %v1429, %v1497
        %v1530 = vadd.f32 %v1430, %v1498
        %v1531 = vadd.f32 %v1431, %v1499
        %v1532 = vadd.f32 %v1432, %v1500
        %v1533 = vadd.f32 %v1433, %v1501
        %v1534 = vadd.f32 %v1434, %v1502
        %v1535 = vadd.f32 %v1435, %v1503
        %v1536 = vadd.f32 %v1436, %v1504
        %v1537 = vadd.f32 %v1437, %v1505
        %v1538 = vadd.f32 %v1438, %v1506
        %v1539 = vadd.f32 %v1439, %v1507
        %v1540 = vadd.f32 %v1440, %v1508
        %v1541 = vadd.f32 %v1441, %v1509
        %v1542 = vadd.f32 %v1442, %v1510
        %v1543 = vadd.f32 %v1443, %v1511
        %v1544 = vadd.f32 %v1444, %v1512
        %v1545 = vadd.f32 %v1445, %v1513
        %v1546 = vadd.f32 %v1446, %v1514
        %v1547 = vadd.f32 %v1447, %v1515
        %v1548 = vadd.f32 %v1448, %v1516
        %v1549 = vadd.f32 %v1449, %v1517
        %v1550 = vadd.f32 %v1450, %v1518
        %v1551 = vmul.f32 %v286, %v1219
        %v1552 = vmul.f32 %v287, %v1220
        %v1553 = vmul.f32 %v288, %v1221
        %v1554 = vmul.f32 %v289, %v1222
        %v1555 = vmul.f32 %v290, %v1223
        %v1556 = vmul.f32 %v291, %v1224
        %v1557 = vmul.f32 %v292, %v1225
        %v1558 = vmul.f32 %v293, %v1226
        %v1559 = vmul.f32 %v294, %v1227
        %v1560 = vmul.f32 %v295, %v1228
        %v1561 = vmul.f32 %v296, %v1229
        %v1562 = vmul.f32 %v297, %v1230
        %v1563 = vmul.f32 %v298, %v1231
        %v1564 = vmul.f32 %v299, %v1232
        %v1565 = vmul.f32 %v300, %v1233
        %v1566 = vmul.f32 %v301, %v1234
        %v1567 = vmul.f32 %v302, %v1235
        %v1568 = vmul.f32 %v303, %v1236
        %v1569 = vmul.f32 %v304, %v1237
        %v1570 = vmul.f32 %v305, %v1238
        %v1571 = vmul.f32 %v306, %v1239
        %v1572 = vmul.f32 %v307, %v1240
        %v1573 = vmul.f32 %v308, %v1241
        %v1574 = vmul.f32 %v309, %v1242
        %v1575 = vmul.f32 %v310, %v1243
        %v1576 = vmul.f32 %v311, %v1244
        %v1577 = vmul.f32 %v312, %v1245
        %v1578 = vmul.f32 %v313, %v1246
        %v1579 = vmul.f32 %v314, %v1247
        %v1580 = vmul.f32 %v315, %v1248
        %v1581 = vmul.f32 %v316, %v1249
        %v1582 = vmul.f32 %v317, %v1250
        %v1583 = vsel %vm406, %v1551, 0.0
        %1584 = vadd.xlane.f32.xlu0 %v1583
        %v1585 = vpop.xlane.xlu0 %1584
        %v1586 = vsel %vm406, %v1552, 0.0
        %1587 = vadd.xlane.f32.xlu0 %v1586
        %v1588 = vpop.xlane.xlu0 %1587
        %v1589 = vsel %vm406, %v1553, 0.0
        %1590 = vadd.xlane.f32.xlu0 %v1589
        %v1591 = vpop.xlane.xlu0 %1590
        %v1592 = vsel %vm406, %v1554, 0.0
        %1593 = vadd.xlane.f32.xlu0 %v1592
        %v1594 = vpop.xlane.xlu0 %1593
        %v1595 = vsel %vm406, %v1555, 0.0
        %1596 = vadd.xlane.f32.xlu0 %v1595
        %v1597 = vpop.xlane.xlu0 %1596
        %v1598 = vsel %vm406, %v1556, 0.0
        %1599 = vadd.xlane.f32.xlu0 %v1598
        %v1600 = vpop.xlane.xlu0 %1599
        %v1601 = vsel %vm406, %v1557, 0.0
        %1602 = vadd.xlane.f32.xlu0 %v1601
        %v1603 = vpop.xlane.xlu0 %1602
        %v1604 = vsel %vm406, %v1558, 0.0
        %1605 = vadd.xlane.f32.xlu0 %v1604
        %v1606 = vpop.xlane.xlu0 %1605
        %v1607 = vsel %vm406, %v1559, 0.0
        %1608 = vadd.xlane.f32.xlu0 %v1607
        %v1609 = vpop.xlane.xlu0 %1608
        %v1610 = vsel %vm406, %v1560, 0.0
        %1611 = vadd.xlane.f32.xlu0 %v1610
        %v1612 = vpop.xlane.xlu0 %1611
        %v1613 = vsel %vm406, %v1561, 0.0
        %1614 = vadd.xlane.f32.xlu0 %v1613
        %v1615 = vpop.xlane.xlu0 %1614
        %v1616 = vsel %vm406, %v1562, 0.0
        %1617 = vadd.xlane.f32.xlu0 %v1616
        %v1618 = vpop.xlane.xlu0 %1617
        %v1619 = vsel %vm406, %v1563, 0.0
        %1620 = vadd.xlane.f32.xlu0 %v1619
        %v1621 = vpop.xlane.xlu0 %1620
        %v1622 = vsel %vm406, %v1564, 0.0
        %1623 = vadd.xlane.f32.xlu0 %v1622
        %v1624 = vpop.xlane.xlu0 %1623
        %v1625 = vsel %vm406, %v1565, 0.0
        %1626 = vadd.xlane.f32.xlu0 %v1625
        %v1627 = vpop.xlane.xlu0 %1626
        %v1628 = vsel %vm406, %v1566, 0.0
        %1629 = vadd.xlane.f32.xlu0 %v1628
        %v1630 = vpop.xlane.xlu0 %1629
        %v1631 = vsel %vm406, %v1567, 0.0
        %1632 = vadd.xlane.f32.xlu0 %v1631
        %v1633 = vpop.xlane.xlu0 %1632
        %v1634 = vsel %vm406, %v1568, 0.0
        %1635 = vadd.xlane.f32.xlu0 %v1634
        %v1636 = vpop.xlane.xlu0 %1635
        %v1637 = vsel %vm406, %v1569, 0.0
        %1638 = vadd.xlane.f32.xlu0 %v1637
        %v1639 = vpop.xlane.xlu0 %1638
        %v1640 = vsel %vm406, %v1570, 0.0
        %1641 = vadd.xlane.f32.xlu0 %v1640
        %v1642 = vpop.xlane.xlu0 %1641
        %v1643 = vsel %vm406, %v1571, 0.0
        %1644 = vadd.xlane.f32.xlu0 %v1643
        %v1645 = vpop.xlane.xlu0 %1644
        %v1646 = vsel %vm406, %v1572, 0.0
        %1647 = vadd.xlane.f32.xlu0 %v1646
        %v1648 = vpop.xlane.xlu0 %1647
        %v1649 = vsel %vm406, %v1573, 0.0
        %1650 = vadd.xlane.f32.xlu0 %v1649
        %v1651 = vpop.xlane.xlu0 %1650
        %v1652 = vsel %vm406, %v1574, 0.0
        %1653 = vadd.xlane.f32.xlu0 %v1652
        %v1654 = vpop.xlane.xlu0 %1653
        %v1655 = vsel %vm406, %v1575, 0.0
        %1656 = vadd.xlane.f32.xlu0 %v1655
        %v1657 = vpop.xlane.xlu0 %1656
        %v1658 = vsel %vm406, %v1576, 0.0
        %1659 = vadd.xlane.f32.xlu0 %v1658
        %v1660 = vpop.xlane.xlu0 %1659
        %v1661 = vsel %vm406, %v1577, 0.0
        %1662 = vadd.xlane.f32.xlu0 %v1661
        %v1663 = vpop.xlane.xlu0 %1662
        %v1664 = vsel %vm406, %v1578, 0.0
        %1665 = vadd.xlane.f32.xlu0 %v1664
        %v1666 = vpop.xlane.xlu0 %1665
        %v1667 = vsel %vm406, %v1579, 0.0
        %1668 = vadd.xlane.f32.xlu0 %v1667
        %v1669 = vpop.xlane.xlu0 %1668
        %v1670 = vsel %vm406, %v1580, 0.0
        %1671 = vadd.xlane.f32.xlu0 %v1670
        %v1672 = vpop.xlane.xlu0 %1671
        %v1673 = vsel %vm406, %v1581, 0.0
        %1674 = vadd.xlane.f32.xlu0 %v1673
        %v1675 = vpop.xlane.xlu0 %1674
        %v1676 = vsel %vm406, %v1582, 0.0
        %1677 = vadd.xlane.f32.xlu0 %v1676
        %v1678 = vpop.xlane.xlu0 %1677
        %v1679 = vmul.f32 %v286, %v1519
        %v1680 = vmul.f32 %v287, %v1520
        %v1681 = vmul.f32 %v288, %v1521
        %v1682 = vmul.f32 %v289, %v1522
        %v1683 = vmul.f32 %v290, %v1523
        %v1684 = vmul.f32 %v291, %v1524
        %v1685 = vmul.f32 %v292, %v1525
        %v1686 = vmul.f32 %v293, %v1526
        %v1687 = vmul.f32 %v294, %v1527
        %v1688 = vmul.f32 %v295, %v1528
        %v1689 = vmul.f32 %v296, %v1529
        %v1690 = vmul.f32 %v297, %v1530
        %v1691 = vmul.f32 %v298, %v1531
        %v1692 = vmul.f32 %v299, %v1532
        %v1693 = vmul.f32 %v300, %v1533
        %v1694 = vmul.f32 %v301, %v1534
        %v1695 = vmul.f32 %v302, %v1535
        %v1696 = vmul.f32 %v303, %v1536
        %v1697 = vmul.f32 %v304, %v1537
        %v1698 = vmul.f32 %v305, %v1538
        %v1699 = vmul.f32 %v306, %v1539
        %v1700 = vmul.f32 %v307, %v1540
        %v1701 = vmul.f32 %v308, %v1541
        %v1702 = vmul.f32 %v309, %v1542
        %v1703 = vmul.f32 %v310, %v1543
        %v1704 = vmul.f32 %v311, %v1544
        %v1705 = vmul.f32 %v312, %v1545
        %v1706 = vmul.f32 %v313, %v1546
        %v1707 = vmul.f32 %v314, %v1547
        %v1708 = vmul.f32 %v315, %v1548
        %v1709 = vmul.f32 %v316, %v1549
        %v1710 = vmul.f32 %v317, %v1550
        %v1711 = vsel %vm406, %v1679, 0.0
        %1712 = vadd.xlane.f32.xlu0 %v1711
        %v1713 = vpop.xlane.xlu0 %1712
        %v1714 = vsel %vm406, %v1680, 0.0
        %1715 = vadd.xlane.f32.xlu0 %v1714
        %v1716 = vpop.xlane.xlu0 %1715
        %v1717 = vsel %vm406, %v1681, 0.0
        %1718 = vadd.xlane.f32.xlu0 %v1717
        %v1719 = vpop.xlane.xlu0 %1718
        %v1720 = vsel %vm406, %v1682, 0.0
        %1721 = vadd.xlane.f32.xlu0 %v1720
        %v1722 = vpop.xlane.xlu0 %1721
        %v1723 = vsel %vm406, %v1683, 0.0
        %1724 = vadd.xlane.f32.xlu0 %v1723
        %v1725 = vpop.xlane.xlu0 %1724
        %v1726 = vsel %vm406, %v1684, 0.0
        %1727 = vadd.xlane.f32.xlu0 %v1726
        %v1728 = vpop.xlane.xlu0 %1727
        %v1729 = vsel %vm406, %v1685, 0.0
        %1730 = vadd.xlane.f32.xlu0 %v1729
        %v1731 = vpop.xlane.xlu0 %1730
        %v1732 = vsel %vm406, %v1686, 0.0
        %1733 = vadd.xlane.f32.xlu0 %v1732
        %v1734 = vpop.xlane.xlu0 %1733
        %v1735 = vsel %vm406, %v1687, 0.0
        %1736 = vadd.xlane.f32.xlu0 %v1735
        %v1737 = vpop.xlane.xlu0 %1736
        %v1738 = vsel %vm406, %v1688, 0.0
        %1739 = vadd.xlane.f32.xlu0 %v1738
        %v1740 = vpop.xlane.xlu0 %1739
        %v1741 = vsel %vm406, %v1689, 0.0
        %1742 = vadd.xlane.f32.xlu0 %v1741
        %v1743 = vpop.xlane.xlu0 %1742
        %v1744 = vsel %vm406, %v1690, 0.0
        %1745 = vadd.xlane.f32.xlu0 %v1744
        %v1746 = vpop.xlane.xlu0 %1745
        %v1747 = vsel %vm406, %v1691, 0.0
        %1748 = vadd.xlane.f32.xlu0 %v1747
        %v1749 = vpop.xlane.xlu0 %1748
        %v1750 = vsel %vm406, %v1692, 0.0
        %1751 = vadd.xlane.f32.xlu0 %v1750
        %v1752 = vpop.xlane.xlu0 %1751
        %v1753 = vsel %vm406, %v1693, 0.0
        %1754 = vadd.xlane.f32.xlu0 %v1753
        %v1755 = vpop.xlane.xlu0 %1754
        %v1756 = vsel %vm406, %v1694, 0.0
        %1757 = vadd.xlane.f32.xlu0 %v1756
        %v1758 = vpop.xlane.xlu0 %1757
        %v1759 = vsel %vm406, %v1695, 0.0
        %1760 = vadd.xlane.f32.xlu0 %v1759
        %v1761 = vpop.xlane.xlu0 %1760
        %v1762 = vsel %vm406, %v1696, 0.0
        %1763 = vadd.xlane.f32.xlu0 %v1762
        %v1764 = vpop.xlane.xlu0 %1763
        %v1765 = vsel %vm406, %v1697, 0.0
        %1766 = vadd.xlane.f32.xlu0 %v1765
        %v1767 = vpop.xlane.xlu0 %1766
        %v1768 = vsel %vm406, %v1698, 0.0
        %1769 = vadd.xlane.f32.xlu0 %v1768
        %v1770 = vpop.xlane.xlu0 %1769
        %v1771 = vsel %vm406, %v1699, 0.0
        %1772 = vadd.xlane.f32.xlu0 %v1771
        %v1773 = vpop.xlane.xlu0 %1772
        %v1774 = vsel %vm406, %v1700, 0.0
        %1775 = vadd.xlane.f32.xlu0 %v1774
        %v1776 = vpop.xlane.xlu0 %1775
        %v1777 = vsel %vm406, %v1701, 0.0
        %1778 = vadd.xlane.f32.xlu0 %v1777
        %v1779 = vpop.xlane.xlu0 %1778
        %v1780 = vsel %vm406, %v1702, 0.0
        %1781 = vadd.xlane.f32.xlu0 %v1780
        %v1782 = vpop.xlane.xlu0 %1781
        %v1783 = vsel %vm406, %v1703, 0.0
        %1784 = vadd.xlane.f32.xlu0 %v1783
        %v1785 = vpop.xlane.xlu0 %1784
        %v1786 = vsel %vm406, %v1704, 0.0
        %1787 = vadd.xlane.f32.xlu0 %v1786
        %v1788 = vpop.xlane.xlu0 %1787
        %v1789 = vsel %vm406, %v1705, 0.0
        %1790 = vadd.xlane.f32.xlu0 %v1789
        %v1791 = vpop.xlane.xlu0 %1790
        %v1792 = vsel %vm406, %v1706, 0.0
        %1793 = vadd.xlane.f32.xlu0 %v1792
        %v1794 = vpop.xlane.xlu0 %1793
        %v1795 = vsel %vm406, %v1707, 0.0
        %1796 = vadd.xlane.f32.xlu0 %v1795
        %v1797 = vpop.xlane.xlu0 %1796
        %v1798 = vsel %vm406, %v1708, 0.0
        %1799 = vadd.xlane.f32.xlu0 %v1798
        %v1800 = vpop.xlane.xlu0 %1799
        %v1801 = vsel %vm406, %v1709, 0.0
        %1802 = vadd.xlane.f32.xlu0 %v1801
        %v1803 = vpop.xlane.xlu0 %1802
        %v1804 = vsel %vm406, %v1710, 0.0
        %1805 = vadd.xlane.f32.xlu0 %v1804
        %v1806 = vpop.xlane.xlu0 %1805
        %v1807 = vlaneseq
        %v1808 = vand.u32 %v1807, 127
        %vm1809 = vcmp.lt.s32.totalorder %v1808, 0
        %v1810 = vsub.s32 0, %v1808
        %v1811 = vsel %vm1809, %v1810, %v1808
        %v1812 = vshrl.u32 %v1811, 1
        %v1813 = vand.u32 %v1811, 1
        %v1814 = vsub.s32 0, %v1813
        %v1815 = vsel %vm1809, %v1814, %v1813
        %vm1816 = vcmp.ne.s32.totalorder %v1815, 0
        %vm1817 = vcmp.lt.s32.totalorder %v1815, 0
        %vm1818 = vmand %vm1817, %vm1816
        %v1819 = vadd.s32 %v1815, 2
        %v1820 = vsel %vm1818, %v1819, %v1815
        %vm1821 = vcmp.eq.s32.totalorder %v1820, 0
        %v1822 = vsel %vm1821, 1, 0
        %v1823 = vcvt.s32.f32 %v1822
        %v1824 = vmul.f32 %v286, %v1823
        %v1825 = vmul.f32 %v287, %v1823
        %v1826 = vmul.f32 %v288, %v1823
        %v1827 = vmul.f32 %v289, %v1823
        %v1828 = vmul.f32 %v290, %v1823
        %v1829 = vmul.f32 %v291, %v1823
        %v1830 = vmul.f32 %v292, %v1823
        %v1831 = vmul.f32 %v293, %v1823
        %v1832 = vmul.f32 %v294, %v1823
        %v1833 = vmul.f32 %v295, %v1823
        %v1834 = vmul.f32 %v296, %v1823
        %v1835 = vmul.f32 %v297, %v1823
        %v1836 = vmul.f32 %v298, %v1823
        %v1837 = vmul.f32 %v299, %v1823
        %v1838 = vmul.f32 %v300, %v1823
        %v1839 = vmul.f32 %v301, %v1823
        %v1840 = vmul.f32 %v302, %v1823
        %v1841 = vmul.f32 %v303, %v1823
        %v1842 = vmul.f32 %v304, %v1823
        %v1843 = vmul.f32 %v305, %v1823
        %v1844 = vmul.f32 %v306, %v1823
        %v1845 = vmul.f32 %v307, %v1823
        %v1846 = vmul.f32 %v308, %v1823
        %v1847 = vmul.f32 %v309, %v1823
        %v1848 = vmul.f32 %v310, %v1823
        %v1849 = vmul.f32 %v311, %v1823
        %v1850 = vmul.f32 %v312, %v1823
        %v1851 = vmul.f32 %v313, %v1823
        %v1852 = vmul.f32 %v314, %v1823
        %v1853 = vmul.f32 %v315, %v1823
        %v1854 = vmul.f32 %v316, %v1823
        %v1855 = vmul.f32 %v317, %v1823
        %v1856 = vsel %vm406, %v1824, 0.0
        %1857 = vadd.xlane.f32.xlu0 %v1856
        %v1858 = vpop.xlane.xlu0 %1857
        %v1859 = vsel %vm406, %v1825, 0.0
        %1860 = vadd.xlane.f32.xlu0 %v1859
        %v1861 = vpop.xlane.xlu0 %1860
        %v1862 = vsel %vm406, %v1826, 0.0
        %1863 = vadd.xlane.f32.xlu0 %v1862
        %v1864 = vpop.xlane.xlu0 %1863
        %v1865 = vsel %vm406, %v1827, 0.0
        %1866 = vadd.xlane.f32.xlu0 %v1865
        %v1867 = vpop.xlane.xlu0 %1866
        %v1868 = vsel %vm406, %v1828, 0.0
        %1869 = vadd.xlane.f32.xlu0 %v1868
        %v1870 = vpop.xlane.xlu0 %1869
        %v1871 = vsel %vm406, %v1829, 0.0
        %1872 = vadd.xlane.f32.xlu0 %v1871
        %v1873 = vpop.xlane.xlu0 %1872
        %v1874 = vsel %vm406, %v1830, 0.0
        %1875 = vadd.xlane.f32.xlu0 %v1874
        %v1876 = vpop.xlane.xlu0 %1875
        %v1877 = vsel %vm406, %v1831, 0.0
        %1878 = vadd.xlane.f32.xlu0 %v1877
        %v1879 = vpop.xlane.xlu0 %1878
        %v1880 = vsel %vm406, %v1832, 0.0
        %1881 = vadd.xlane.f32.xlu0 %v1880
        %v1882 = vpop.xlane.xlu0 %1881
        %v1883 = vsel %vm406, %v1833, 0.0
        %1884 = vadd.xlane.f32.xlu0 %v1883
        %v1885 = vpop.xlane.xlu0 %1884
        %v1886 = vsel %vm406, %v1834, 0.0
        %1887 = vadd.xlane.f32.xlu0 %v1886
        %v1888 = vpop.xlane.xlu0 %1887
        %v1889 = vsel %vm406, %v1835, 0.0
        %1890 = vadd.xlane.f32.xlu0 %v1889
        %v1891 = vpop.xlane.xlu0 %1890
        %v1892 = vsel %vm406, %v1836, 0.0
        %1893 = vadd.xlane.f32.xlu0 %v1892
        %v1894 = vpop.xlane.xlu0 %1893
        %v1895 = vsel %vm406, %v1837, 0.0
        %1896 = vadd.xlane.f32.xlu0 %v1895
        %v1897 = vpop.xlane.xlu0 %1896
        %v1898 = vsel %vm406, %v1838, 0.0
        %1899 = vadd.xlane.f32.xlu0 %v1898
        %v1900 = vpop.xlane.xlu0 %1899
        %v1901 = vsel %vm406, %v1839, 0.0
        %1902 = vadd.xlane.f32.xlu0 %v1901
        %v1903 = vpop.xlane.xlu0 %1902
        %v1904 = vsel %vm406, %v1840, 0.0
        %1905 = vadd.xlane.f32.xlu0 %v1904
        %v1906 = vpop.xlane.xlu0 %1905
        %v1907 = vsel %vm406, %v1841, 0.0
        %1908 = vadd.xlane.f32.xlu0 %v1907
        %v1909 = vpop.xlane.xlu0 %1908
        %v1910 = vsel %vm406, %v1842, 0.0
        %1911 = vadd.xlane.f32.xlu0 %v1910
        %v1912 = vpop.xlane.xlu0 %1911
        %v1913 = vsel %vm406, %v1843, 0.0
        %1914 = vadd.xlane.f32.xlu0 %v1913
        %v1915 = vpop.xlane.xlu0 %1914
        %v1916 = vsel %vm406, %v1844, 0.0
        %1917 = vadd.xlane.f32.xlu0 %v1916
        %v1918 = vpop.xlane.xlu0 %1917
        %v1919 = vsel %vm406, %v1845, 0.0
        %1920 = vadd.xlane.f32.xlu0 %v1919
        %v1921 = vpop.xlane.xlu0 %1920
        %v1922 = vsel %vm406, %v1846, 0.0
        %1923 = vadd.xlane.f32.xlu0 %v1922
        %v1924 = vpop.xlane.xlu0 %1923
        %v1925 = vsel %vm406, %v1847, 0.0
        %1926 = vadd.xlane.f32.xlu0 %v1925
        %v1927 = vpop.xlane.xlu0 %1926
        %v1928 = vsel %vm406, %v1848, 0.0
        %1929 = vadd.xlane.f32.xlu0 %v1928
        %v1930 = vpop.xlane.xlu0 %1929
        %v1931 = vsel %vm406, %v1849, 0.0
        %1932 = vadd.xlane.f32.xlu0 %v1931
        %v1933 = vpop.xlane.xlu0 %1932
        %v1934 = vsel %vm406, %v1850, 0.0
        %1935 = vadd.xlane.f32.xlu0 %v1934
        %v1936 = vpop.xlane.xlu0 %1935
        %v1937 = vsel %vm406, %v1851, 0.0
        %1938 = vadd.xlane.f32.xlu0 %v1937
        %v1939 = vpop.xlane.xlu0 %1938
        %v1940 = vsel %vm406, %v1852, 0.0
        %1941 = vadd.xlane.f32.xlu0 %v1940
        %v1942 = vpop.xlane.xlu0 %1941
        %v1943 = vsel %vm406, %v1853, 0.0
        %1944 = vadd.xlane.f32.xlu0 %v1943
        %v1945 = vpop.xlane.xlu0 %1944
        %v1946 = vsel %vm406, %v1854, 0.0
        %1947 = vadd.xlane.f32.xlu0 %v1946
        %v1948 = vpop.xlane.xlu0 %1947
        %v1949 = vsel %vm406, %v1855, 0.0
        %1950 = vadd.xlane.f32.xlu0 %v1949
        %v1951 = vpop.xlane.xlu0 %1950
        %v1952 = vsel %vm406, %v286, 0.0
        %1953 = vadd.xlane.f32.xlu0 %v1952
        %v1954 = vpop.xlane.xlu0 %1953
        %v1955 = vsel %vm406, %v287, 0.0
        %1956 = vadd.xlane.f32.xlu0 %v1955
        %v1957 = vpop.xlane.xlu0 %1956
        %v1958 = vsel %vm406, %v288, 0.0
        %1959 = vadd.xlane.f32.xlu0 %v1958
        %v1960 = vpop.xlane.xlu0 %1959
        %v1961 = vsel %vm406, %v289, 0.0
        %1962 = vadd.xlane.f32.xlu0 %v1961
        %v1963 = vpop.xlane.xlu0 %1962
        %v1964 = vsel %vm406, %v290, 0.0
        %1965 = vadd.xlane.f32.xlu0 %v1964
        %v1966 = vpop.xlane.xlu0 %1965
        %v1967 = vsel %vm406, %v291, 0.0
        %1968 = vadd.xlane.f32.xlu0 %v1967
        %v1969 = vpop.xlane.xlu0 %1968
        %v1970 = vsel %vm406, %v292, 0.0
        %1971 = vadd.xlane.f32.xlu0 %v1970
        %v1972 = vpop.xlane.xlu0 %1971
        %v1973 = vsel %vm406, %v293, 0.0
        %1974 = vadd.xlane.f32.xlu0 %v1973
        %v1975 = vpop.xlane.xlu0 %1974
        %v1976 = vsel %vm406, %v294, 0.0
        %1977 = vadd.xlane.f32.xlu0 %v1976
        %v1978 = vpop.xlane.xlu0 %1977
        %v1979 = vsel %vm406, %v295, 0.0
        %1980 = vadd.xlane.f32.xlu0 %v1979
        %v1981 = vpop.xlane.xlu0 %1980
        %v1982 = vsel %vm406, %v296, 0.0
        %1983 = vadd.xlane.f32.xlu0 %v1982
        %v1984 = vpop.xlane.xlu0 %1983
        %v1985 = vsel %vm406, %v297, 0.0
        %1986 = vadd.xlane.f32.xlu0 %v1985
        %v1987 = vpop.xlane.xlu0 %1986
        %v1988 = vsel %vm406, %v298, 0.0
        %1989 = vadd.xlane.f32.xlu0 %v1988
        %v1990 = vpop.xlane.xlu0 %1989
        %v1991 = vsel %vm406, %v299, 0.0
        %1992 = vadd.xlane.f32.xlu0 %v1991
        %v1993 = vpop.xlane.xlu0 %1992
        %v1994 = vsel %vm406, %v300, 0.0
        %1995 = vadd.xlane.f32.xlu0 %v1994
        %v1996 = vpop.xlane.xlu0 %1995
        %v1997 = vsel %vm406, %v301, 0.0
        %1998 = vadd.xlane.f32.xlu0 %v1997
        %v1999 = vpop.xlane.xlu0 %1998
        %v2000 = vsel %vm406, %v302, 0.0
        %2001 = vadd.xlane.f32.xlu0 %v2000
        %v2002 = vpop.xlane.xlu0 %2001
        %v2003 = vsel %vm406, %v303, 0.0
        %2004 = vadd.xlane.f32.xlu0 %v2003
        %v2005 = vpop.xlane.xlu0 %2004
        %v2006 = vsel %vm406, %v304, 0.0
        %2007 = vadd.xlane.f32.xlu0 %v2006
        %v2008 = vpop.xlane.xlu0 %2007
        %v2009 = vsel %vm406, %v305, 0.0
        %2010 = vadd.xlane.f32.xlu0 %v2009
        %v2011 = vpop.xlane.xlu0 %2010
        %v2012 = vsel %vm406, %v306, 0.0
        %2013 = vadd.xlane.f32.xlu0 %v2012
        %v2014 = vpop.xlane.xlu0 %2013
        %v2015 = vsel %vm406, %v307, 0.0
        %2016 = vadd.xlane.f32.xlu0 %v2015
        %v2017 = vpop.xlane.xlu0 %2016
        %v2018 = vsel %vm406, %v308, 0.0
        %2019 = vadd.xlane.f32.xlu0 %v2018
        %v2020 = vpop.xlane.xlu0 %2019
        %v2021 = vsel %vm406, %v309, 0.0
        %2022 = vadd.xlane.f32.xlu0 %v2021
        %v2023 = vpop.xlane.xlu0 %2022
        %v2024 = vsel %vm406, %v310, 0.0
        %2025 = vadd.xlane.f32.xlu0 %v2024
        %v2026 = vpop.xlane.xlu0 %2025
        %v2027 = vsel %vm406, %v311, 0.0
        %2028 = vadd.xlane.f32.xlu0 %v2027
        %v2029 = vpop.xlane.xlu0 %2028
        %v2030 = vsel %vm406, %v312, 0.0
        %2031 = vadd.xlane.f32.xlu0 %v2030
        %v2032 = vpop.xlane.xlu0 %2031
        %v2033 = vsel %vm406, %v313, 0.0
        %2034 = vadd.xlane.f32.xlu0 %v2033
        %v2035 = vpop.xlane.xlu0 %2034
        %v2036 = vsel %vm406, %v314, 0.0
        %2037 = vadd.xlane.f32.xlu0 %v2036
        %v2038 = vpop.xlane.xlu0 %2037
        %v2039 = vsel %vm406, %v315, 0.0
        %2040 = vadd.xlane.f32.xlu0 %v2039
        %v2041 = vpop.xlane.xlu0 %2040
        %v2042 = vsel %vm406, %v316, 0.0
        %2043 = vadd.xlane.f32.xlu0 %v2042
        %v2044 = vpop.xlane.xlu0 %2043
        %v2045 = vsel %vm406, %v317, 0.0
        %2046 = vadd.xlane.f32.xlu0 %v2045
        %v2047 = vpop.xlane.xlu0 %2046
        %v2048 = vsub.f32 %v1954, %v1858
        %v2049 = vsub.f32 %v1957, %v1861
        %v2050 = vsub.f32 %v1960, %v1864
        %v2051 = vsub.f32 %v1963, %v1867
        %v2052 = vsub.f32 %v1966, %v1870
        %v2053 = vsub.f32 %v1969, %v1873
        %v2054 = vsub.f32 %v1972, %v1876
        %v2055 = vsub.f32 %v1975, %v1879
        %v2056 = vsub.f32 %v1978, %v1882
        %v2057 = vsub.f32 %v1981, %v1885
        %v2058 = vsub.f32 %v1984, %v1888
        %v2059 = vsub.f32 %v1987, %v1891
        %v2060 = vsub.f32 %v1990, %v1894
        %v2061 = vsub.f32 %v1993, %v1897
        %v2062 = vsub.f32 %v1996, %v1900
        %v2063 = vsub.f32 %v1999, %v1903
        %v2064 = vsub.f32 %v2002, %v1906
        %v2065 = vsub.f32 %v2005, %v1909
        %v2066 = vsub.f32 %v2008, %v1912
        %v2067 = vsub.f32 %v2011, %v1915
        %v2068 = vsub.f32 %v2014, %v1918
        %v2069 = vsub.f32 %v2017, %v1921
        %v2070 = vsub.f32 %v2020, %v1924
        %v2071 = vsub.f32 %v2023, %v1927
        %v2072 = vsub.f32 %v2026, %v1930
        %v2073 = vsub.f32 %v2029, %v1933
        %v2074 = vsub.f32 %v2032, %v1936
        %v2075 = vsub.f32 %v2035, %v1939
        %v2076 = vsub.f32 %v2038, %v1942
        %v2077 = vsub.f32 %v2041, %v1945
        %v2078 = vsub.f32 %v2044, %v1948
        %v2079 = vsub.f32 %v2047, %v1951
        %vm2080 = vcmp.eq.f32.partialorder %v1858, 3.0
        %vm2081 = vcmp.eq.f32.partialorder %v1861, 3.0
        %vm2082 = vcmp.eq.f32.partialorder %v1864, 3.0
        %vm2083 = vcmp.eq.f32.partialorder %v1867, 3.0
        %vm2084 = vcmp.eq.f32.partialorder %v1870, 3.0
        %vm2085 = vcmp.eq.f32.partialorder %v1873, 3.0
        %vm2086 = vcmp.eq.f32.partialorder %v1876, 3.0
        %vm2087 = vcmp.eq.f32.partialorder %v1879, 3.0
        %vm2088 = vcmp.eq.f32.partialorder %v1882, 3.0
        %vm2089 = vcmp.eq.f32.partialorder %v1885, 3.0
        %vm2090 = vcmp.eq.f32.partialorder %v1888, 3.0
        %vm2091 = vcmp.eq.f32.partialorder %v1891, 3.0
        %vm2092 = vcmp.eq.f32.partialorder %v1894, 3.0
        %vm2093 = vcmp.eq.f32.partialorder %v1897, 3.0
        %vm2094 = vcmp.eq.f32.partialorder %v1900, 3.0
        %vm2095 = vcmp.eq.f32.partialorder %v1903, 3.0
        %vm2096 = vcmp.eq.f32.partialorder %v1906, 3.0
        %vm2097 = vcmp.eq.f32.partialorder %v1909, 3.0
        %vm2098 = vcmp.eq.f32.partialorder %v1912, 3.0
        %vm2099 = vcmp.eq.f32.partialorder %v1915, 3.0
        %vm2100 = vcmp.eq.f32.partialorder %v1918, 3.0
        %vm2101 = vcmp.eq.f32.partialorder %v1921, 3.0
        %vm2102 = vcmp.eq.f32.partialorder %v1924, 3.0
        %vm2103 = vcmp.eq.f32.partialorder %v1927, 3.0
        %vm2104 = vcmp.eq.f32.partialorder %v1930, 3.0
        %vm2105 = vcmp.eq.f32.partialorder %v1933, 3.0
        %vm2106 = vcmp.eq.f32.partialorder %v1936, 3.0
        %vm2107 = vcmp.eq.f32.partialorder %v1939, 3.0
        %vm2108 = vcmp.eq.f32.partialorder %v1942, 3.0
        %vm2109 = vcmp.eq.f32.partialorder %v1945, 3.0
        %vm2110 = vcmp.eq.f32.partialorder %v1948, 3.0
        %vm2111 = vcmp.eq.f32.partialorder %v1951, 3.0
        %vm2112 = vcmp.eq.f32.partialorder %v2048, 2.0
        %vm2113 = vcmp.eq.f32.partialorder %v2049, 2.0
        %vm2114 = vcmp.eq.f32.partialorder %v2050, 2.0
        %vm2115 = vcmp.eq.f32.partialorder %v2051, 2.0
        %vm2116 = vcmp.eq.f32.partialorder %v2052, 2.0
        %vm2117 = vcmp.eq.f32.partialorder %v2053, 2.0
        %vm2118 = vcmp.eq.f32.partialorder %v2054, 2.0
        %vm2119 = vcmp.eq.f32.partialorder %v2055, 2.0
        %vm2120 = vcmp.eq.f32.partialorder %v2056, 2.0
        %vm2121 = vcmp.eq.f32.partialorder %v2057, 2.0
        %vm2122 = vcmp.eq.f32.partialorder %v2058, 2.0
        %vm2123 = vcmp.eq.f32.partialorder %v2059, 2.0
        %vm2124 = vcmp.eq.f32.partialorder %v2060, 2.0
        %vm2125 = vcmp.eq.f32.partialorder %v2061, 2.0
        %vm2126 = vcmp.eq.f32.partialorder %v2062, 2.0
        %vm2127 = vcmp.eq.f32.partialorder %v2063, 2.0
        %vm2128 = vcmp.eq.f32.partialorder %v2064, 2.0
        %vm2129 = vcmp.eq.f32.partialorder %v2065, 2.0
        %vm2130 = vcmp.eq.f32.partialorder %v2066, 2.0
        %vm2131 = vcmp.eq.f32.partialorder %v2067, 2.0
        %vm2132 = vcmp.eq.f32.partialorder %v2068, 2.0
        %vm2133 = vcmp.eq.f32.partialorder %v2069, 2.0
        %vm2134 = vcmp.eq.f32.partialorder %v2070, 2.0
        %vm2135 = vcmp.eq.f32.partialorder %v2071, 2.0
        %vm2136 = vcmp.eq.f32.partialorder %v2072, 2.0
        %vm2137 = vcmp.eq.f32.partialorder %v2073, 2.0
        %vm2138 = vcmp.eq.f32.partialorder %v2074, 2.0
        %vm2139 = vcmp.eq.f32.partialorder %v2075, 2.0
        %vm2140 = vcmp.eq.f32.partialorder %v2076, 2.0
        %vm2141 = vcmp.eq.f32.partialorder %v2077, 2.0
        %vm2142 = vcmp.eq.f32.partialorder %v2078, 2.0
        %vm2143 = vcmp.eq.f32.partialorder %v2079, 2.0
        %vm2144 = vmand %vm2080, %vm2112
        %vm2145 = vmand %vm2081, %vm2113
        %vm2146 = vmand %vm2082, %vm2114
        %vm2147 = vmand %vm2083, %vm2115
        %vm2148 = vmand %vm2084, %vm2116
        %vm2149 = vmand %vm2085, %vm2117
        %vm2150 = vmand %vm2086, %vm2118
        %vm2151 = vmand %vm2087, %vm2119
        %vm2152 = vmand %vm2088, %vm2120
        %vm2153 = vmand %vm2089, %vm2121
        %vm2154 = vmand %vm2090, %vm2122
        %vm2155 = vmand %vm2091, %vm2123
        %vm2156 = vmand %vm2092, %vm2124
        %vm2157 = vmand %vm2093, %vm2125
        %vm2158 = vmand %vm2094, %vm2126
        %vm2159 = vmand %vm2095, %vm2127
        %vm2160 = vmand %vm2096, %vm2128
        %vm2161 = vmand %vm2097, %vm2129
        %vm2162 = vmand %vm2098, %vm2130
        %vm2163 = vmand %vm2099, %vm2131
        %vm2164 = vmand %vm2100, %vm2132
        %vm2165 = vmand %vm2101, %vm2133
        %vm2166 = vmand %vm2102, %vm2134
        %vm2167 = vmand %vm2103, %vm2135
        %vm2168 = vmand %vm2104, %vm2136
        %vm2169 = vmand %vm2105, %vm2137
        %vm2170 = vmand %vm2106, %vm2138
        %vm2171 = vmand %vm2107, %vm2139
        %vm2172 = vmand %vm2108, %vm2140
        %vm2173 = vmand %vm2109, %vm2141
        %vm2174 = vmand %vm2110, %vm2142
        %vm2175 = vmand %vm2111, %vm2143
        %v2176 = vsel %vm2144, 1, 0
        %v2177 = vsel %vm2145, 1, 0
        %v2178 = vsel %vm2146, 1, 0
        %v2179 = vsel %vm2147, 1, 0
        %v2180 = vsel %vm2148, 1, 0
        %v2181 = vsel %vm2149, 1, 0
        %v2182 = vsel %vm2150, 1, 0
        %v2183 = vsel %vm2151, 1, 0
        %v2184 = vsel %vm2152, 1, 0
        %v2185 = vsel %vm2153, 1, 0
        %v2186 = vsel %vm2154, 1, 0
        %v2187 = vsel %vm2155, 1, 0
        %v2188 = vsel %vm2156, 1, 0
        %v2189 = vsel %vm2157, 1, 0
        %v2190 = vsel %vm2158, 1, 0
        %v2191 = vsel %vm2159, 1, 0
        %v2192 = vsel %vm2160, 1, 0
        %v2193 = vsel %vm2161, 1, 0
        %v2194 = vsel %vm2162, 1, 0
        %v2195 = vsel %vm2163, 1, 0
        %v2196 = vsel %vm2164, 1, 0
        %v2197 = vsel %vm2165, 1, 0
        %v2198 = vsel %vm2166, 1, 0
        %v2199 = vsel %vm2167, 1, 0
        %v2200 = vsel %vm2168, 1, 0
        %v2201 = vsel %vm2169, 1, 0
        %v2202 = vsel %vm2170, 1, 0
        %v2203 = vsel %vm2171, 1, 0
        %v2204 = vsel %vm2172, 1, 0
        %v2205 = vsel %vm2173, 1, 0
        %v2206 = vsel %vm2174, 1, 0
        %v2207 = vsel %vm2175, 1, 0
        %v2208 = vcvt.s32.f32 %v2176
        %v2209 = vcvt.s32.f32 %v2177
        %v2210 = vcvt.s32.f32 %v2178
        %v2211 = vcvt.s32.f32 %v2179
        %v2212 = vcvt.s32.f32 %v2180
        %v2213 = vcvt.s32.f32 %v2181
        %v2214 = vcvt.s32.f32 %v2182
        %v2215 = vcvt.s32.f32 %v2183
        %v2216 = vcvt.s32.f32 %v2184
        %v2217 = vcvt.s32.f32 %v2185
        %v2218 = vcvt.s32.f32 %v2186
        %v2219 = vcvt.s32.f32 %v2187
        %v2220 = vcvt.s32.f32 %v2188
        %v2221 = vcvt.s32.f32 %v2189
        %v2222 = vcvt.s32.f32 %v2190
        %v2223 = vcvt.s32.f32 %v2191
        %v2224 = vcvt.s32.f32 %v2192
        %v2225 = vcvt.s32.f32 %v2193
        %v2226 = vcvt.s32.f32 %v2194
        %v2227 = vcvt.s32.f32 %v2195
        %v2228 = vcvt.s32.f32 %v2196
        %v2229 = vcvt.s32.f32 %v2197
        %v2230 = vcvt.s32.f32 %v2198
        %v2231 = vcvt.s32.f32 %v2199
        %v2232 = vcvt.s32.f32 %v2200
        %v2233 = vcvt.s32.f32 %v2201
        %v2234 = vcvt.s32.f32 %v2202
        %v2235 = vcvt.s32.f32 %v2203
        %v2236 = vcvt.s32.f32 %v2204
        %v2237 = vcvt.s32.f32 %v2205
        %v2238 = vcvt.s32.f32 %v2206
        %v2239 = vcvt.s32.f32 %v2207
        %v2240 = vmul.f32 %v1585, %v2208
        %v2241 = vmul.f32 %v1588, %v2209
        %v2242 = vmul.f32 %v1591, %v2210
        %v2243 = vmul.f32 %v1594, %v2211
        %v2244 = vmul.f32 %v1597, %v2212
        %v2245 = vmul.f32 %v1600, %v2213
        %v2246 = vmul.f32 %v1603, %v2214
        %v2247 = vmul.f32 %v1606, %v2215
        %v2248 = vmul.f32 %v1609, %v2216
        %v2249 = vmul.f32 %v1612, %v2217
        %v2250 = vmul.f32 %v1615, %v2218
        %v2251 = vmul.f32 %v1618, %v2219
        %v2252 = vmul.f32 %v1621, %v2220
        %v2253 = vmul.f32 %v1624, %v2221
        %v2254 = vmul.f32 %v1627, %v2222
        %v2255 = vmul.f32 %v1630, %v2223
        %v2256 = vmul.f32 %v1633, %v2224
        %v2257 = vmul.f32 %v1636, %v2225
        %v2258 = vmul.f32 %v1639, %v2226
        %v2259 = vmul.f32 %v1642, %v2227
        %v2260 = vmul.f32 %v1645, %v2228
        %v2261 = vmul.f32 %v1648, %v2229
        %v2262 = vmul.f32 %v1651, %v2230
        %v2263 = vmul.f32 %v1654, %v2231
        %v2264 = vmul.f32 %v1657, %v2232
        %v2265 = vmul.f32 %v1660, %v2233
        %v2266 = vmul.f32 %v1663, %v2234
        %v2267 = vmul.f32 %v1666, %v2235
        %v2268 = vmul.f32 %v1669, %v2236
        %v2269 = vmul.f32 %v1672, %v2237
        %v2270 = vmul.f32 %v1675, %v2238
        %v2271 = vmul.f32 %v1678, %v2239
        %v2272 = vmul.f32 %v2240, 28.0
        %v2273 = vmul.f32 %v2241, 28.0
        %v2274 = vmul.f32 %v2242, 28.0
        %v2275 = vmul.f32 %v2243, 28.0
        %v2276 = vmul.f32 %v2244, 28.0
        %v2277 = vmul.f32 %v2245, 28.0
        %v2278 = vmul.f32 %v2246, 28.0
        %v2279 = vmul.f32 %v2247, 28.0
        %v2280 = vmul.f32 %v2248, 28.0
        %v2281 = vmul.f32 %v2249, 28.0
        %v2282 = vmul.f32 %v2250, 28.0
        %v2283 = vmul.f32 %v2251, 28.0
        %v2284 = vmul.f32 %v2252, 28.0
        %v2285 = vmul.f32 %v2253, 28.0
        %v2286 = vmul.f32 %v2254, 28.0
        %v2287 = vmul.f32 %v2255, 28.0
        %v2288 = vmul.f32 %v2256, 28.0
        %v2289 = vmul.f32 %v2257, 28.0
        %v2290 = vmul.f32 %v2258, 28.0
        %v2291 = vmul.f32 %v2259, 28.0
        %v2292 = vmul.f32 %v2260, 28.0
        %v2293 = vmul.f32 %v2261, 28.0
        %v2294 = vmul.f32 %v2262, 28.0
        %v2295 = vmul.f32 %v2263, 28.0
        %v2296 = vmul.f32 %v2264, 28.0
        %v2297 = vmul.f32 %v2265, 28.0
        %v2298 = vmul.f32 %v2266, 28.0
        %v2299 = vmul.f32 %v2267, 28.0
        %v2300 = vmul.f32 %v2268, 28.0
        %v2301 = vmul.f32 %v2269, 28.0
        %v2302 = vmul.f32 %v2270, 28.0
        %v2303 = vmul.f32 %v2271, 28.0
        %v2304 = vmul.f32 %v1713, %v2208
        %v2305 = vmul.f32 %v1716, %v2209
        %v2306 = vmul.f32 %v1719, %v2210
        %v2307 = vmul.f32 %v1722, %v2211
        %v2308 = vmul.f32 %v1725, %v2212
        %v2309 = vmul.f32 %v1728, %v2213
        %v2310 = vmul.f32 %v1731, %v2214
        %v2311 = vmul.f32 %v1734, %v2215
        %v2312 = vmul.f32 %v1737, %v2216
        %v2313 = vmul.f32 %v1740, %v2217
        %v2314 = vmul.f32 %v1743, %v2218
        %v2315 = vmul.f32 %v1746, %v2219
        %v2316 = vmul.f32 %v1749, %v2220
        %v2317 = vmul.f32 %v1752, %v2221
        %v2318 = vmul.f32 %v1755, %v2222
        %v2319 = vmul.f32 %v1758, %v2223
        %v2320 = vmul.f32 %v1761, %v2224
        %v2321 = vmul.f32 %v1764, %v2225
        %v2322 = vmul.f32 %v1767, %v2226
        %v2323 = vmul.f32 %v1770, %v2227
        %v2324 = vmul.f32 %v1773, %v2228
        %v2325 = vmul.f32 %v1776, %v2229
        %v2326 = vmul.f32 %v1779, %v2230
        %v2327 = vmul.f32 %v1782, %v2231
        %v2328 = vmul.f32 %v1785, %v2232
        %v2329 = vmul.f32 %v1788, %v2233
        %v2330 = vmul.f32 %v1791, %v2234
        %v2331 = vmul.f32 %v1794, %v2235
        %v2332 = vmul.f32 %v1797, %v2236
        %v2333 = vmul.f32 %v1800, %v2237
        %v2334 = vmul.f32 %v1803, %v2238
        %v2335 = vmul.f32 %v1806, %v2239
        %v2336 = vadd.f32 %v2272, %v2304
        %v2337 = vadd.f32 %v2273, %v2305
        %v2338 = vadd.f32 %v2274, %v2306
        %v2339 = vadd.f32 %v2275, %v2307
        %v2340 = vadd.f32 %v2276, %v2308
        %v2341 = vadd.f32 %v2277, %v2309
        %v2342 = vadd.f32 %v2278, %v2310
        %v2343 = vadd.f32 %v2279, %v2311
        %v2344 = vadd.f32 %v2280, %v2312
        %v2345 = vadd.f32 %v2281, %v2313
        %v2346 = vadd.f32 %v2282, %v2314
        %v2347 = vadd.f32 %v2283, %v2315
        %v2348 = vadd.f32 %v2284, %v2316
        %v2349 = vadd.f32 %v2285, %v2317
        %v2350 = vadd.f32 %v2286, %v2318
        %v2351 = vadd.f32 %v2287, %v2319
        %v2352 = vadd.f32 %v2288, %v2320
        %v2353 = vadd.f32 %v2289, %v2321
        %v2354 = vadd.f32 %v2290, %v2322
        %v2355 = vadd.f32 %v2291, %v2323
        %v2356 = vadd.f32 %v2292, %v2324
        %v2357 = vadd.f32 %v2293, %v2325
        %v2358 = vadd.f32 %v2294, %v2326
        %v2359 = vadd.f32 %v2295, %v2327
        %v2360 = vadd.f32 %v2296, %v2328
        %v2361 = vadd.f32 %v2297, %v2329
        %v2362 = vadd.f32 %v2298, %v2330
        %v2363 = vadd.f32 %v2299, %v2331
        %v2364 = vadd.f32 %v2300, %v2332
        %v2365 = vadd.f32 %v2301, %v2333
        %v2366 = vadd.f32 %v2302, %v2334
        %v2367 = vadd.f32 %v2303, %v2335
        %v2368 = vcvt.f32.s32.to.zero.pseudo %v2336
        %v2369 = vcvt.f32.s32.to.zero.pseudo %v2337
        %v2370 = vcvt.f32.s32.to.zero.pseudo %v2338
        %v2371 = vcvt.f32.s32.to.zero.pseudo %v2339
        %v2372 = vcvt.f32.s32.to.zero.pseudo %v2340
        %v2373 = vcvt.f32.s32.to.zero.pseudo %v2341
        %v2374 = vcvt.f32.s32.to.zero.pseudo %v2342
        %v2375 = vcvt.f32.s32.to.zero.pseudo %v2343
        %v2376 = vcvt.f32.s32.to.zero.pseudo %v2344
        %v2377 = vcvt.f32.s32.to.zero.pseudo %v2345
        %v2378 = vcvt.f32.s32.to.zero.pseudo %v2346
        %v2379 = vcvt.f32.s32.to.zero.pseudo %v2347
        %v2380 = vcvt.f32.s32.to.zero.pseudo %v2348
        %v2381 = vcvt.f32.s32.to.zero.pseudo %v2349
        %v2382 = vcvt.f32.s32.to.zero.pseudo %v2350
        %v2383 = vcvt.f32.s32.to.zero.pseudo %v2351
        %v2384 = vcvt.f32.s32.to.zero.pseudo %v2352
        %v2385 = vcvt.f32.s32.to.zero.pseudo %v2353
        %v2386 = vcvt.f32.s32.to.zero.pseudo %v2354
        %v2387 = vcvt.f32.s32.to.zero.pseudo %v2355
        %v2388 = vcvt.f32.s32.to.zero.pseudo %v2356
        %v2389 = vcvt.f32.s32.to.zero.pseudo %v2357
        %v2390 = vcvt.f32.s32.to.zero.pseudo %v2358
        %v2391 = vcvt.f32.s32.to.zero.pseudo %v2359
        %v2392 = vcvt.f32.s32.to.zero.pseudo %v2360
        %v2393 = vcvt.f32.s32.to.zero.pseudo %v2361
        %v2394 = vcvt.f32.s32.to.zero.pseudo %v2362
        %v2395 = vcvt.f32.s32.to.zero.pseudo %v2363
        %v2396 = vcvt.f32.s32.to.zero.pseudo %v2364
        %v2397 = vcvt.f32.s32.to.zero.pseudo %v2365
        %v2398 = vcvt.f32.s32.to.zero.pseudo %v2366
        %v2399 = vcvt.f32.s32.to.zero.pseudo %v2367
        %v2400 = vadd.s32 %v1808, 128
        %v2401 = vadd.s32 %v1808, 256
        %v2402 = vadd.s32 %v1808, 384
        %v2403 = vadd.s32 %v1808, 512
        %v2404 = vadd.s32 %v1808, 640
        %v2405 = vadd.s32 %v1808, 768
        %v2406 = vadd.s32 %v1808, 896
        %v2407 = vadd.s32 %v1808, 1024
        %v2408 = vadd.s32 %v1808, 1152
        %v2409 = vadd.s32 %v1808, 1280
        %v2410 = vadd.s32 %v1808, 1408
        %v2411 = vadd.s32 %v1808, 1536
        %vm2412 = vcmp.eq.s32.totalorder %v1808, %v2368
        %vm2413 = vcmp.eq.s32.totalorder %v2400, %v2368
        %vm2414 = vcmp.eq.s32.totalorder %v2401, %v2368
        %vm2415 = vcmp.eq.s32.totalorder %v2402, %v2368
        %vm2416 = vcmp.eq.s32.totalorder %v2403, %v2368
        %vm2417 = vcmp.eq.s32.totalorder %v2404, %v2368
        %vm2418 = vcmp.eq.s32.totalorder %v2405, %v2368
        %vm2419 = vcmp.eq.s32.totalorder %v2406, %v2368
        %vm2420 = vcmp.eq.s32.totalorder %v2407, %v2368
        %vm2421 = vcmp.eq.s32.totalorder %v2408, %v2368
        %vm2422 = vcmp.eq.s32.totalorder %v2409, %v2368
        %vm2423 = vcmp.eq.s32.totalorder %v2410, %v2368
        %vm2424 = vcmp.eq.s32.totalorder %v2411, %v2368
        %vm2425 = vcmp.eq.s32.totalorder %v1808, %v2369
        %vm2426 = vcmp.eq.s32.totalorder %v2400, %v2369
        %vm2427 = vcmp.eq.s32.totalorder %v2401, %v2369
        %vm2428 = vcmp.eq.s32.totalorder %v2402, %v2369
        %vm2429 = vcmp.eq.s32.totalorder %v2403, %v2369
        %vm2430 = vcmp.eq.s32.totalorder %v2404, %v2369
        %vm2431 = vcmp.eq.s32.totalorder %v2405, %v2369
        %vm2432 = vcmp.eq.s32.totalorder %v2406, %v2369
        %vm2433 = vcmp.eq.s32.totalorder %v2407, %v2369
        %vm2434 = vcmp.eq.s32.totalorder %v2408, %v2369
        %vm2435 = vcmp.eq.s32.totalorder %v2409, %v2369
        %vm2436 = vcmp.eq.s32.totalorder %v2410, %v2369
        %vm2437 = vcmp.eq.s32.totalorder %v2411, %v2369
        %vm2438 = vcmp.eq.s32.totalorder %v1808, %v2370
        %vm2439 = vcmp.eq.s32.totalorder %v2400, %v2370
        %vm2440 = vcmp.eq.s32.totalorder %v2401, %v2370
        %vm2441 = vcmp.eq.s32.totalorder %v2402, %v2370
        %vm2442 = vcmp.eq.s32.totalorder %v2403, %v2370
        %vm2443 = vcmp.eq.s32.totalorder %v2404, %v2370
        %vm2444 = vcmp.eq.s32.totalorder %v2405, %v2370
        %vm2445 = vcmp.eq.s32.totalorder %v2406, %v2370
        %vm2446 = vcmp.eq.s32.totalorder %v2407, %v2370
        %vm2447 = vcmp.eq.s32.totalorder %v2408, %v2370
        %vm2448 = vcmp.eq.s32.totalorder %v2409, %v2370
        %vm2449 = vcmp.eq.s32.totalorder %v2410, %v2370
        %vm2450 = vcmp.eq.s32.totalorder %v2411, %v2370
        %vm2451 = vcmp.eq.s32.totalorder %v1808, %v2371
        %vm2452 = vcmp.eq.s32.totalorder %v2400, %v2371
        %vm2453 = vcmp.eq.s32.totalorder %v2401, %v2371
        %vm2454 = vcmp.eq.s32.totalorder %v2402, %v2371
        %vm2455 = vcmp.eq.s32.totalorder %v2403, %v2371
        %vm2456 = vcmp.eq.s32.totalorder %v2404, %v2371
        %vm2457 = vcmp.eq.s32.totalorder %v2405, %v2371
        %vm2458 = vcmp.eq.s32.totalorder %v2406, %v2371
        %vm2459 = vcmp.eq.s32.totalorder %v2407, %v2371
        %vm2460 = vcmp.eq.s32.totalorder %v2408, %v2371
        %vm2461 = vcmp.eq.s32.totalorder %v2409, %v2371
        %vm2462 = vcmp.eq.s32.totalorder %v2410, %v2371
        %vm2463 = vcmp.eq.s32.totalorder %v2411, %v2371
        %vm2464 = vcmp.eq.s32.totalorder %v1808, %v2372
        %vm2465 = vcmp.eq.s32.totalorder %v2400, %v2372
        %vm2466 = vcmp.eq.s32.totalorder %v2401, %v2372
        %vm2467 = vcmp.eq.s32.totalorder %v2402, %v2372
        %vm2468 = vcmp.eq.s32.totalorder %v2403, %v2372
        %vm2469 = vcmp.eq.s32.totalorder %v2404, %v2372
        %vm2470 = vcmp.eq.s32.totalorder %v2405, %v2372
        %vm2471 = vcmp.eq.s32.totalorder %v2406, %v2372
        %vm2472 = vcmp.eq.s32.totalorder %v2407, %v2372
        %vm2473 = vcmp.eq.s32.totalorder %v2408, %v2372
        %vm2474 = vcmp.eq.s32.totalorder %v2409, %v2372
        %vm2475 = vcmp.eq.s32.totalorder %v2410, %v2372
        %vm2476 = vcmp.eq.s32.totalorder %v2411, %v2372
        %vm2477 = vcmp.eq.s32.totalorder %v1808, %v2373
        %vm2478 = vcmp.eq.s32.totalorder %v2400, %v2373
        %vm2479 = vcmp.eq.s32.totalorder %v2401, %v2373
        %vm2480 = vcmp.eq.s32.totalorder %v2402, %v2373
        %vm2481 = vcmp.eq.s32.totalorder %v2403, %v2373
        %vm2482 = vcmp.eq.s32.totalorder %v2404, %v2373
        %vm2483 = vcmp.eq.s32.totalorder %v2405, %v2373
        %vm2484 = vcmp.eq.s32.totalorder %v2406, %v2373
        %vm2485 = vcmp.eq.s32.totalorder %v2407, %v2373
        %vm2486 = vcmp.eq.s32.totalorder %v2408, %v2373
        %vm2487 = vcmp.eq.s32.totalorder %v2409, %v2373
        %vm2488 = vcmp.eq.s32.totalorder %v2410, %v2373
        %vm2489 = vcmp.eq.s32.totalorder %v2411, %v2373
        %vm2490 = vcmp.eq.s32.totalorder %v1808, %v2374
        %vm2491 = vcmp.eq.s32.totalorder %v2400, %v2374
        %vm2492 = vcmp.eq.s32.totalorder %v2401, %v2374
        %vm2493 = vcmp.eq.s32.totalorder %v2402, %v2374
        %vm2494 = vcmp.eq.s32.totalorder %v2403, %v2374
        %vm2495 = vcmp.eq.s32.totalorder %v2404, %v2374
        %vm2496 = vcmp.eq.s32.totalorder %v2405, %v2374
        %vm2497 = vcmp.eq.s32.totalorder %v2406, %v2374
        %vm2498 = vcmp.eq.s32.totalorder %v2407, %v2374
        %vm2499 = vcmp.eq.s32.totalorder %v2408, %v2374
        %vm2500 = vcmp.eq.s32.totalorder %v2409, %v2374
        %vm2501 = vcmp.eq.s32.totalorder %v2410, %v2374
        %vm2502 = vcmp.eq.s32.totalorder %v2411, %v2374
        %vm2503 = vcmp.eq.s32.totalorder %v1808, %v2375
        %vm2504 = vcmp.eq.s32.totalorder %v2400, %v2375
        %vm2505 = vcmp.eq.s32.totalorder %v2401, %v2375
        %vm2506 = vcmp.eq.s32.totalorder %v2402, %v2375
        %vm2507 = vcmp.eq.s32.totalorder %v2403, %v2375
        %vm2508 = vcmp.eq.s32.totalorder %v2404, %v2375
        %vm2509 = vcmp.eq.s32.totalorder %v2405, %v2375
        %vm2510 = vcmp.eq.s32.totalorder %v2406, %v2375
        %vm2511 = vcmp.eq.s32.totalorder %v2407, %v2375
        %vm2512 = vcmp.eq.s32.totalorder %v2408, %v2375
        %vm2513 = vcmp.eq.s32.totalorder %v2409, %v2375
        %vm2514 = vcmp.eq.s32.totalorder %v2410, %v2375
        %vm2515 = vcmp.eq.s32.totalorder %v2411, %v2375
        %vm2516 = vcmp.eq.s32.totalorder %v1808, %v2376
        %vm2517 = vcmp.eq.s32.totalorder %v2400, %v2376
        %vm2518 = vcmp.eq.s32.totalorder %v2401, %v2376
        %vm2519 = vcmp.eq.s32.totalorder %v2402, %v2376
        %vm2520 = vcmp.eq.s32.totalorder %v2403, %v2376
        %vm2521 = vcmp.eq.s32.totalorder %v2404, %v2376
        %vm2522 = vcmp.eq.s32.totalorder %v2405, %v2376
        %vm2523 = vcmp.eq.s32.totalorder %v2406, %v2376
        %vm2524 = vcmp.eq.s32.totalorder %v2407, %v2376
        %vm2525 = vcmp.eq.s32.totalorder %v2408, %v2376
        %vm2526 = vcmp.eq.s32.totalorder %v2409, %v2376
        %vm2527 = vcmp.eq.s32.totalorder %v2410, %v2376
        %vm2528 = vcmp.eq.s32.totalorder %v2411, %v2376
        %vm2529 = vcmp.eq.s32.totalorder %v1808, %v2377
        %vm2530 = vcmp.eq.s32.totalorder %v2400, %v2377
        %vm2531 = vcmp.eq.s32.totalorder %v2401, %v2377
        %vm2532 = vcmp.eq.s32.totalorder %v2402, %v2377
        %vm2533 = vcmp.eq.s32.totalorder %v2403, %v2377
        %vm2534 = vcmp.eq.s32.totalorder %v2404, %v2377
        %vm2535 = vcmp.eq.s32.totalorder %v2405, %v2377
        %vm2536 = vcmp.eq.s32.totalorder %v2406, %v2377
        %vm2537 = vcmp.eq.s32.totalorder %v2407, %v2377
        %vm2538 = vcmp.eq.s32.totalorder %v2408, %v2377
        %vm2539 = vcmp.eq.s32.totalorder %v2409, %v2377
        %vm2540 = vcmp.eq.s32.totalorder %v2410, %v2377
        %vm2541 = vcmp.eq.s32.totalorder %v2411, %v2377
        %vm2542 = vcmp.eq.s32.totalorder %v1808, %v2378
        %vm2543 = vcmp.eq.s32.totalorder %v2400, %v2378
        %vm2544 = vcmp.eq.s32.totalorder %v2401, %v2378
        %vm2545 = vcmp.eq.s32.totalorder %v2402, %v2378
        %vm2546 = vcmp.eq.s32.totalorder %v2403, %v2378
        %vm2547 = vcmp.eq.s32.totalorder %v2404, %v2378
        %vm2548 = vcmp.eq.s32.totalorder %v2405, %v2378
        %vm2549 = vcmp.eq.s32.totalorder %v2406, %v2378
        %vm2550 = vcmp.eq.s32.totalorder %v2407, %v2378
        %vm2551 = vcmp.eq.s32.totalorder %v2408, %v2378
        %vm2552 = vcmp.eq.s32.totalorder %v2409, %v2378
        %vm2553 = vcmp.eq.s32.totalorder %v2410, %v2378
        %vm2554 = vcmp.eq.s32.totalorder %v2411, %v2378
        %vm2555 = vcmp.eq.s32.totalorder %v1808, %v2379
        %vm2556 = vcmp.eq.s32.totalorder %v2400, %v2379
        %vm2557 = vcmp.eq.s32.totalorder %v2401, %v2379
        %vm2558 = vcmp.eq.s32.totalorder %v2402, %v2379
        %vm2559 = vcmp.eq.s32.totalorder %v2403, %v2379
        %vm2560 = vcmp.eq.s32.totalorder %v2404, %v2379
        %vm2561 = vcmp.eq.s32.totalorder %v2405, %v2379
        %vm2562 = vcmp.eq.s32.totalorder %v2406, %v2379
        %vm2563 = vcmp.eq.s32.totalorder %v2407, %v2379
        %vm2564 = vcmp.eq.s32.totalorder %v2408, %v2379
        %vm2565 = vcmp.eq.s32.totalorder %v2409, %v2379
        %vm2566 = vcmp.eq.s32.totalorder %v2410, %v2379
        %vm2567 = vcmp.eq.s32.totalorder %v2411, %v2379
        %vm2568 = vcmp.eq.s32.totalorder %v1808, %v2380
        %vm2569 = vcmp.eq.s32.totalorder %v2400, %v2380
        %vm2570 = vcmp.eq.s32.totalorder %v2401, %v2380
        %vm2571 = vcmp.eq.s32.totalorder %v2402, %v2380
        %vm2572 = vcmp.eq.s32.totalorder %v2403, %v2380
        %vm2573 = vcmp.eq.s32.totalorder %v2404, %v2380
        %vm2574 = vcmp.eq.s32.totalorder %v2405, %v2380
        %vm2575 = vcmp.eq.s32.totalorder %v2406, %v2380
        %vm2576 = vcmp.eq.s32.totalorder %v2407, %v2380
        %vm2577 = vcmp.eq.s32.totalorder %v2408, %v2380
        %vm2578 = vcmp.eq.s32.totalorder %v2409, %v2380
        %vm2579 = vcmp.eq.s32.totalorder %v2410, %v2380
        %vm2580 = vcmp.eq.s32.totalorder %v2411, %v2380
        %vm2581 = vcmp.eq.s32.totalorder %v1808, %v2381
        %vm2582 = vcmp.eq.s32.totalorder %v2400, %v2381
        %vm2583 = vcmp.eq.s32.totalorder %v2401, %v2381
        %vm2584 = vcmp.eq.s32.totalorder %v2402, %v2381
        %vm2585 = vcmp.eq.s32.totalorder %v2403, %v2381
        %vm2586 = vcmp.eq.s32.totalorder %v2404, %v2381
        %vm2587 = vcmp.eq.s32.totalorder %v2405, %v2381
        %vm2588 = vcmp.eq.s32.totalorder %v2406, %v2381
        %vm2589 = vcmp.eq.s32.totalorder %v2407, %v2381
        %vm2590 = vcmp.eq.s32.totalorder %v2408, %v2381
        %vm2591 = vcmp.eq.s32.totalorder %v2409, %v2381
        %vm2592 = vcmp.eq.s32.totalorder %v2410, %v2381
        %vm2593 = vcmp.eq.s32.totalorder %v2411, %v2381
        %vm2594 = vcmp.eq.s32.totalorder %v1808, %v2382
        %vm2595 = vcmp.eq.s32.totalorder %v2400, %v2382
        %vm2596 = vcmp.eq.s32.totalorder %v2401, %v2382
        %vm2597 = vcmp.eq.s32.totalorder %v2402, %v2382
        %vm2598 = vcmp.eq.s32.totalorder %v2403, %v2382
        %vm2599 = vcmp.eq.s32.totalorder %v2404, %v2382
        %vm2600 = vcmp.eq.s32.totalorder %v2405, %v2382
        %vm2601 = vcmp.eq.s32.totalorder %v2406, %v2382
        %vm2602 = vcmp.eq.s32.totalorder %v2407, %v2382
        %vm2603 = vcmp.eq.s32.totalorder %v2408, %v2382
        %vm2604 = vcmp.eq.s32.totalorder %v2409, %v2382
        %vm2605 = vcmp.eq.s32.totalorder %v2410, %v2382
        %vm2606 = vcmp.eq.s32.totalorder %v2411, %v2382
        %vm2607 = vcmp.eq.s32.totalorder %v1808, %v2383
        %vm2608 = vcmp.eq.s32.totalorder %v2400, %v2383
        %vm2609 = vcmp.eq.s32.totalorder %v2401, %v2383
        %vm2610 = vcmp.eq.s32.totalorder %v2402, %v2383
        %vm2611 = vcmp.eq.s32.totalorder %v2403, %v2383
        %vm2612 = vcmp.eq.s32.totalorder %v2404, %v2383
        %vm2613 = vcmp.eq.s32.totalorder %v2405, %v2383
        %vm2614 = vcmp.eq.s32.totalorder %v2406, %v2383
        %vm2615 = vcmp.eq.s32.totalorder %v2407, %v2383
        %vm2616 = vcmp.eq.s32.totalorder %v2408, %v2383
        %vm2617 = vcmp.eq.s32.totalorder %v2409, %v2383
        %vm2618 = vcmp.eq.s32.totalorder %v2410, %v2383
        %vm2619 = vcmp.eq.s32.totalorder %v2411, %v2383
        %vm2620 = vcmp.eq.s32.totalorder %v1808, %v2384
        %vm2621 = vcmp.eq.s32.totalorder %v2400, %v2384
        %vm2622 = vcmp.eq.s32.totalorder %v2401, %v2384
        %vm2623 = vcmp.eq.s32.totalorder %v2402, %v2384
        %vm2624 = vcmp.eq.s32.totalorder %v2403, %v2384
        %vm2625 = vcmp.eq.s32.totalorder %v2404, %v2384
        %vm2626 = vcmp.eq.s32.totalorder %v2405, %v2384
        %vm2627 = vcmp.eq.s32.totalorder %v2406, %v2384
        %vm2628 = vcmp.eq.s32.totalorder %v2407, %v2384
        %vm2629 = vcmp.eq.s32.totalorder %v2408, %v2384
        %vm2630 = vcmp.eq.s32.totalorder %v2409, %v2384
        %vm2631 = vcmp.eq.s32.totalorder %v2410, %v2384
        %vm2632 = vcmp.eq.s32.totalorder %v2411, %v2384
        %vm2633 = vcmp.eq.s32.totalorder %v1808, %v2385
        %vm2634 = vcmp.eq.s32.totalorder %v2400, %v2385
        %vm2635 = vcmp.eq.s32.totalorder %v2401, %v2385
        %vm2636 = vcmp.eq.s32.totalorder %v2402, %v2385
        %vm2637 = vcmp.eq.s32.totalorder %v2403, %v2385
        %vm2638 = vcmp.eq.s32.totalorder %v2404, %v2385
        %vm2639 = vcmp.eq.s32.totalorder %v2405, %v2385
        %vm2640 = vcmp.eq.s32.totalorder %v2406, %v2385
        %vm2641 = vcmp.eq.s32.totalorder %v2407, %v2385
        %vm2642 = vcmp.eq.s32.totalorder %v2408, %v2385
        %vm2643 = vcmp.eq.s32.totalorder %v2409, %v2385
        %vm2644 = vcmp.eq.s32.totalorder %v2410, %v2385
        %vm2645 = vcmp.eq.s32.totalorder %v2411, %v2385
        %vm2646 = vcmp.eq.s32.totalorder %v1808, %v2386
        %vm2647 = vcmp.eq.s32.totalorder %v2400, %v2386
        %vm2648 = vcmp.eq.s32.totalorder %v2401, %v2386
        %vm2649 = vcmp.eq.s32.totalorder %v2402, %v2386
        %vm2650 = vcmp.eq.s32.totalorder %v2403, %v2386
        %vm2651 = vcmp.eq.s32.totalorder %v2404, %v2386
        %vm2652 = vcmp.eq.s32.totalorder %v2405, %v2386
        %vm2653 = vcmp.eq.s32.totalorder %v2406, %v2386
        %vm2654 = vcmp.eq.s32.totalorder %v2407, %v2386
        %vm2655 = vcmp.eq.s32.totalorder %v2408, %v2386
        %vm2656 = vcmp.eq.s32.totalorder %v2409, %v2386
        %vm2657 = vcmp.eq.s32.totalorder %v2410, %v2386
        %vm2658 = vcmp.eq.s32.totalorder %v2411, %v2386
        %vm2659 = vcmp.eq.s32.totalorder %v1808, %v2387
        %vm2660 = vcmp.eq.s32.totalorder %v2400, %v2387
        %vm2661 = vcmp.eq.s32.totalorder %v2401, %v2387
        %vm2662 = vcmp.eq.s32.totalorder %v2402, %v2387
        %vm2663 = vcmp.eq.s32.totalorder %v2403, %v2387
        %vm2664 = vcmp.eq.s32.totalorder %v2404, %v2387
        %vm2665 = vcmp.eq.s32.totalorder %v2405, %v2387
        %vm2666 = vcmp.eq.s32.totalorder %v2406, %v2387
        %vm2667 = vcmp.eq.s32.totalorder %v2407, %v2387
        %vm2668 = vcmp.eq.s32.totalorder %v2408, %v2387
        %vm2669 = vcmp.eq.s32.totalorder %v2409, %v2387
        %vm2670 = vcmp.eq.s32.totalorder %v2410, %v2387
        %vm2671 = vcmp.eq.s32.totalorder %v2411, %v2387
        %vm2672 = vcmp.eq.s32.totalorder %v1808, %v2388
        %vm2673 = vcmp.eq.s32.totalorder %v2400, %v2388
        %vm2674 = vcmp.eq.s32.totalorder %v2401, %v2388
        %vm2675 = vcmp.eq.s32.totalorder %v2402, %v2388
        %vm2676 = vcmp.eq.s32.totalorder %v2403, %v2388
        %vm2677 = vcmp.eq.s32.totalorder %v2404, %v2388
        %vm2678 = vcmp.eq.s32.totalorder %v2405, %v2388
        %vm2679 = vcmp.eq.s32.totalorder %v2406, %v2388
        %vm2680 = vcmp.eq.s32.totalorder %v2407, %v2388
        %vm2681 = vcmp.eq.s32.totalorder %v2408, %v2388
        %vm2682 = vcmp.eq.s32.totalorder %v2409, %v2388
        %vm2683 = vcmp.eq.s32.totalorder %v2410, %v2388
        %vm2684 = vcmp.eq.s32.totalorder %v2411, %v2388
        %vm2685 = vcmp.eq.s32.totalorder %v1808, %v2389
        %vm2686 = vcmp.eq.s32.totalorder %v2400, %v2389
        %vm2687 = vcmp.eq.s32.totalorder %v2401, %v2389
        %vm2688 = vcmp.eq.s32.totalorder %v2402, %v2389
        %vm2689 = vcmp.eq.s32.totalorder %v2403, %v2389
        %vm2690 = vcmp.eq.s32.totalorder %v2404, %v2389
        %vm2691 = vcmp.eq.s32.totalorder %v2405, %v2389
        %vm2692 = vcmp.eq.s32.totalorder %v2406, %v2389
        %vm2693 = vcmp.eq.s32.totalorder %v2407, %v2389
        %vm2694 = vcmp.eq.s32.totalorder %v2408, %v2389
        %vm2695 = vcmp.eq.s32.totalorder %v2409, %v2389
        %vm2696 = vcmp.eq.s32.totalorder %v2410, %v2389
        %vm2697 = vcmp.eq.s32.totalorder %v2411, %v2389
        %vm2698 = vcmp.eq.s32.totalorder %v1808, %v2390
        %vm2699 = vcmp.eq.s32.totalorder %v2400, %v2390
        %vm2700 = vcmp.eq.s32.totalorder %v2401, %v2390
        %vm2701 = vcmp.eq.s32.totalorder %v2402, %v2390
        %vm2702 = vcmp.eq.s32.totalorder %v2403, %v2390
        %vm2703 = vcmp.eq.s32.totalorder %v2404, %v2390
        %vm2704 = vcmp.eq.s32.totalorder %v2405, %v2390
        %vm2705 = vcmp.eq.s32.totalorder %v2406, %v2390
        %vm2706 = vcmp.eq.s32.totalorder %v2407, %v2390
        %vm2707 = vcmp.eq.s32.totalorder %v2408, %v2390
        %vm2708 = vcmp.eq.s32.totalorder %v2409, %v2390
        %vm2709 = vcmp.eq.s32.totalorder %v2410, %v2390
        %vm2710 = vcmp.eq.s32.totalorder %v2411, %v2390
        %vm2711 = vcmp.eq.s32.totalorder %v1808, %v2391
        %vm2712 = vcmp.eq.s32.totalorder %v2400, %v2391
        %vm2713 = vcmp.eq.s32.totalorder %v2401, %v2391
        %vm2714 = vcmp.eq.s32.totalorder %v2402, %v2391
        %vm2715 = vcmp.eq.s32.totalorder %v2403, %v2391
        %vm2716 = vcmp.eq.s32.totalorder %v2404, %v2391
        %vm2717 = vcmp.eq.s32.totalorder %v2405, %v2391
        %vm2718 = vcmp.eq.s32.totalorder %v2406, %v2391
        %vm2719 = vcmp.eq.s32.totalorder %v2407, %v2391
        %vm2720 = vcmp.eq.s32.totalorder %v2408, %v2391
        %vm2721 = vcmp.eq.s32.totalorder %v2409, %v2391
        %vm2722 = vcmp.eq.s32.totalorder %v2410, %v2391
        %vm2723 = vcmp.eq.s32.totalorder %v2411, %v2391
        %vm2724 = vcmp.eq.s32.totalorder %v1808, %v2392
        %vm2725 = vcmp.eq.s32.totalorder %v2400, %v2392
        %vm2726 = vcmp.eq.s32.totalorder %v2401, %v2392
        %vm2727 = vcmp.eq.s32.totalorder %v2402, %v2392
        %vm2728 = vcmp.eq.s32.totalorder %v2403, %v2392
        %vm2729 = vcmp.eq.s32.totalorder %v2404, %v2392
        %vm2730 = vcmp.eq.s32.totalorder %v2405, %v2392
        %vm2731 = vcmp.eq.s32.totalorder %v2406, %v2392
        %vm2732 = vcmp.eq.s32.totalorder %v2407, %v2392
        %vm2733 = vcmp.eq.s32.totalorder %v2408, %v2392
        %vm2734 = vcmp.eq.s32.totalorder %v2409, %v2392
        %vm2735 = vcmp.eq.s32.totalorder %v2410, %v2392
        %vm2736 = vcmp.eq.s32.totalorder %v2411, %v2392
        %vm2737 = vcmp.eq.s32.totalorder %v1808, %v2393
        %vm2738 = vcmp.eq.s32.totalorder %v2400, %v2393
        %vm2739 = vcmp.eq.s32.totalorder %v2401, %v2393
        %vm2740 = vcmp.eq.s32.totalorder %v2402, %v2393
        %vm2741 = vcmp.eq.s32.totalorder %v2403, %v2393
        %vm2742 = vcmp.eq.s32.totalorder %v2404, %v2393
        %vm2743 = vcmp.eq.s32.totalorder %v2405, %v2393
        %vm2744 = vcmp.eq.s32.totalorder %v2406, %v2393
        %vm2745 = vcmp.eq.s32.totalorder %v2407, %v2393
        %vm2746 = vcmp.eq.s32.totalorder %v2408, %v2393
        %vm2747 = vcmp.eq.s32.totalorder %v2409, %v2393
        %vm2748 = vcmp.eq.s32.totalorder %v2410, %v2393
        %vm2749 = vcmp.eq.s32.totalorder %v2411, %v2393
        %vm2750 = vcmp.eq.s32.totalorder %v1808, %v2394
        %vm2751 = vcmp.eq.s32.totalorder %v2400, %v2394
        %vm2752 = vcmp.eq.s32.totalorder %v2401, %v2394
        %vm2753 = vcmp.eq.s32.totalorder %v2402, %v2394
        %vm2754 = vcmp.eq.s32.totalorder %v2403, %v2394
        %vm2755 = vcmp.eq.s32.totalorder %v2404, %v2394
        %vm2756 = vcmp.eq.s32.totalorder %v2405, %v2394
        %vm2757 = vcmp.eq.s32.totalorder %v2406, %v2394
        %vm2758 = vcmp.eq.s32.totalorder %v2407, %v2394
        %vm2759 = vcmp.eq.s32.totalorder %v2408, %v2394
        %vm2760 = vcmp.eq.s32.totalorder %v2409, %v2394
        %vm2761 = vcmp.eq.s32.totalorder %v2410, %v2394
        %vm2762 = vcmp.eq.s32.totalorder %v2411, %v2394
        %vm2763 = vcmp.eq.s32.totalorder %v1808, %v2395
        %vm2764 = vcmp.eq.s32.totalorder %v2400, %v2395
        %vm2765 = vcmp.eq.s32.totalorder %v2401, %v2395
        %vm2766 = vcmp.eq.s32.totalorder %v2402, %v2395
        %vm2767 = vcmp.eq.s32.totalorder %v2403, %v2395
        %vm2768 = vcmp.eq.s32.totalorder %v2404, %v2395
        %vm2769 = vcmp.eq.s32.totalorder %v2405, %v2395
        %vm2770 = vcmp.eq.s32.totalorder %v2406, %v2395
        %vm2771 = vcmp.eq.s32.totalorder %v2407, %v2395
        %vm2772 = vcmp.eq.s32.totalorder %v2408, %v2395
        %vm2773 = vcmp.eq.s32.totalorder %v2409, %v2395
        %vm2774 = vcmp.eq.s32.totalorder %v2410, %v2395
        %vm2775 = vcmp.eq.s32.totalorder %v2411, %v2395
        %vm2776 = vcmp.eq.s32.totalorder %v1808, %v2396
        %vm2777 = vcmp.eq.s32.totalorder %v2400, %v2396
        %vm2778 = vcmp.eq.s32.totalorder %v2401, %v2396
        %vm2779 = vcmp.eq.s32.totalorder %v2402, %v2396
        %vm2780 = vcmp.eq.s32.totalorder %v2403, %v2396
        %vm2781 = vcmp.eq.s32.totalorder %v2404, %v2396
        %vm2782 = vcmp.eq.s32.totalorder %v2405, %v2396
        %vm2783 = vcmp.eq.s32.totalorder %v2406, %v2396
        %vm2784 = vcmp.eq.s32.totalorder %v2407, %v2396
        %vm2785 = vcmp.eq.s32.totalorder %v2408, %v2396
        %vm2786 = vcmp.eq.s32.totalorder %v2409, %v2396
        %vm2787 = vcmp.eq.s32.totalorder %v2410, %v2396
        %vm2788 = vcmp.eq.s32.totalorder %v2411, %v2396
        %vm2789 = vcmp.eq.s32.totalorder %v1808, %v2397
        %vm2790 = vcmp.eq.s32.totalorder %v2400, %v2397
        %vm2791 = vcmp.eq.s32.totalorder %v2401, %v2397
        %vm2792 = vcmp.eq.s32.totalorder %v2402, %v2397
        %vm2793 = vcmp.eq.s32.totalorder %v2403, %v2397
        %vm2794 = vcmp.eq.s32.totalorder %v2404, %v2397
        %vm2795 = vcmp.eq.s32.totalorder %v2405, %v2397
        %vm2796 = vcmp.eq.s32.totalorder %v2406, %v2397
        %vm2797 = vcmp.eq.s32.totalorder %v2407, %v2397
        %vm2798 = vcmp.eq.s32.totalorder %v2408, %v2397
        %vm2799 = vcmp.eq.s32.totalorder %v2409, %v2397
        %vm2800 = vcmp.eq.s32.totalorder %v2410, %v2397
        %vm2801 = vcmp.eq.s32.totalorder %v2411, %v2397
        %vm2802 = vcmp.eq.s32.totalorder %v1808, %v2398
        %vm2803 = vcmp.eq.s32.totalorder %v2400, %v2398
        %vm2804 = vcmp.eq.s32.totalorder %v2401, %v2398
        %vm2805 = vcmp.eq.s32.totalorder %v2402, %v2398
        %vm2806 = vcmp.eq.s32.totalorder %v2403, %v2398
        %vm2807 = vcmp.eq.s32.totalorder %v2404, %v2398
        %vm2808 = vcmp.eq.s32.totalorder %v2405, %v2398
        %vm2809 = vcmp.eq.s32.totalorder %v2406, %v2398
        %vm2810 = vcmp.eq.s32.totalorder %v2407, %v2398
        %vm2811 = vcmp.eq.s32.totalorder %v2408, %v2398
        %vm2812 = vcmp.eq.s32.totalorder %v2409, %v2398
        %vm2813 = vcmp.eq.s32.totalorder %v2410, %v2398
        %vm2814 = vcmp.eq.s32.totalorder %v2411, %v2398
        %vm2815 = vcmp.eq.s32.totalorder %v1808, %v2399
        %vm2816 = vcmp.eq.s32.totalorder %v2400, %v2399
        %vm2817 = vcmp.eq.s32.totalorder %v2401, %v2399
        %vm2818 = vcmp.eq.s32.totalorder %v2402, %v2399
        %vm2819 = vcmp.eq.s32.totalorder %v2403, %v2399
        %vm2820 = vcmp.eq.s32.totalorder %v2404, %v2399
        %vm2821 = vcmp.eq.s32.totalorder %v2405, %v2399
        %vm2822 = vcmp.eq.s32.totalorder %v2406, %v2399
        %vm2823 = vcmp.eq.s32.totalorder %v2407, %v2399
        %vm2824 = vcmp.eq.s32.totalorder %v2408, %v2399
        %vm2825 = vcmp.eq.s32.totalorder %v2409, %v2399
        %vm2826 = vcmp.eq.s32.totalorder %v2410, %v2399
        %vm2827 = vcmp.eq.s32.totalorder %v2411, %v2399
        %v2828 = vld [vmem:[%s5] ss:$2 sm:$0xff]
        %s2829 = scalar_lea.vmem %s5, 16
        %v2830 = vld [vmem:[%s2829] ss:$2 sm:$0x1f]
        %v2833 = vlaneseq
        %v2834 = vshrl.u32 %v2833, 7
        %v2835 = vsub.s32 0, %v2834
        %v2836 = vrot.slane %v2828, %v2835
        %v2837 = vlaneseq
        %v2838 = vshrl.u32 %v2837, 7
        %v2839 = vsub.s32 1, %v2838
        %v2840 = vrot.slane %v2828, %v2839
        %v2841 = vlaneseq
        %v2842 = vshrl.u32 %v2841, 7
        %v2843 = vsub.s32 2, %v2842
        %v2844 = vrot.slane %v2828, %v2843
        %v2845 = vlaneseq
        %v2846 = vshrl.u32 %v2845, 7
        %v2847 = vsub.s32 3, %v2846
        %v2848 = vrot.slane %v2828, %v2847
        %v2849 = vlaneseq
        %v2850 = vshrl.u32 %v2849, 7
        %v2851 = vsub.s32 4, %v2850
        %v2852 = vrot.slane %v2828, %v2851
        %v2853 = vlaneseq
        %v2854 = vshrl.u32 %v2853, 7
        %v2855 = vsub.s32 5, %v2854
        %v2856 = vrot.slane %v2828, %v2855
        %v2857 = vlaneseq
        %v2858 = vshrl.u32 %v2857, 7
        %v2859 = vsub.s32 6, %v2858
        %v2860 = vrot.slane %v2828, %v2859
        %v2861 = vlaneseq
        %v2862 = vshrl.u32 %v2861, 7
        %v2863 = vsub.s32 7, %v2862
        %v2864 = vrot.slane %v2828, %v2863
        %v2865 = vlaneseq
        %v2866 = vshrl.u32 %v2865, 7
        %v2867 = vsub.s32 0, %v2866
        %v2868 = vrot.slane %v2830, %v2867
        %v2869 = vlaneseq
        %v2870 = vshrl.u32 %v2869, 7
        %v2871 = vsub.s32 1, %v2870
        %v2872 = vrot.slane %v2830, %v2871
        %v2873 = vlaneseq
        %v2874 = vshrl.u32 %v2873, 7
        %v2875 = vsub.s32 2, %v2874
        %v2876 = vrot.slane %v2830, %v2875
        %v2877 = vlaneseq
        %v2878 = vshrl.u32 %v2877, 7
        %v2879 = vsub.s32 3, %v2878
        %v2880 = vrot.slane %v2830, %v2879
        %v2881 = vlaneseq
        %v2882 = vshrl.u32 %v2881, 7
        %v2883 = vsub.s32 4, %v2882
        %v2884 = vrot.slane %v2830, %v2883
        %v2898 = vsel %vm2412, %v2836, 0.0
        %v2899 = vsel %vm2413, %v2840, 0.0
        %v2900 = vsel %vm2414, %v2844, 0.0
        %v2901 = vsel %vm2415, %v2848, 0.0
        %v2902 = vsel %vm2416, %v2852, 0.0
        %v2903 = vsel %vm2417, %v2856, 0.0
        %v2904 = vsel %vm2418, %v2860, 0.0
        %v2905 = vsel %vm2419, %v2864, 0.0
        %v2906 = vsel %vm2420, %v2868, 0.0
        %v2907 = vsel %vm2421, %v2872, 0.0
        %v2908 = vsel %vm2422, %v2876, 0.0
        %v2909 = vsel %vm2423, %v2880, 0.0
        %v2910 = vsel %vm2424, %v2884, 0.0
        %v2911 = vsel %vm2425, %v2836, 0.0
        %v2912 = vsel %vm2426, %v2840, 0.0
        %v2913 = vsel %vm2427, %v2844, 0.0
        %v2914 = vsel %vm2428, %v2848, 0.0
        %v2915 = vsel %vm2429, %v2852, 0.0
        %v2916 = vsel %vm2430, %v2856, 0.0
        %v2917 = vsel %vm2431, %v2860, 0.0
        %v2918 = vsel %vm2432, %v2864, 0.0
        %v2919 = vsel %vm2433, %v2868, 0.0
        %v2920 = vsel %vm2434, %v2872, 0.0
        %v2921 = vsel %vm2435, %v2876, 0.0
        %v2922 = vsel %vm2436, %v2880, 0.0
        %v2923 = vsel %vm2437, %v2884, 0.0
        %v2924 = vsel %vm2438, %v2836, 0.0
        %v2925 = vsel %vm2439, %v2840, 0.0
        %v2926 = vsel %vm2440, %v2844, 0.0
        %v2927 = vsel %vm2441, %v2848, 0.0
        %v2928 = vsel %vm2442, %v2852, 0.0
        %v2929 = vsel %vm2443, %v2856, 0.0
        %v2930 = vsel %vm2444, %v2860, 0.0
        %v2931 = vsel %vm2445, %v2864, 0.0
        %v2932 = vsel %vm2446, %v2868, 0.0
        %v2933 = vsel %vm2447, %v2872, 0.0
        %v2934 = vsel %vm2448, %v2876, 0.0
        %v2935 = vsel %vm2449, %v2880, 0.0
        %v2936 = vsel %vm2450, %v2884, 0.0
        %v2937 = vsel %vm2451, %v2836, 0.0
        %v2938 = vsel %vm2452, %v2840, 0.0
        %v2939 = vsel %vm2453, %v2844, 0.0
        %v2940 = vsel %vm2454, %v2848, 0.0
        %v2941 = vsel %vm2455, %v2852, 0.0
        %v2942 = vsel %vm2456, %v2856, 0.0
        %v2943 = vsel %vm2457, %v2860, 0.0
        %v2944 = vsel %vm2458, %v2864, 0.0
        %v2945 = vsel %vm2459, %v2868, 0.0
        %v2946 = vsel %vm2460, %v2872, 0.0
        %v2947 = vsel %vm2461, %v2876, 0.0
        %v2948 = vsel %vm2462, %v2880, 0.0
        %v2949 = vsel %vm2463, %v2884, 0.0
        %v2950 = vsel %vm2464, %v2836, 0.0
        %v2951 = vsel %vm2465, %v2840, 0.0
        %v2952 = vsel %vm2466, %v2844, 0.0
        %v2953 = vsel %vm2467, %v2848, 0.0
        %v2954 = vsel %vm2468, %v2852, 0.0
        %v2955 = vsel %vm2469, %v2856, 0.0
        %v2956 = vsel %vm2470, %v2860, 0.0
        %v2957 = vsel %vm2471, %v2864, 0.0
        %v2958 = vsel %vm2472, %v2868, 0.0
        %v2959 = vsel %vm2473, %v2872, 0.0
        %v2960 = vsel %vm2474, %v2876, 0.0
        %v2961 = vsel %vm2475, %v2880, 0.0
        %v2962 = vsel %vm2476, %v2884, 0.0
        %v2963 = vsel %vm2477, %v2836, 0.0
        %v2964 = vsel %vm2478, %v2840, 0.0
        %v2965 = vsel %vm2479, %v2844, 0.0
        %v2966 = vsel %vm2480, %v2848, 0.0
        %v2967 = vsel %vm2481, %v2852, 0.0
        %v2968 = vsel %vm2482, %v2856, 0.0
        %v2969 = vsel %vm2483, %v2860, 0.0
        %v2970 = vsel %vm2484, %v2864, 0.0
        %v2971 = vsel %vm2485, %v2868, 0.0
        %v2972 = vsel %vm2486, %v2872, 0.0
        %v2973 = vsel %vm2487, %v2876, 0.0
        %v2974 = vsel %vm2488, %v2880, 0.0
        %v2975 = vsel %vm2489, %v2884, 0.0
        %v2976 = vsel %vm2490, %v2836, 0.0
        %v2977 = vsel %vm2491, %v2840, 0.0
        %v2978 = vsel %vm2492, %v2844, 0.0
        %v2979 = vsel %vm2493, %v2848, 0.0
        %v2980 = vsel %vm2494, %v2852, 0.0
        %v2981 = vsel %vm2495, %v2856, 0.0
        %v2982 = vsel %vm2496, %v2860, 0.0
        %v2983 = vsel %vm2497, %v2864, 0.0
        %v2984 = vsel %vm2498, %v2868, 0.0
        %v2985 = vsel %vm2499, %v2872, 0.0
        %v2986 = vsel %vm2500, %v2876, 0.0
        %v2987 = vsel %vm2501, %v2880, 0.0
        %v2988 = vsel %vm2502, %v2884, 0.0
        %v2989 = vsel %vm2503, %v2836, 0.0
        %v2990 = vsel %vm2504, %v2840, 0.0
        %v2991 = vsel %vm2505, %v2844, 0.0
        %v2992 = vsel %vm2506, %v2848, 0.0
        %v2993 = vsel %vm2507, %v2852, 0.0
        %v2994 = vsel %vm2508, %v2856, 0.0
        %v2995 = vsel %vm2509, %v2860, 0.0
        %v2996 = vsel %vm2510, %v2864, 0.0
        %v2997 = vsel %vm2511, %v2868, 0.0
        %v2998 = vsel %vm2512, %v2872, 0.0
        %v2999 = vsel %vm2513, %v2876, 0.0
        %v3000 = vsel %vm2514, %v2880, 0.0
        %v3001 = vsel %vm2515, %v2884, 0.0
        %v3002 = vsel %vm2516, %v2836, 0.0
        %v3003 = vsel %vm2517, %v2840, 0.0
        %v3004 = vsel %vm2518, %v2844, 0.0
        %v3005 = vsel %vm2519, %v2848, 0.0
        %v3006 = vsel %vm2520, %v2852, 0.0
        %v3007 = vsel %vm2521, %v2856, 0.0
        %v3008 = vsel %vm2522, %v2860, 0.0
        %v3009 = vsel %vm2523, %v2864, 0.0
        %v3010 = vsel %vm2524, %v2868, 0.0
        %v3011 = vsel %vm2525, %v2872, 0.0
        %v3012 = vsel %vm2526, %v2876, 0.0
        %v3013 = vsel %vm2527, %v2880, 0.0
        %v3014 = vsel %vm2528, %v2884, 0.0
        %v3015 = vsel %vm2529, %v2836, 0.0
        %v3016 = vsel %vm2530, %v2840, 0.0
        %v3017 = vsel %vm2531, %v2844, 0.0
        %v3018 = vsel %vm2532, %v2848, 0.0
        %v3019 = vsel %vm2533, %v2852, 0.0
        %v3020 = vsel %vm2534, %v2856, 0.0
        %v3021 = vsel %vm2535, %v2860, 0.0
        %v3022 = vsel %vm2536, %v2864, 0.0
        %v3023 = vsel %vm2537, %v2868, 0.0
        %v3024 = vsel %vm2538, %v2872, 0.0
        %v3025 = vsel %vm2539, %v2876, 0.0
        %v3026 = vsel %vm2540, %v2880, 0.0
        %v3027 = vsel %vm2541, %v2884, 0.0
        %v3028 = vsel %vm2542, %v2836, 0.0
        %v3029 = vsel %vm2543, %v2840, 0.0
        %v3030 = vsel %vm2544, %v2844, 0.0
        %v3031 = vsel %vm2545, %v2848, 0.0
        %v3032 = vsel %vm2546, %v2852, 0.0
        %v3033 = vsel %vm2547, %v2856, 0.0
        %v3034 = vsel %vm2548, %v2860, 0.0
        %v3035 = vsel %vm2549, %v2864, 0.0
        %v3036 = vsel %vm2550, %v2868, 0.0
        %v3037 = vsel %vm2551, %v2872, 0.0
        %v3038 = vsel %vm2552, %v2876, 0.0
        %v3039 = vsel %vm2553, %v2880, 0.0
        %v3040 = vsel %vm2554, %v2884, 0.0
        %v3041 = vsel %vm2555, %v2836, 0.0
        %v3042 = vsel %vm2556, %v2840, 0.0
        %v3043 = vsel %vm2557, %v2844, 0.0
        %v3044 = vsel %vm2558, %v2848, 0.0
        %v3045 = vsel %vm2559, %v2852, 0.0
        %v3046 = vsel %vm2560, %v2856, 0.0
        %v3047 = vsel %vm2561, %v2860, 0.0
        %v3048 = vsel %vm2562, %v2864, 0.0
        %v3049 = vsel %vm2563, %v2868, 0.0
        %v3050 = vsel %vm2564, %v2872, 0.0
        %v3051 = vsel %vm2565, %v2876, 0.0
        %v3052 = vsel %vm2566, %v2880, 0.0
        %v3053 = vsel %vm2567, %v2884, 0.0
        %v3054 = vsel %vm2568, %v2836, 0.0
        %v3055 = vsel %vm2569, %v2840, 0.0
        %v3056 = vsel %vm2570, %v2844, 0.0
        %v3057 = vsel %vm2571, %v2848, 0.0
        %v3058 = vsel %vm2572, %v2852, 0.0
        %v3059 = vsel %vm2573, %v2856, 0.0
        %v3060 = vsel %vm2574, %v2860, 0.0
        %v3061 = vsel %vm2575, %v2864, 0.0
        %v3062 = vsel %vm2576, %v2868, 0.0
        %v3063 = vsel %vm2577, %v2872, 0.0
        %v3064 = vsel %vm2578, %v2876, 0.0
        %v3065 = vsel %vm2579, %v2880, 0.0
        %v3066 = vsel %vm2580, %v2884, 0.0
        %v3067 = vsel %vm2581, %v2836, 0.0
        %v3068 = vsel %vm2582, %v2840, 0.0
        %v3069 = vsel %vm2583, %v2844, 0.0
        %v3070 = vsel %vm2584, %v2848, 0.0
        %v3071 = vsel %vm2585, %v2852, 0.0
        %v3072 = vsel %vm2586, %v2856, 0.0
        %v3073 = vsel %vm2587, %v2860, 0.0
        %v3074 = vsel %vm2588, %v2864, 0.0
        %v3075 = vsel %vm2589, %v2868, 0.0
        %v3076 = vsel %vm2590, %v2872, 0.0
        %v3077 = vsel %vm2591, %v2876, 0.0
        %v3078 = vsel %vm2592, %v2880, 0.0
        %v3079 = vsel %vm2593, %v2884, 0.0
        %v3080 = vsel %vm2594, %v2836, 0.0
        %v3081 = vsel %vm2595, %v2840, 0.0
        %v3082 = vsel %vm2596, %v2844, 0.0
        %v3083 = vsel %vm2597, %v2848, 0.0
        %v3084 = vsel %vm2598, %v2852, 0.0
        %v3085 = vsel %vm2599, %v2856, 0.0
        %v3086 = vsel %vm2600, %v2860, 0.0
        %v3087 = vsel %vm2601, %v2864, 0.0
        %v3088 = vsel %vm2602, %v2868, 0.0
        %v3089 = vsel %vm2603, %v2872, 0.0
        %v3090 = vsel %vm2604, %v2876, 0.0
        %v3091 = vsel %vm2605, %v2880, 0.0
        %v3092 = vsel %vm2606, %v2884, 0.0
        %v3093 = vsel %vm2607, %v2836, 0.0
        %v3094 = vsel %vm2608, %v2840, 0.0
        %v3095 = vsel %vm2609, %v2844, 0.0
        %v3096 = vsel %vm2610, %v2848, 0.0
        %v3097 = vsel %vm2611, %v2852, 0.0
        %v3098 = vsel %vm2612, %v2856, 0.0
        %v3099 = vsel %vm2613, %v2860, 0.0
        %v3100 = vsel %vm2614, %v2864, 0.0
        %v3101 = vsel %vm2615, %v2868, 0.0
        %v3102 = vsel %vm2616, %v2872, 0.0
        %v3103 = vsel %vm2617, %v2876, 0.0
        %v3104 = vsel %vm2618, %v2880, 0.0
        %v3105 = vsel %vm2619, %v2884, 0.0
        %v3106 = vsel %vm2620, %v2836, 0.0
        %v3107 = vsel %vm2621, %v2840, 0.0
        %v3108 = vsel %vm2622, %v2844, 0.0
        %v3109 = vsel %vm2623, %v2848, 0.0
        %v3110 = vsel %vm2624, %v2852, 0.0
        %v3111 = vsel %vm2625, %v2856, 0.0
        %v3112 = vsel %vm2626, %v2860, 0.0
        %v3113 = vsel %vm2627, %v2864, 0.0
        %v3114 = vsel %vm2628, %v2868, 0.0
        %v3115 = vsel %vm2629, %v2872, 0.0
        %v3116 = vsel %vm2630, %v2876, 0.0
        %v3117 = vsel %vm2631, %v2880, 0.0
        %v3118 = vsel %vm2632, %v2884, 0.0
        %v3119 = vsel %vm2633, %v2836, 0.0
        %v3120 = vsel %vm2634, %v2840, 0.0
        %v3121 = vsel %vm2635, %v2844, 0.0
        %v3122 = vsel %vm2636, %v2848, 0.0
        %v3123 = vsel %vm2637, %v2852, 0.0
        %v3124 = vsel %vm2638, %v2856, 0.0
        %v3125 = vsel %vm2639, %v2860, 0.0
        %v3126 = vsel %vm2640, %v2864, 0.0
        %v3127 = vsel %vm2641, %v2868, 0.0
        %v3128 = vsel %vm2642, %v2872, 0.0
        %v3129 = vsel %vm2643, %v2876, 0.0
        %v3130 = vsel %vm2644, %v2880, 0.0
        %v3131 = vsel %vm2645, %v2884, 0.0
        %v3132 = vsel %vm2646, %v2836, 0.0
        %v3133 = vsel %vm2647, %v2840, 0.0
        %v3134 = vsel %vm2648, %v2844, 0.0
        %v3135 = vsel %vm2649, %v2848, 0.0
        %v3136 = vsel %vm2650, %v2852, 0.0
        %v3137 = vsel %vm2651, %v2856, 0.0
        %v3138 = vsel %vm2652, %v2860, 0.0
        %v3139 = vsel %vm2653, %v2864, 0.0
        %v3140 = vsel %vm2654, %v2868, 0.0
        %v3141 = vsel %vm2655, %v2872, 0.0
        %v3142 = vsel %vm2656, %v2876, 0.0
        %v3143 = vsel %vm2657, %v2880, 0.0
        %v3144 = vsel %vm2658, %v2884, 0.0
        %v3145 = vsel %vm2659, %v2836, 0.0
        %v3146 = vsel %vm2660, %v2840, 0.0
        %v3147 = vsel %vm2661, %v2844, 0.0
        %v3148 = vsel %vm2662, %v2848, 0.0
        %v3149 = vsel %vm2663, %v2852, 0.0
        %v3150 = vsel %vm2664, %v2856, 0.0
        %v3151 = vsel %vm2665, %v2860, 0.0
        %v3152 = vsel %vm2666, %v2864, 0.0
        %v3153 = vsel %vm2667, %v2868, 0.0
        %v3154 = vsel %vm2668, %v2872, 0.0
        %v3155 = vsel %vm2669, %v2876, 0.0
        %v3156 = vsel %vm2670, %v2880, 0.0
        %v3157 = vsel %vm2671, %v2884, 0.0
        %v3158 = vsel %vm2672, %v2836, 0.0
        %v3159 = vsel %vm2673, %v2840, 0.0
        %v3160 = vsel %vm2674, %v2844, 0.0
        %v3161 = vsel %vm2675, %v2848, 0.0
        %v3162 = vsel %vm2676, %v2852, 0.0
        %v3163 = vsel %vm2677, %v2856, 0.0
        %v3164 = vsel %vm2678, %v2860, 0.0
        %v3165 = vsel %vm2679, %v2864, 0.0
        %v3166 = vsel %vm2680, %v2868, 0.0
        %v3167 = vsel %vm2681, %v2872, 0.0
        %v3168 = vsel %vm2682, %v2876, 0.0
        %v3169 = vsel %vm2683, %v2880, 0.0
        %v3170 = vsel %vm2684, %v2884, 0.0
        %v3171 = vsel %vm2685, %v2836, 0.0
        %v3172 = vsel %vm2686, %v2840, 0.0
        %v3173 = vsel %vm2687, %v2844, 0.0
        %v3174 = vsel %vm2688, %v2848, 0.0
        %v3175 = vsel %vm2689, %v2852, 0.0
        %v3176 = vsel %vm2690, %v2856, 0.0
        %v3177 = vsel %vm2691, %v2860, 0.0
        %v3178 = vsel %vm2692, %v2864, 0.0
        %v3179 = vsel %vm2693, %v2868, 0.0
        %v3180 = vsel %vm2694, %v2872, 0.0
        %v3181 = vsel %vm2695, %v2876, 0.0
        %v3182 = vsel %vm2696, %v2880, 0.0
        %v3183 = vsel %vm2697, %v2884, 0.0
        %v3184 = vsel %vm2698, %v2836, 0.0
        %v3185 = vsel %vm2699, %v2840, 0.0
        %v3186 = vsel %vm2700, %v2844, 0.0
        %v3187 = vsel %vm2701, %v2848, 0.0
        %v3188 = vsel %vm2702, %v2852, 0.0
        %v3189 = vsel %vm2703, %v2856, 0.0
        %v3190 = vsel %vm2704, %v2860, 0.0
        %v3191 = vsel %vm2705, %v2864, 0.0
        %v3192 = vsel %vm2706, %v2868, 0.0
        %v3193 = vsel %vm2707, %v2872, 0.0
        %v3194 = vsel %vm2708, %v2876, 0.0
        %v3195 = vsel %vm2709, %v2880, 0.0
        %v3196 = vsel %vm2710, %v2884, 0.0
        %v3197 = vsel %vm2711, %v2836, 0.0
        %v3198 = vsel %vm2712, %v2840, 0.0
        %v3199 = vsel %vm2713, %v2844, 0.0
        %v3200 = vsel %vm2714, %v2848, 0.0
        %v3201 = vsel %vm2715, %v2852, 0.0
        %v3202 = vsel %vm2716, %v2856, 0.0
        %v3203 = vsel %vm2717, %v2860, 0.0
        %v3204 = vsel %vm2718, %v2864, 0.0
        %v3205 = vsel %vm2719, %v2868, 0.0
        %v3206 = vsel %vm2720, %v2872, 0.0
        %v3207 = vsel %vm2721, %v2876, 0.0
        %v3208 = vsel %vm2722, %v2880, 0.0
        %v3209 = vsel %vm2723, %v2884, 0.0
        %v3210 = vsel %vm2724, %v2836, 0.0
        %v3211 = vsel %vm2725, %v2840, 0.0
        %v3212 = vsel %vm2726, %v2844, 0.0
        %v3213 = vsel %vm2727, %v2848, 0.0
        %v3214 = vsel %vm2728, %v2852, 0.0
        %v3215 = vsel %vm2729, %v2856, 0.0
        %v3216 = vsel %vm2730, %v2860, 0.0
        %v3217 = vsel %vm2731, %v2864, 0.0
        %v3218 = vsel %vm2732, %v2868, 0.0
        %v3219 = vsel %vm2733, %v2872, 0.0
        %v3220 = vsel %vm2734, %v2876, 0.0
        %v3221 = vsel %vm2735, %v2880, 0.0
        %v3222 = vsel %vm2736, %v2884, 0.0
        %v3223 = vsel %vm2737, %v2836, 0.0
        %v3224 = vsel %vm2738, %v2840, 0.0
        %v3225 = vsel %vm2739, %v2844, 0.0
        %v3226 = vsel %vm2740, %v2848, 0.0
        %v3227 = vsel %vm2741, %v2852, 0.0
        %v3228 = vsel %vm2742, %v2856, 0.0
        %v3229 = vsel %vm2743, %v2860, 0.0
        %v3230 = vsel %vm2744, %v2864, 0.0
        %v3231 = vsel %vm2745, %v2868, 0.0
        %v3232 = vsel %vm2746, %v2872, 0.0
        %v3233 = vsel %vm2747, %v2876, 0.0
        %v3234 = vsel %vm2748, %v2880, 0.0
        %v3235 = vsel %vm2749, %v2884, 0.0
        %v3236 = vsel %vm2750, %v2836, 0.0
        %v3237 = vsel %vm2751, %v2840, 0.0
        %v3238 = vsel %vm2752, %v2844, 0.0
        %v3239 = vsel %vm2753, %v2848, 0.0
        %v3240 = vsel %vm2754, %v2852, 0.0
        %v3241 = vsel %vm2755, %v2856, 0.0
        %v3242 = vsel %vm2756, %v2860, 0.0
        %v3243 = vsel %vm2757, %v2864, 0.0
        %v3244 = vsel %vm2758, %v2868, 0.0
        %v3245 = vsel %vm2759, %v2872, 0.0
        %v3246 = vsel %vm2760, %v2876, 0.0
        %v3247 = vsel %vm2761, %v2880, 0.0
        %v3248 = vsel %vm2762, %v2884, 0.0
        %v3249 = vsel %vm2763, %v2836, 0.0
        %v3250 = vsel %vm2764, %v2840, 0.0
        %v3251 = vsel %vm2765, %v2844, 0.0
        %v3252 = vsel %vm2766, %v2848, 0.0
        %v3253 = vsel %vm2767, %v2852, 0.0
        %v3254 = vsel %vm2768, %v2856, 0.0
        %v3255 = vsel %vm2769, %v2860, 0.0
        %v3256 = vsel %vm2770, %v2864, 0.0
        %v3257 = vsel %vm2771, %v2868, 0.0
        %v3258 = vsel %vm2772, %v2872, 0.0
        %v3259 = vsel %vm2773, %v2876, 0.0
        %v3260 = vsel %vm2774, %v2880, 0.0
        %v3261 = vsel %vm2775, %v2884, 0.0
        %v3262 = vsel %vm2776, %v2836, 0.0
        %v3263 = vsel %vm2777, %v2840, 0.0
        %v3264 = vsel %vm2778, %v2844, 0.0
        %v3265 = vsel %vm2779, %v2848, 0.0
        %v3266 = vsel %vm2780, %v2852, 0.0
        %v3267 = vsel %vm2781, %v2856, 0.0
        %v3268 = vsel %vm2782, %v2860, 0.0
        %v3269 = vsel %vm2783, %v2864, 0.0
        %v3270 = vsel %vm2784, %v2868, 0.0
        %v3271 = vsel %vm2785, %v2872, 0.0
        %v3272 = vsel %vm2786, %v2876, 0.0
        %v3273 = vsel %vm2787, %v2880, 0.0
        %v3274 = vsel %vm2788, %v2884, 0.0
        %v3275 = vsel %vm2789, %v2836, 0.0
        %v3276 = vsel %vm2790, %v2840, 0.0
        %v3277 = vsel %vm2791, %v2844, 0.0
        %v3278 = vsel %vm2792, %v2848, 0.0
        %v3279 = vsel %vm2793, %v2852, 0.0
        %v3280 = vsel %vm2794, %v2856, 0.0
        %v3281 = vsel %vm2795, %v2860, 0.0
        %v3282 = vsel %vm2796, %v2864, 0.0
        %v3283 = vsel %vm2797, %v2868, 0.0
        %v3284 = vsel %vm2798, %v2872, 0.0
        %v3285 = vsel %vm2799, %v2876, 0.0
        %v3286 = vsel %vm2800, %v2880, 0.0
        %v3287 = vsel %vm2801, %v2884, 0.0
        %v3288 = vsel %vm2802, %v2836, 0.0
        %v3289 = vsel %vm2803, %v2840, 0.0
        %v3290 = vsel %vm2804, %v2844, 0.0
        %v3291 = vsel %vm2805, %v2848, 0.0
        %v3292 = vsel %vm2806, %v2852, 0.0
        %v3293 = vsel %vm2807, %v2856, 0.0
        %v3294 = vsel %vm2808, %v2860, 0.0
        %v3295 = vsel %vm2809, %v2864, 0.0
        %v3296 = vsel %vm2810, %v2868, 0.0
        %v3297 = vsel %vm2811, %v2872, 0.0
        %v3298 = vsel %vm2812, %v2876, 0.0
        %v3299 = vsel %vm2813, %v2880, 0.0
        %v3300 = vsel %vm2814, %v2884, 0.0
        %v3301 = vsel %vm2815, %v2836, 0.0
        %v3302 = vsel %vm2816, %v2840, 0.0
        %v3303 = vsel %vm2817, %v2844, 0.0
        %v3304 = vsel %vm2818, %v2848, 0.0
        %v3305 = vsel %vm2819, %v2852, 0.0
        %v3306 = vsel %vm2820, %v2856, 0.0
        %v3307 = vsel %vm2821, %v2860, 0.0
        %v3308 = vsel %vm2822, %v2864, 0.0
        %v3309 = vsel %vm2823, %v2868, 0.0
        %v3310 = vsel %vm2824, %v2872, 0.0
        %v3311 = vsel %vm2825, %v2876, 0.0
        %v3312 = vsel %vm2826, %v2880, 0.0
        %v3313 = vsel %vm2827, %v2884, 0.0
        %v3314 = vadd.f32 %v2898, %v2899
        %v3315 = vadd.f32 %v3314, %v2900
        %v3316 = vadd.f32 %v3315, %v2901
        %v3317 = vadd.f32 %v3316, %v2902
        %v3318 = vadd.f32 %v3317, %v2903
        %v3319 = vadd.f32 %v3318, %v2904
        %v3320 = vadd.f32 %v3319, %v2905
        %v3321 = vadd.f32 %v3320, %v2906
        %v3322 = vadd.f32 %v3321, %v2907
        %v3323 = vadd.f32 %v3322, %v2908
        %v3324 = vadd.f32 %v3323, %v2909
        %v3325 = vadd.f32 %v3324, %v2910
        %3326 = vadd.xlane.f32.xlu0 %v3325
        %v3327 = vpop.xlane.xlu0 %3326
        %v3328 = vadd.f32 %v2911, %v2912
        %v3329 = vadd.f32 %v3328, %v2913
        %v3330 = vadd.f32 %v3329, %v2914
        %v3331 = vadd.f32 %v3330, %v2915
        %v3332 = vadd.f32 %v3331, %v2916
        %v3333 = vadd.f32 %v3332, %v2917
        %v3334 = vadd.f32 %v3333, %v2918
        %v3335 = vadd.f32 %v3334, %v2919
        %v3336 = vadd.f32 %v3335, %v2920
        %v3337 = vadd.f32 %v3336, %v2921
        %v3338 = vadd.f32 %v3337, %v2922
        %v3339 = vadd.f32 %v3338, %v2923
        %3340 = vadd.xlane.f32.xlu0 %v3339
        %v3341 = vpop.xlane.xlu0 %3340
        %v3342 = vadd.f32 %v2924, %v2925
        %v3343 = vadd.f32 %v3342, %v2926
        %v3344 = vadd.f32 %v3343, %v2927
        %v3345 = vadd.f32 %v3344, %v2928
        %v3346 = vadd.f32 %v3345, %v2929
        %v3347 = vadd.f32 %v3346, %v2930
        %v3348 = vadd.f32 %v3347, %v2931
        %v3349 = vadd.f32 %v3348, %v2932
        %v3350 = vadd.f32 %v3349, %v2933
        %v3351 = vadd.f32 %v3350, %v2934
        %v3352 = vadd.f32 %v3351, %v2935
        %v3353 = vadd.f32 %v3352, %v2936
        %3354 = vadd.xlane.f32.xlu0 %v3353
        %v3355 = vpop.xlane.xlu0 %3354
        %v3356 = vadd.f32 %v2937, %v2938
        %v3357 = vadd.f32 %v3356, %v2939
        %v3358 = vadd.f32 %v3357, %v2940
        %v3359 = vadd.f32 %v3358, %v2941
        %v3360 = vadd.f32 %v3359, %v2942
        %v3361 = vadd.f32 %v3360, %v2943
        %v3362 = vadd.f32 %v3361, %v2944
        %v3363 = vadd.f32 %v3362, %v2945
        %v3364 = vadd.f32 %v3363, %v2946
        %v3365 = vadd.f32 %v3364, %v2947
        %v3366 = vadd.f32 %v3365, %v2948
        %v3367 = vadd.f32 %v3366, %v2949
        %3368 = vadd.xlane.f32.xlu0 %v3367
        %v3369 = vpop.xlane.xlu0 %3368
        %v3370 = vadd.f32 %v2950, %v2951
        %v3371 = vadd.f32 %v3370, %v2952
        %v3372 = vadd.f32 %v3371, %v2953
        %v3373 = vadd.f32 %v3372, %v2954
        %v3374 = vadd.f32 %v3373, %v2955
        %v3375 = vadd.f32 %v3374, %v2956
        %v3376 = vadd.f32 %v3375, %v2957
        %v3377 = vadd.f32 %v3376, %v2958
        %v3378 = vadd.f32 %v3377, %v2959
        %v3379 = vadd.f32 %v3378, %v2960
        %v3380 = vadd.f32 %v3379, %v2961
        %v3381 = vadd.f32 %v3380, %v2962
        %3382 = vadd.xlane.f32.xlu0 %v3381
        %v3383 = vpop.xlane.xlu0 %3382
        %v3384 = vadd.f32 %v2963, %v2964
        %v3385 = vadd.f32 %v3384, %v2965
        %v3386 = vadd.f32 %v3385, %v2966
        %v3387 = vadd.f32 %v3386, %v2967
        %v3388 = vadd.f32 %v3387, %v2968
        %v3389 = vadd.f32 %v3388, %v2969
        %v3390 = vadd.f32 %v3389, %v2970
        %v3391 = vadd.f32 %v3390, %v2971
        %v3392 = vadd.f32 %v3391, %v2972
        %v3393 = vadd.f32 %v3392, %v2973
        %v3394 = vadd.f32 %v3393, %v2974
        %v3395 = vadd.f32 %v3394, %v2975
        %3396 = vadd.xlane.f32.xlu0 %v3395
        %v3397 = vpop.xlane.xlu0 %3396
        %v3398 = vadd.f32 %v2976, %v2977
        %v3399 = vadd.f32 %v3398, %v2978
        %v3400 = vadd.f32 %v3399, %v2979
        %v3401 = vadd.f32 %v3400, %v2980
        %v3402 = vadd.f32 %v3401, %v2981
        %v3403 = vadd.f32 %v3402, %v2982
        %v3404 = vadd.f32 %v3403, %v2983
        %v3405 = vadd.f32 %v3404, %v2984
        %v3406 = vadd.f32 %v3405, %v2985
        %v3407 = vadd.f32 %v3406, %v2986
        %v3408 = vadd.f32 %v3407, %v2987
        %v3409 = vadd.f32 %v3408, %v2988
        %3410 = vadd.xlane.f32.xlu0 %v3409
        %v3411 = vpop.xlane.xlu0 %3410
        %v3412 = vadd.f32 %v2989, %v2990
        %v3413 = vadd.f32 %v3412, %v2991
        %v3414 = vadd.f32 %v3413, %v2992
        %v3415 = vadd.f32 %v3414, %v2993
        %v3416 = vadd.f32 %v3415, %v2994
        %v3417 = vadd.f32 %v3416, %v2995
        %v3418 = vadd.f32 %v3417, %v2996
        %v3419 = vadd.f32 %v3418, %v2997
        %v3420 = vadd.f32 %v3419, %v2998
        %v3421 = vadd.f32 %v3420, %v2999
        %v3422 = vadd.f32 %v3421, %v3000
        %v3423 = vadd.f32 %v3422, %v3001
        %3424 = vadd.xlane.f32.xlu0 %v3423
        %v3425 = vpop.xlane.xlu0 %3424
        %v3426 = vadd.f32 %v3002, %v3003
        %v3427 = vadd.f32 %v3426, %v3004
        %v3428 = vadd.f32 %v3427, %v3005
        %v3429 = vadd.f32 %v3428, %v3006
        %v3430 = vadd.f32 %v3429, %v3007
        %v3431 = vadd.f32 %v3430, %v3008
        %v3432 = vadd.f32 %v3431, %v3009
        %v3433 = vadd.f32 %v3432, %v3010
        %v3434 = vadd.f32 %v3433, %v3011
        %v3435 = vadd.f32 %v3434, %v3012
        %v3436 = vadd.f32 %v3435, %v3013
        %v3437 = vadd.f32 %v3436, %v3014
        %3438 = vadd.xlane.f32.xlu0 %v3437
        %v3439 = vpop.xlane.xlu0 %3438
        %v3440 = vadd.f32 %v3015, %v3016
        %v3441 = vadd.f32 %v3440, %v3017
        %v3442 = vadd.f32 %v3441, %v3018
        %v3443 = vadd.f32 %v3442, %v3019
        %v3444 = vadd.f32 %v3443, %v3020
        %v3445 = vadd.f32 %v3444, %v3021
        %v3446 = vadd.f32 %v3445, %v3022
        %v3447 = vadd.f32 %v3446, %v3023
        %v3448 = vadd.f32 %v3447, %v3024
        %v3449 = vadd.f32 %v3448, %v3025
        %v3450 = vadd.f32 %v3449, %v3026
        %v3451 = vadd.f32 %v3450, %v3027
        %3452 = vadd.xlane.f32.xlu0 %v3451
        %v3453 = vpop.xlane.xlu0 %3452
        %v3454 = vadd.f32 %v3028, %v3029
        %v3455 = vadd.f32 %v3454, %v3030
        %v3456 = vadd.f32 %v3455, %v3031
        %v3457 = vadd.f32 %v3456, %v3032
        %v3458 = vadd.f32 %v3457, %v3033
        %v3459 = vadd.f32 %v3458, %v3034
        %v3460 = vadd.f32 %v3459, %v3035
        %v3461 = vadd.f32 %v3460, %v3036
        %v3462 = vadd.f32 %v3461, %v3037
        %v3463 = vadd.f32 %v3462, %v3038
        %v3464 = vadd.f32 %v3463, %v3039
        %v3465 = vadd.f32 %v3464, %v3040
        %3466 = vadd.xlane.f32.xlu0 %v3465
        %v3467 = vpop.xlane.xlu0 %3466
        %v3468 = vadd.f32 %v3041, %v3042
        %v3469 = vadd.f32 %v3468, %v3043
        %v3470 = vadd.f32 %v3469, %v3044
        %v3471 = vadd.f32 %v3470, %v3045
        %v3472 = vadd.f32 %v3471, %v3046
        %v3473 = vadd.f32 %v3472, %v3047
        %v3474 = vadd.f32 %v3473, %v3048
        %v3475 = vadd.f32 %v3474, %v3049
        %v3476 = vadd.f32 %v3475, %v3050
        %v3477 = vadd.f32 %v3476, %v3051
        %v3478 = vadd.f32 %v3477, %v3052
        %v3479 = vadd.f32 %v3478, %v3053
        %3480 = vadd.xlane.f32.xlu0 %v3479
        %v3481 = vpop.xlane.xlu0 %3480
        %v3482 = vadd.f32 %v3054, %v3055
        %v3483 = vadd.f32 %v3482, %v3056
        %v3484 = vadd.f32 %v3483, %v3057
        %v3485 = vadd.f32 %v3484, %v3058
        %v3486 = vadd.f32 %v3485, %v3059
        %v3487 = vadd.f32 %v3486, %v3060
        %v3488 = vadd.f32 %v3487, %v3061
        %v3489 = vadd.f32 %v3488, %v3062
        %v3490 = vadd.f32 %v3489, %v3063
        %v3491 = vadd.f32 %v3490, %v3064
        %v3492 = vadd.f32 %v3491, %v3065
        %v3493 = vadd.f32 %v3492, %v3066
        %3494 = vadd.xlane.f32.xlu0 %v3493
        %v3495 = vpop.xlane.xlu0 %3494
        %v3496 = vadd.f32 %v3067, %v3068
        %v3497 = vadd.f32 %v3496, %v3069
        %v3498 = vadd.f32 %v3497, %v3070
        %v3499 = vadd.f32 %v3498, %v3071
        %v3500 = vadd.f32 %v3499, %v3072
        %v3501 = vadd.f32 %v3500, %v3073
        %v3502 = vadd.f32 %v3501, %v3074
        %v3503 = vadd.f32 %v3502, %v3075
        %v3504 = vadd.f32 %v3503, %v3076
        %v3505 = vadd.f32 %v3504, %v3077
        %v3506 = vadd.f32 %v3505, %v3078
        %v3507 = vadd.f32 %v3506, %v3079
        %3508 = vadd.xlane.f32.xlu0 %v3507
        %v3509 = vpop.xlane.xlu0 %3508
        %v3510 = vadd.f32 %v3080, %v3081
        %v3511 = vadd.f32 %v3510, %v3082
        %v3512 = vadd.f32 %v3511, %v3083
        %v3513 = vadd.f32 %v3512, %v3084
        %v3514 = vadd.f32 %v3513, %v3085
        %v3515 = vadd.f32 %v3514, %v3086
        %v3516 = vadd.f32 %v3515, %v3087
        %v3517 = vadd.f32 %v3516, %v3088
        %v3518 = vadd.f32 %v3517, %v3089
        %v3519 = vadd.f32 %v3518, %v3090
        %v3520 = vadd.f32 %v3519, %v3091
        %v3521 = vadd.f32 %v3520, %v3092
        %3522 = vadd.xlane.f32.xlu0 %v3521
        %v3523 = vpop.xlane.xlu0 %3522
        %v3524 = vadd.f32 %v3093, %v3094
        %v3525 = vadd.f32 %v3524, %v3095
        %v3526 = vadd.f32 %v3525, %v3096
        %v3527 = vadd.f32 %v3526, %v3097
        %v3528 = vadd.f32 %v3527, %v3098
        %v3529 = vadd.f32 %v3528, %v3099
        %v3530 = vadd.f32 %v3529, %v3100
        %v3531 = vadd.f32 %v3530, %v3101
        %v3532 = vadd.f32 %v3531, %v3102
        %v3533 = vadd.f32 %v3532, %v3103
        %v3534 = vadd.f32 %v3533, %v3104
        %v3535 = vadd.f32 %v3534, %v3105
        %3536 = vadd.xlane.f32.xlu0 %v3535
        %v3537 = vpop.xlane.xlu0 %3536
        %v3538 = vadd.f32 %v3106, %v3107
        %v3539 = vadd.f32 %v3538, %v3108
        %v3540 = vadd.f32 %v3539, %v3109
        %v3541 = vadd.f32 %v3540, %v3110
        %v3542 = vadd.f32 %v3541, %v3111
        %v3543 = vadd.f32 %v3542, %v3112
        %v3544 = vadd.f32 %v3543, %v3113
        %v3545 = vadd.f32 %v3544, %v3114
        %v3546 = vadd.f32 %v3545, %v3115
        %v3547 = vadd.f32 %v3546, %v3116
        %v3548 = vadd.f32 %v3547, %v3117
        %v3549 = vadd.f32 %v3548, %v3118
        %3550 = vadd.xlane.f32.xlu0 %v3549
        %v3551 = vpop.xlane.xlu0 %3550
        %v3552 = vadd.f32 %v3119, %v3120
        %v3553 = vadd.f32 %v3552, %v3121
        %v3554 = vadd.f32 %v3553, %v3122
        %v3555 = vadd.f32 %v3554, %v3123
        %v3556 = vadd.f32 %v3555, %v3124
        %v3557 = vadd.f32 %v3556, %v3125
        %v3558 = vadd.f32 %v3557, %v3126
        %v3559 = vadd.f32 %v3558, %v3127
        %v3560 = vadd.f32 %v3559, %v3128
        %v3561 = vadd.f32 %v3560, %v3129
        %v3562 = vadd.f32 %v3561, %v3130
        %v3563 = vadd.f32 %v3562, %v3131
        %3564 = vadd.xlane.f32.xlu0 %v3563
        %v3565 = vpop.xlane.xlu0 %3564
        %v3566 = vadd.f32 %v3132, %v3133
        %v3567 = vadd.f32 %v3566, %v3134
        %v3568 = vadd.f32 %v3567, %v3135
        %v3569 = vadd.f32 %v3568, %v3136
        %v3570 = vadd.f32 %v3569, %v3137
        %v3571 = vadd.f32 %v3570, %v3138
        %v3572 = vadd.f32 %v3571, %v3139
        %v3573 = vadd.f32 %v3572, %v3140
        %v3574 = vadd.f32 %v3573, %v3141
        %v3575 = vadd.f32 %v3574, %v3142
        %v3576 = vadd.f32 %v3575, %v3143
        %v3577 = vadd.f32 %v3576, %v3144
        %3578 = vadd.xlane.f32.xlu0 %v3577
        %v3579 = vpop.xlane.xlu0 %3578
        %v3580 = vadd.f32 %v3145, %v3146
        %v3581 = vadd.f32 %v3580, %v3147
        %v3582 = vadd.f32 %v3581, %v3148
        %v3583 = vadd.f32 %v3582, %v3149
        %v3584 = vadd.f32 %v3583, %v3150
        %v3585 = vadd.f32 %v3584, %v3151
        %v3586 = vadd.f32 %v3585, %v3152
        %v3587 = vadd.f32 %v3586, %v3153
        %v3588 = vadd.f32 %v3587, %v3154
        %v3589 = vadd.f32 %v3588, %v3155
        %v3590 = vadd.f32 %v3589, %v3156
        %v3591 = vadd.f32 %v3590, %v3157
        %3592 = vadd.xlane.f32.xlu0 %v3591
        %v3593 = vpop.xlane.xlu0 %3592
        %v3594 = vadd.f32 %v3158, %v3159
        %v3595 = vadd.f32 %v3594, %v3160
        %v3596 = vadd.f32 %v3595, %v3161
        %v3597 = vadd.f32 %v3596, %v3162
        %v3598 = vadd.f32 %v3597, %v3163
        %v3599 = vadd.f32 %v3598, %v3164
        %v3600 = vadd.f32 %v3599, %v3165
        %v3601 = vadd.f32 %v3600, %v3166
        %v3602 = vadd.f32 %v3601, %v3167
        %v3603 = vadd.f32 %v3602, %v3168
        %v3604 = vadd.f32 %v3603, %v3169
        %v3605 = vadd.f32 %v3604, %v3170
        %3606 = vadd.xlane.f32.xlu0 %v3605
        %v3607 = vpop.xlane.xlu0 %3606
        %v3608 = vadd.f32 %v3171, %v3172
        %v3609 = vadd.f32 %v3608, %v3173
        %v3610 = vadd.f32 %v3609, %v3174
        %v3611 = vadd.f32 %v3610, %v3175
        %v3612 = vadd.f32 %v3611, %v3176
        %v3613 = vadd.f32 %v3612, %v3177
        %v3614 = vadd.f32 %v3613, %v3178
        %v3615 = vadd.f32 %v3614, %v3179
        %v3616 = vadd.f32 %v3615, %v3180
        %v3617 = vadd.f32 %v3616, %v3181
        %v3618 = vadd.f32 %v3617, %v3182
        %v3619 = vadd.f32 %v3618, %v3183
        %3620 = vadd.xlane.f32.xlu0 %v3619
        %v3621 = vpop.xlane.xlu0 %3620
        %v3622 = vadd.f32 %v3184, %v3185
        %v3623 = vadd.f32 %v3622, %v3186
        %v3624 = vadd.f32 %v3623, %v3187
        %v3625 = vadd.f32 %v3624, %v3188
        %v3626 = vadd.f32 %v3625, %v3189
        %v3627 = vadd.f32 %v3626, %v3190
        %v3628 = vadd.f32 %v3627, %v3191
        %v3629 = vadd.f32 %v3628, %v3192
        %v3630 = vadd.f32 %v3629, %v3193
        %v3631 = vadd.f32 %v3630, %v3194
        %v3632 = vadd.f32 %v3631, %v3195
        %v3633 = vadd.f32 %v3632, %v3196
        %3634 = vadd.xlane.f32.xlu0 %v3633
        %v3635 = vpop.xlane.xlu0 %3634
        %v3636 = vadd.f32 %v3197, %v3198
        %v3637 = vadd.f32 %v3636, %v3199
        %v3638 = vadd.f32 %v3637, %v3200
        %v3639 = vadd.f32 %v3638, %v3201
        %v3640 = vadd.f32 %v3639, %v3202
        %v3641 = vadd.f32 %v3640, %v3203
        %v3642 = vadd.f32 %v3641, %v3204
        %v3643 = vadd.f32 %v3642, %v3205
        %v3644 = vadd.f32 %v3643, %v3206
        %v3645 = vadd.f32 %v3644, %v3207
        %v3646 = vadd.f32 %v3645, %v3208
        %v3647 = vadd.f32 %v3646, %v3209
        %3648 = vadd.xlane.f32.xlu0 %v3647
        %v3649 = vpop.xlane.xlu0 %3648
        %v3650 = vadd.f32 %v3210, %v3211
        %v3651 = vadd.f32 %v3650, %v3212
        %v3652 = vadd.f32 %v3651, %v3213
        %v3653 = vadd.f32 %v3652, %v3214
        %v3654 = vadd.f32 %v3653, %v3215
        %v3655 = vadd.f32 %v3654, %v3216
        %v3656 = vadd.f32 %v3655, %v3217
        %v3657 = vadd.f32 %v3656, %v3218
        %v3658 = vadd.f32 %v3657, %v3219
        %v3659 = vadd.f32 %v3658, %v3220
        %v3660 = vadd.f32 %v3659, %v3221
        %v3661 = vadd.f32 %v3660, %v3222
        %3662 = vadd.xlane.f32.xlu0 %v3661
        %v3663 = vpop.xlane.xlu0 %3662
        %v3664 = vadd.f32 %v3223, %v3224
        %v3665 = vadd.f32 %v3664, %v3225
        %v3666 = vadd.f32 %v3665, %v3226
        %v3667 = vadd.f32 %v3666, %v3227
        %v3668 = vadd.f32 %v3667, %v3228
        %v3669 = vadd.f32 %v3668, %v3229
        %v3670 = vadd.f32 %v3669, %v3230
        %v3671 = vadd.f32 %v3670, %v3231
        %v3672 = vadd.f32 %v3671, %v3232
        %v3673 = vadd.f32 %v3672, %v3233
        %v3674 = vadd.f32 %v3673, %v3234
        %v3675 = vadd.f32 %v3674, %v3235
        %3676 = vadd.xlane.f32.xlu0 %v3675
        %v3677 = vpop.xlane.xlu0 %3676
        %v3678 = vadd.f32 %v3236, %v3237
        %v3679 = vadd.f32 %v3678, %v3238
        %v3680 = vadd.f32 %v3679, %v3239
        %v3681 = vadd.f32 %v3680, %v3240
        %v3682 = vadd.f32 %v3681, %v3241
        %v3683 = vadd.f32 %v3682, %v3242
        %v3684 = vadd.f32 %v3683, %v3243
        %v3685 = vadd.f32 %v3684, %v3244
        %v3686 = vadd.f32 %v3685, %v3245
        %v3687 = vadd.f32 %v3686, %v3246
        %v3688 = vadd.f32 %v3687, %v3247
        %v3689 = vadd.f32 %v3688, %v3248
        %3690 = vadd.xlane.f32.xlu0 %v3689
        %v3691 = vpop.xlane.xlu0 %3690
        %v3692 = vadd.f32 %v3249, %v3250
        %v3693 = vadd.f32 %v3692, %v3251
        %v3694 = vadd.f32 %v3693, %v3252
        %v3695 = vadd.f32 %v3694, %v3253
        %v3696 = vadd.f32 %v3695, %v3254
        %v3697 = vadd.f32 %v3696, %v3255
        %v3698 = vadd.f32 %v3697, %v3256
        %v3699 = vadd.f32 %v3698, %v3257
        %v3700 = vadd.f32 %v3699, %v3258
        %v3701 = vadd.f32 %v3700, %v3259
        %v3702 = vadd.f32 %v3701, %v3260
        %v3703 = vadd.f32 %v3702, %v3261
        %3704 = vadd.xlane.f32.xlu0 %v3703
        %v3705 = vpop.xlane.xlu0 %3704
        %v3706 = vadd.f32 %v3262, %v3263
        %v3707 = vadd.f32 %v3706, %v3264
        %v3708 = vadd.f32 %v3707, %v3265
        %v3709 = vadd.f32 %v3708, %v3266
        %v3710 = vadd.f32 %v3709, %v3267
        %v3711 = vadd.f32 %v3710, %v3268
        %v3712 = vadd.f32 %v3711, %v3269
        %v3713 = vadd.f32 %v3712, %v3270
        %v3714 = vadd.f32 %v3713, %v3271
        %v3715 = vadd.f32 %v3714, %v3272
        %v3716 = vadd.f32 %v3715, %v3273
        %v3717 = vadd.f32 %v3716, %v3274
        %3718 = vadd.xlane.f32.xlu0 %v3717
        %v3719 = vpop.xlane.xlu0 %3718
        %v3720 = vadd.f32 %v3275, %v3276
        %v3721 = vadd.f32 %v3720, %v3277
        %v3722 = vadd.f32 %v3721, %v3278
        %v3723 = vadd.f32 %v3722, %v3279
        %v3724 = vadd.f32 %v3723, %v3280
        %v3725 = vadd.f32 %v3724, %v3281
        %v3726 = vadd.f32 %v3725, %v3282
        %v3727 = vadd.f32 %v3726, %v3283
        %v3728 = vadd.f32 %v3727, %v3284
        %v3729 = vadd.f32 %v3728, %v3285
        %v3730 = vadd.f32 %v3729, %v3286
        %v3731 = vadd.f32 %v3730, %v3287
        %3732 = vadd.xlane.f32.xlu0 %v3731
        %v3733 = vpop.xlane.xlu0 %3732
        %v3734 = vadd.f32 %v3288, %v3289
        %v3735 = vadd.f32 %v3734, %v3290
        %v3736 = vadd.f32 %v3735, %v3291
        %v3737 = vadd.f32 %v3736, %v3292
        %v3738 = vadd.f32 %v3737, %v3293
        %v3739 = vadd.f32 %v3738, %v3294
        %v3740 = vadd.f32 %v3739, %v3295
        %v3741 = vadd.f32 %v3740, %v3296
        %v3742 = vadd.f32 %v3741, %v3297
        %v3743 = vadd.f32 %v3742, %v3298
        %v3744 = vadd.f32 %v3743, %v3299
        %v3745 = vadd.f32 %v3744, %v3300
        %3746 = vadd.xlane.f32.xlu0 %v3745
        %v3747 = vpop.xlane.xlu0 %3746
        %v3748 = vadd.f32 %v3301, %v3302
        %v3749 = vadd.f32 %v3748, %v3303
        %v3750 = vadd.f32 %v3749, %v3304
        %v3751 = vadd.f32 %v3750, %v3305
        %v3752 = vadd.f32 %v3751, %v3306
        %v3753 = vadd.f32 %v3752, %v3307
        %v3754 = vadd.f32 %v3753, %v3308
        %v3755 = vadd.f32 %v3754, %v3309
        %v3756 = vadd.f32 %v3755, %v3310
        %v3757 = vadd.f32 %v3756, %v3311
        %v3758 = vadd.f32 %v3757, %v3312
        %v3759 = vadd.f32 %v3758, %v3313
        %3760 = vadd.xlane.f32.xlu0 %v3759
        %v3761 = vpop.xlane.xlu0 %3760
        %v3762 = vmul.f32 %v3327, %v2208
        %v3763 = vmul.f32 %v3341, %v2209
        %v3764 = vmul.f32 %v3355, %v2210
        %v3765 = vmul.f32 %v3369, %v2211
        %v3766 = vmul.f32 %v3383, %v2212
        %v3767 = vmul.f32 %v3397, %v2213
        %v3768 = vmul.f32 %v3411, %v2214
        %v3769 = vmul.f32 %v3425, %v2215
        %v3770 = vmul.f32 %v3439, %v2216
        %v3771 = vmul.f32 %v3453, %v2217
        %v3772 = vmul.f32 %v3467, %v2218
        %v3773 = vmul.f32 %v3481, %v2219
        %v3774 = vmul.f32 %v3495, %v2220
        %v3775 = vmul.f32 %v3509, %v2221
        %v3776 = vmul.f32 %v3523, %v2222
        %v3777 = vmul.f32 %v3537, %v2223
        %v3778 = vmul.f32 %v3551, %v2224
        %v3779 = vmul.f32 %v3565, %v2225
        %v3780 = vmul.f32 %v3579, %v2226
        %v3781 = vmul.f32 %v3593, %v2227
        %v3782 = vmul.f32 %v3607, %v2228
        %v3783 = vmul.f32 %v3621, %v2229
        %v3784 = vmul.f32 %v3635, %v2230
        %v3785 = vmul.f32 %v3649, %v2231
        %v3786 = vmul.f32 %v3663, %v2232
        %v3787 = vmul.f32 %v3677, %v2233
        %v3788 = vmul.f32 %v3691, %v2234
        %v3789 = vmul.f32 %v3705, %v2235
        %v3790 = vmul.f32 %v3719, %v2236
        %v3791 = vmul.f32 %v3733, %v2237
        %v3792 = vmul.f32 %v3747, %v2238
        %v3793 = vmul.f32 %v3761, %v2239
        %s3794 = scalar_lea.vmem %s5, 1
        %v3795 = vld [vmem:[%s3794] ss:$2 sm:$0xff]
        %s3796 = scalar_lea.vmem %s5, 17
        %v3797 = vld [vmem:[%s3796] ss:$2 sm:$0x1f]
        %v3800 = vlaneseq
        %v3801 = vshrl.u32 %v3800, 7
        %v3802 = vsub.s32 0, %v3801
        %v3803 = vrot.slane %v3795, %v3802
        %v3804 = vlaneseq
        %v3805 = vshrl.u32 %v3804, 7
        %v3806 = vsub.s32 1, %v3805
        %v3807 = vrot.slane %v3795, %v3806
        %v3808 = vlaneseq
        %v3809 = vshrl.u32 %v3808, 7
        %v3810 = vsub.s32 2, %v3809
        %v3811 = vrot.slane %v3795, %v3810
        %v3812 = vlaneseq
        %v3813 = vshrl.u32 %v3812, 7
        %v3814 = vsub.s32 3, %v3813
        %v3815 = vrot.slane %v3795, %v3814
        %v3816 = vlaneseq
        %v3817 = vshrl.u32 %v3816, 7
        %v3818 = vsub.s32 4, %v3817
        %v3819 = vrot.slane %v3795, %v3818
        %v3820 = vlaneseq
        %v3821 = vshrl.u32 %v3820, 7
        %v3822 = vsub.s32 5, %v3821
        %v3823 = vrot.slane %v3795, %v3822
        %v3824 = vlaneseq
        %v3825 = vshrl.u32 %v3824, 7
        %v3826 = vsub.s32 6, %v3825
        %v3827 = vrot.slane %v3795, %v3826
        %v3828 = vlaneseq
        %v3829 = vshrl.u32 %v3828, 7
        %v3830 = vsub.s32 7, %v3829
        %v3831 = vrot.slane %v3795, %v3830
        %v3832 = vlaneseq
        %v3833 = vshrl.u32 %v3832, 7
        %v3834 = vsub.s32 0, %v3833
        %v3835 = vrot.slane %v3797, %v3834
        %v3836 = vlaneseq
        %v3837 = vshrl.u32 %v3836, 7
        %v3838 = vsub.s32 1, %v3837
        %v3839 = vrot.slane %v3797, %v3838
        %v3840 = vlaneseq
        %v3841 = vshrl.u32 %v3840, 7
        %v3842 = vsub.s32 2, %v3841
        %v3843 = vrot.slane %v3797, %v3842
        %v3844 = vlaneseq
        %v3845 = vshrl.u32 %v3844, 7
        %v3846 = vsub.s32 3, %v3845
        %v3847 = vrot.slane %v3797, %v3846
        %v3848 = vlaneseq
        %v3849 = vshrl.u32 %v3848, 7
        %v3850 = vsub.s32 4, %v3849
        %v3851 = vrot.slane %v3797, %v3850
        %v3865 = vsel %vm2412, %v3803, 0.0
        %v3866 = vsel %vm2413, %v3807, 0.0
        %v3867 = vsel %vm2414, %v3811, 0.0
        %v3868 = vsel %vm2415, %v3815, 0.0
        %v3869 = vsel %vm2416, %v3819, 0.0
        %v3870 = vsel %vm2417, %v3823, 0.0
        %v3871 = vsel %vm2418, %v3827, 0.0
        %v3872 = vsel %vm2419, %v3831, 0.0
        %v3873 = vsel %vm2420, %v3835, 0.0
        %v3874 = vsel %vm2421, %v3839, 0.0
        %v3875 = vsel %vm2422, %v3843, 0.0
        %v3876 = vsel %vm2423, %v3847, 0.0
        %v3877 = vsel %vm2424, %v3851, 0.0
        %v3878 = vsel %vm2425, %v3803, 0.0
        %v3879 = vsel %vm2426, %v3807, 0.0
        %v3880 = vsel %vm2427, %v3811, 0.0
        %v3881 = vsel %vm2428, %v3815, 0.0
        %v3882 = vsel %vm2429, %v3819, 0.0
        %v3883 = vsel %vm2430, %v3823, 0.0
        %v3884 = vsel %vm2431, %v3827, 0.0
        %v3885 = vsel %vm2432, %v3831, 0.0
        %v3886 = vsel %vm2433, %v3835, 0.0
        %v3887 = vsel %vm2434, %v3839, 0.0
        %v3888 = vsel %vm2435, %v3843, 0.0
        %v3889 = vsel %vm2436, %v3847, 0.0
        %v3890 = vsel %vm2437, %v3851, 0.0
        %v3891 = vsel %vm2438, %v3803, 0.0
        %v3892 = vsel %vm2439, %v3807, 0.0
        %v3893 = vsel %vm2440, %v3811, 0.0
        %v3894 = vsel %vm2441, %v3815, 0.0
        %v3895 = vsel %vm2442, %v3819, 0.0
        %v3896 = vsel %vm2443, %v3823, 0.0
        %v3897 = vsel %vm2444, %v3827, 0.0
        %v3898 = vsel %vm2445, %v3831, 0.0
        %v3899 = vsel %vm2446, %v3835, 0.0
        %v3900 = vsel %vm2447, %v3839, 0.0
        %v3901 = vsel %vm2448, %v3843, 0.0
        %v3902 = vsel %vm2449, %v3847, 0.0
        %v3903 = vsel %vm2450, %v3851, 0.0
        %v3904 = vsel %vm2451, %v3803, 0.0
        %v3905 = vsel %vm2452, %v3807, 0.0
        %v3906 = vsel %vm2453, %v3811, 0.0
        %v3907 = vsel %vm2454, %v3815, 0.0
        %v3908 = vsel %vm2455, %v3819, 0.0
        %v3909 = vsel %vm2456, %v3823, 0.0
        %v3910 = vsel %vm2457, %v3827, 0.0
        %v3911 = vsel %vm2458, %v3831, 0.0
        %v3912 = vsel %vm2459, %v3835, 0.0
        %v3913 = vsel %vm2460, %v3839, 0.0
        %v3914 = vsel %vm2461, %v3843, 0.0
        %v3915 = vsel %vm2462, %v3847, 0.0
        %v3916 = vsel %vm2463, %v3851, 0.0
        %v3917 = vsel %vm2464, %v3803, 0.0
        %v3918 = vsel %vm2465, %v3807, 0.0
        %v3919 = vsel %vm2466, %v3811, 0.0
        %v3920 = vsel %vm2467, %v3815, 0.0
        %v3921 = vsel %vm2468, %v3819, 0.0
        %v3922 = vsel %vm2469, %v3823, 0.0
        %v3923 = vsel %vm2470, %v3827, 0.0
        %v3924 = vsel %vm2471, %v3831, 0.0
        %v3925 = vsel %vm2472, %v3835, 0.0
        %v3926 = vsel %vm2473, %v3839, 0.0
        %v3927 = vsel %vm2474, %v3843, 0.0
        %v3928 = vsel %vm2475, %v3847, 0.0
        %v3929 = vsel %vm2476, %v3851, 0.0
        %v3930 = vsel %vm2477, %v3803, 0.0
        %v3931 = vsel %vm2478, %v3807, 0.0
        %v3932 = vsel %vm2479, %v3811, 0.0
        %v3933 = vsel %vm2480, %v3815, 0.0
        %v3934 = vsel %vm2481, %v3819, 0.0
        %v3935 = vsel %vm2482, %v3823, 0.0
        %v3936 = vsel %vm2483, %v3827, 0.0
        %v3937 = vsel %vm2484, %v3831, 0.0
        %v3938 = vsel %vm2485, %v3835, 0.0
        %v3939 = vsel %vm2486, %v3839, 0.0
        %v3940 = vsel %vm2487, %v3843, 0.0
        %v3941 = vsel %vm2488, %v3847, 0.0
        %v3942 = vsel %vm2489, %v3851, 0.0
        %v3943 = vsel %vm2490, %v3803, 0.0
        %v3944 = vsel %vm2491, %v3807, 0.0
        %v3945 = vsel %vm2492, %v3811, 0.0
        %v3946 = vsel %vm2493, %v3815, 0.0
        %v3947 = vsel %vm2494, %v3819, 0.0
        %v3948 = vsel %vm2495, %v3823, 0.0
        %v3949 = vsel %vm2496, %v3827, 0.0
        %v3950 = vsel %vm2497, %v3831, 0.0
        %v3951 = vsel %vm2498, %v3835, 0.0
        %v3952 = vsel %vm2499, %v3839, 0.0
        %v3953 = vsel %vm2500, %v3843, 0.0
        %v3954 = vsel %vm2501, %v3847, 0.0
        %v3955 = vsel %vm2502, %v3851, 0.0
        %v3956 = vsel %vm2503, %v3803, 0.0
        %v3957 = vsel %vm2504, %v3807, 0.0
        %v3958 = vsel %vm2505, %v3811, 0.0
        %v3959 = vsel %vm2506, %v3815, 0.0
        %v3960 = vsel %vm2507, %v3819, 0.0
        %v3961 = vsel %vm2508, %v3823, 0.0
        %v3962 = vsel %vm2509, %v3827, 0.0
        %v3963 = vsel %vm2510, %v3831, 0.0
        %v3964 = vsel %vm2511, %v3835, 0.0
        %v3965 = vsel %vm2512, %v3839, 0.0
        %v3966 = vsel %vm2513, %v3843, 0.0
        %v3967 = vsel %vm2514, %v3847, 0.0
        %v3968 = vsel %vm2515, %v3851, 0.0
        %v3969 = vsel %vm2516, %v3803, 0.0
        %v3970 = vsel %vm2517, %v3807, 0.0
        %v3971 = vsel %vm2518, %v3811, 0.0
        %v3972 = vsel %vm2519, %v3815, 0.0
        %v3973 = vsel %vm2520, %v3819, 0.0
        %v3974 = vsel %vm2521, %v3823, 0.0
        %v3975 = vsel %vm2522, %v3827, 0.0
        %v3976 = vsel %vm2523, %v3831, 0.0
        %v3977 = vsel %vm2524, %v3835, 0.0
        %v3978 = vsel %vm2525, %v3839, 0.0
        %v3979 = vsel %vm2526, %v3843, 0.0
        %v3980 = vsel %vm2527, %v3847, 0.0
        %v3981 = vsel %vm2528, %v3851, 0.0
        %v3982 = vsel %vm2529, %v3803, 0.0
        %v3983 = vsel %vm2530, %v3807, 0.0
        %v3984 = vsel %vm2531, %v3811, 0.0
        %v3985 = vsel %vm2532, %v3815, 0.0
        %v3986 = vsel %vm2533, %v3819, 0.0
        %v3987 = vsel %vm2534, %v3823, 0.0
        %v3988 = vsel %vm2535, %v3827, 0.0
        %v3989 = vsel %vm2536, %v3831, 0.0
        %v3990 = vsel %vm2537, %v3835, 0.0
        %v3991 = vsel %vm2538, %v3839, 0.0
        %v3992 = vsel %vm2539, %v3843, 0.0
        %v3993 = vsel %vm2540, %v3847, 0.0
        %v3994 = vsel %vm2541, %v3851, 0.0
        %v3995 = vsel %vm2542, %v3803, 0.0
        %v3996 = vsel %vm2543, %v3807, 0.0
        %v3997 = vsel %vm2544, %v3811, 0.0
        %v3998 = vsel %vm2545, %v3815, 0.0
        %v3999 = vsel %vm2546, %v3819, 0.0
        %v4000 = vsel %vm2547, %v3823, 0.0
        %v4001 = vsel %vm2548, %v3827, 0.0
        %v4002 = vsel %vm2549, %v3831, 0.0
        %v4003 = vsel %vm2550, %v3835, 0.0
        %v4004 = vsel %vm2551, %v3839, 0.0
        %v4005 = vsel %vm2552, %v3843, 0.0
        %v4006 = vsel %vm2553, %v3847, 0.0
        %v4007 = vsel %vm2554, %v3851, 0.0
        %v4008 = vsel %vm2555, %v3803, 0.0
        %v4009 = vsel %vm2556, %v3807, 0.0
        %v4010 = vsel %vm2557, %v3811, 0.0
        %v4011 = vsel %vm2558, %v3815, 0.0
        %v4012 = vsel %vm2559, %v3819, 0.0
        %v4013 = vsel %vm2560, %v3823, 0.0
        %v4014 = vsel %vm2561, %v3827, 0.0
        %v4015 = vsel %vm2562, %v3831, 0.0
        %v4016 = vsel %vm2563, %v3835, 0.0
        %v4017 = vsel %vm2564, %v3839, 0.0
        %v4018 = vsel %vm2565, %v3843, 0.0
        %v4019 = vsel %vm2566, %v3847, 0.0
        %v4020 = vsel %vm2567, %v3851, 0.0
        %v4021 = vsel %vm2568, %v3803, 0.0
        %v4022 = vsel %vm2569, %v3807, 0.0
        %v4023 = vsel %vm2570, %v3811, 0.0
        %v4024 = vsel %vm2571, %v3815, 0.0
        %v4025 = vsel %vm2572, %v3819, 0.0
        %v4026 = vsel %vm2573, %v3823, 0.0
        %v4027 = vsel %vm2574, %v3827, 0.0
        %v4028 = vsel %vm2575, %v3831, 0.0
        %v4029 = vsel %vm2576, %v3835, 0.0
        %v4030 = vsel %vm2577, %v3839, 0.0
        %v4031 = vsel %vm2578, %v3843, 0.0
        %v4032 = vsel %vm2579, %v3847, 0.0
        %v4033 = vsel %vm2580, %v3851, 0.0
        %v4034 = vsel %vm2581, %v3803, 0.0
        %v4035 = vsel %vm2582, %v3807, 0.0
        %v4036 = vsel %vm2583, %v3811, 0.0
        %v4037 = vsel %vm2584, %v3815, 0.0
        %v4038 = vsel %vm2585, %v3819, 0.0
        %v4039 = vsel %vm2586, %v3823, 0.0
        %v4040 = vsel %vm2587, %v3827, 0.0
        %v4041 = vsel %vm2588, %v3831, 0.0
        %v4042 = vsel %vm2589, %v3835, 0.0
        %v4043 = vsel %vm2590, %v3839, 0.0
        %v4044 = vsel %vm2591, %v3843, 0.0
        %v4045 = vsel %vm2592, %v3847, 0.0
        %v4046 = vsel %vm2593, %v3851, 0.0
        %v4047 = vsel %vm2594, %v3803, 0.0
        %v4048 = vsel %vm2595, %v3807, 0.0
        %v4049 = vsel %vm2596, %v3811, 0.0
        %v4050 = vsel %vm2597, %v3815, 0.0
        %v4051 = vsel %vm2598, %v3819, 0.0
        %v4052 = vsel %vm2599, %v3823, 0.0
        %v4053 = vsel %vm2600, %v3827, 0.0
        %v4054 = vsel %vm2601, %v3831, 0.0
        %v4055 = vsel %vm2602, %v3835, 0.0
        %v4056 = vsel %vm2603, %v3839, 0.0
        %v4057 = vsel %vm2604, %v3843, 0.0
        %v4058 = vsel %vm2605, %v3847, 0.0
        %v4059 = vsel %vm2606, %v3851, 0.0
        %v4060 = vsel %vm2607, %v3803, 0.0
        %v4061 = vsel %vm2608, %v3807, 0.0
        %v4062 = vsel %vm2609, %v3811, 0.0
        %v4063 = vsel %vm2610, %v3815, 0.0
        %v4064 = vsel %vm2611, %v3819, 0.0
        %v4065 = vsel %vm2612, %v3823, 0.0
        %v4066 = vsel %vm2613, %v3827, 0.0
        %v4067 = vsel %vm2614, %v3831, 0.0
        %v4068 = vsel %vm2615, %v3835, 0.0
        %v4069 = vsel %vm2616, %v3839, 0.0
        %v4070 = vsel %vm2617, %v3843, 0.0
        %v4071 = vsel %vm2618, %v3847, 0.0
        %v4072 = vsel %vm2619, %v3851, 0.0
        %v4073 = vsel %vm2620, %v3803, 0.0
        %v4074 = vsel %vm2621, %v3807, 0.0
        %v4075 = vsel %vm2622, %v3811, 0.0
        %v4076 = vsel %vm2623, %v3815, 0.0
        %v4077 = vsel %vm2624, %v3819, 0.0
        %v4078 = vsel %vm2625, %v3823, 0.0
        %v4079 = vsel %vm2626, %v3827, 0.0
        %v4080 = vsel %vm2627, %v3831, 0.0
        %v4081 = vsel %vm2628, %v3835, 0.0
        %v4082 = vsel %vm2629, %v3839, 0.0
        %v4083 = vsel %vm2630, %v3843, 0.0
        %v4084 = vsel %vm2631, %v3847, 0.0
        %v4085 = vsel %vm2632, %v3851, 0.0
        %v4086 = vsel %vm2633, %v3803, 0.0
        %v4087 = vsel %vm2634, %v3807, 0.0
        %v4088 = vsel %vm2635, %v3811, 0.0
        %v4089 = vsel %vm2636, %v3815, 0.0
        %v4090 = vsel %vm2637, %v3819, 0.0
        %v4091 = vsel %vm2638, %v3823, 0.0
        %v4092 = vsel %vm2639, %v3827, 0.0
        %v4093 = vsel %vm2640, %v3831, 0.0
        %v4094 = vsel %vm2641, %v3835, 0.0
        %v4095 = vsel %vm2642, %v3839, 0.0
        %v4096 = vsel %vm2643, %v3843, 0.0
        %v4097 = vsel %vm2644, %v3847, 0.0
        %v4098 = vsel %vm2645, %v3851, 0.0
        %v4099 = vsel %vm2646, %v3803, 0.0
        %v4100 = vsel %vm2647, %v3807, 0.0
        %v4101 = vsel %vm2648, %v3811, 0.0
        %v4102 = vsel %vm2649, %v3815, 0.0
        %v4103 = vsel %vm2650, %v3819, 0.0
        %v4104 = vsel %vm2651, %v3823, 0.0
        %v4105 = vsel %vm2652, %v3827, 0.0
        %v4106 = vsel %vm2653, %v3831, 0.0
        %v4107 = vsel %vm2654, %v3835, 0.0
        %v4108 = vsel %vm2655, %v3839, 0.0
        %v4109 = vsel %vm2656, %v3843, 0.0
        %v4110 = vsel %vm2657, %v3847, 0.0
        %v4111 = vsel %vm2658, %v3851, 0.0
        %v4112 = vsel %vm2659, %v3803, 0.0
        %v4113 = vsel %vm2660, %v3807, 0.0
        %v4114 = vsel %vm2661, %v3811, 0.0
        %v4115 = vsel %vm2662, %v3815, 0.0
        %v4116 = vsel %vm2663, %v3819, 0.0
        %v4117 = vsel %vm2664, %v3823, 0.0
        %v4118 = vsel %vm2665, %v3827, 0.0
        %v4119 = vsel %vm2666, %v3831, 0.0
        %v4120 = vsel %vm2667, %v3835, 0.0
        %v4121 = vsel %vm2668, %v3839, 0.0
        %v4122 = vsel %vm2669, %v3843, 0.0
        %v4123 = vsel %vm2670, %v3847, 0.0
        %v4124 = vsel %vm2671, %v3851, 0.0
        %v4125 = vsel %vm2672, %v3803, 0.0
        %v4126 = vsel %vm2673, %v3807, 0.0
        %v4127 = vsel %vm2674, %v3811, 0.0
        %v4128 = vsel %vm2675, %v3815, 0.0
        %v4129 = vsel %vm2676, %v3819, 0.0
        %v4130 = vsel %vm2677, %v3823, 0.0
        %v4131 = vsel %vm2678, %v3827, 0.0
        %v4132 = vsel %vm2679, %v3831, 0.0
        %v4133 = vsel %vm2680, %v3835, 0.0
        %v4134 = vsel %vm2681, %v3839, 0.0
        %v4135 = vsel %vm2682, %v3843, 0.0
        %v4136 = vsel %vm2683, %v3847, 0.0
        %v4137 = vsel %vm2684, %v3851, 0.0
        %v4138 = vsel %vm2685, %v3803, 0.0
        %v4139 = vsel %vm2686, %v3807, 0.0
        %v4140 = vsel %vm2687, %v3811, 0.0
        %v4141 = vsel %vm2688, %v3815, 0.0
        %v4142 = vsel %vm2689, %v3819, 0.0
        %v4143 = vsel %vm2690, %v3823, 0.0
        %v4144 = vsel %vm2691, %v3827, 0.0
        %v4145 = vsel %vm2692, %v3831, 0.0
        %v4146 = vsel %vm2693, %v3835, 0.0
        %v4147 = vsel %vm2694, %v3839, 0.0
        %v4148 = vsel %vm2695, %v3843, 0.0
        %v4149 = vsel %vm2696, %v3847, 0.0
        %v4150 = vsel %vm2697, %v3851, 0.0
        %v4151 = vsel %vm2698, %v3803, 0.0
        %v4152 = vsel %vm2699, %v3807, 0.0
        %v4153 = vsel %vm2700, %v3811, 0.0
        %v4154 = vsel %vm2701, %v3815, 0.0
        %v4155 = vsel %vm2702, %v3819, 0.0
        %v4156 = vsel %vm2703, %v3823, 0.0
        %v4157 = vsel %vm2704, %v3827, 0.0
        %v4158 = vsel %vm2705, %v3831, 0.0
        %v4159 = vsel %vm2706, %v3835, 0.0
        %v4160 = vsel %vm2707, %v3839, 0.0
        %v4161 = vsel %vm2708, %v3843, 0.0
        %v4162 = vsel %vm2709, %v3847, 0.0
        %v4163 = vsel %vm2710, %v3851, 0.0
        %v4164 = vsel %vm2711, %v3803, 0.0
        %v4165 = vsel %vm2712, %v3807, 0.0
        %v4166 = vsel %vm2713, %v3811, 0.0
        %v4167 = vsel %vm2714, %v3815, 0.0
        %v4168 = vsel %vm2715, %v3819, 0.0
        %v4169 = vsel %vm2716, %v3823, 0.0
        %v4170 = vsel %vm2717, %v3827, 0.0
        %v4171 = vsel %vm2718, %v3831, 0.0
        %v4172 = vsel %vm2719, %v3835, 0.0
        %v4173 = vsel %vm2720, %v3839, 0.0
        %v4174 = vsel %vm2721, %v3843, 0.0
        %v4175 = vsel %vm2722, %v3847, 0.0
        %v4176 = vsel %vm2723, %v3851, 0.0
        %v4177 = vsel %vm2724, %v3803, 0.0
        %v4178 = vsel %vm2725, %v3807, 0.0
        %v4179 = vsel %vm2726, %v3811, 0.0
        %v4180 = vsel %vm2727, %v3815, 0.0
        %v4181 = vsel %vm2728, %v3819, 0.0
        %v4182 = vsel %vm2729, %v3823, 0.0
        %v4183 = vsel %vm2730, %v3827, 0.0
        %v4184 = vsel %vm2731, %v3831, 0.0
        %v4185 = vsel %vm2732, %v3835, 0.0
        %v4186 = vsel %vm2733, %v3839, 0.0
        %v4187 = vsel %vm2734, %v3843, 0.0
        %v4188 = vsel %vm2735, %v3847, 0.0
        %v4189 = vsel %vm2736, %v3851, 0.0
        %v4190 = vsel %vm2737, %v3803, 0.0
        %v4191 = vsel %vm2738, %v3807, 0.0
        %v4192 = vsel %vm2739, %v3811, 0.0
        %v4193 = vsel %vm2740, %v3815, 0.0
        %v4194 = vsel %vm2741, %v3819, 0.0
        %v4195 = vsel %vm2742, %v3823, 0.0
        %v4196 = vsel %vm2743, %v3827, 0.0
        %v4197 = vsel %vm2744, %v3831, 0.0
        %v4198 = vsel %vm2745, %v3835, 0.0
        %v4199 = vsel %vm2746, %v3839, 0.0
        %v4200 = vsel %vm2747, %v3843, 0.0
        %v4201 = vsel %vm2748, %v3847, 0.0
        %v4202 = vsel %vm2749, %v3851, 0.0
        %v4203 = vsel %vm2750, %v3803, 0.0
        %v4204 = vsel %vm2751, %v3807, 0.0
        %v4205 = vsel %vm2752, %v3811, 0.0
        %v4206 = vsel %vm2753, %v3815, 0.0
        %v4207 = vsel %vm2754, %v3819, 0.0
        %v4208 = vsel %vm2755, %v3823, 0.0
        %v4209 = vsel %vm2756, %v3827, 0.0
        %v4210 = vsel %vm2757, %v3831, 0.0
        %v4211 = vsel %vm2758, %v3835, 0.0
        %v4212 = vsel %vm2759, %v3839, 0.0
        %v4213 = vsel %vm2760, %v3843, 0.0
        %v4214 = vsel %vm2761, %v3847, 0.0
        %v4215 = vsel %vm2762, %v3851, 0.0
        %v4216 = vsel %vm2763, %v3803, 0.0
        %v4217 = vsel %vm2764, %v3807, 0.0
        %v4218 = vsel %vm2765, %v3811, 0.0
        %v4219 = vsel %vm2766, %v3815, 0.0
        %v4220 = vsel %vm2767, %v3819, 0.0
        %v4221 = vsel %vm2768, %v3823, 0.0
        %v4222 = vsel %vm2769, %v3827, 0.0
        %v4223 = vsel %vm2770, %v3831, 0.0
        %v4224 = vsel %vm2771, %v3835, 0.0
        %v4225 = vsel %vm2772, %v3839, 0.0
        %v4226 = vsel %vm2773, %v3843, 0.0
        %v4227 = vsel %vm2774, %v3847, 0.0
        %v4228 = vsel %vm2775, %v3851, 0.0
        %v4229 = vsel %vm2776, %v3803, 0.0
        %v4230 = vsel %vm2777, %v3807, 0.0
        %v4231 = vsel %vm2778, %v3811, 0.0
        %v4232 = vsel %vm2779, %v3815, 0.0
        %v4233 = vsel %vm2780, %v3819, 0.0
        %v4234 = vsel %vm2781, %v3823, 0.0
        %v4235 = vsel %vm2782, %v3827, 0.0
        %v4236 = vsel %vm2783, %v3831, 0.0
        %v4237 = vsel %vm2784, %v3835, 0.0
        %v4238 = vsel %vm2785, %v3839, 0.0
        %v4239 = vsel %vm2786, %v3843, 0.0
        %v4240 = vsel %vm2787, %v3847, 0.0
        %v4241 = vsel %vm2788, %v3851, 0.0
        %v4242 = vsel %vm2789, %v3803, 0.0
        %v4243 = vsel %vm2790, %v3807, 0.0
        %v4244 = vsel %vm2791, %v3811, 0.0
        %v4245 = vsel %vm2792, %v3815, 0.0
        %v4246 = vsel %vm2793, %v3819, 0.0
        %v4247 = vsel %vm2794, %v3823, 0.0
        %v4248 = vsel %vm2795, %v3827, 0.0
        %v4249 = vsel %vm2796, %v3831, 0.0
        %v4250 = vsel %vm2797, %v3835, 0.0
        %v4251 = vsel %vm2798, %v3839, 0.0
        %v4252 = vsel %vm2799, %v3843, 0.0
        %v4253 = vsel %vm2800, %v3847, 0.0
        %v4254 = vsel %vm2801, %v3851, 0.0
        %v4255 = vsel %vm2802, %v3803, 0.0
        %v4256 = vsel %vm2803, %v3807, 0.0
        %v4257 = vsel %vm2804, %v3811, 0.0
        %v4258 = vsel %vm2805, %v3815, 0.0
        %v4259 = vsel %vm2806, %v3819, 0.0
        %v4260 = vsel %vm2807, %v3823, 0.0
        %v4261 = vsel %vm2808, %v3827, 0.0
        %v4262 = vsel %vm2809, %v3831, 0.0
        %v4263 = vsel %vm2810, %v3835, 0.0
        %v4264 = vsel %vm2811, %v3839, 0.0
        %v4265 = vsel %vm2812, %v3843, 0.0
        %v4266 = vsel %vm2813, %v3847, 0.0
        %v4267 = vsel %vm2814, %v3851, 0.0
        %v4268 = vsel %vm2815, %v3803, 0.0
        %v4269 = vsel %vm2816, %v3807, 0.0
        %v4270 = vsel %vm2817, %v3811, 0.0
        %v4271 = vsel %vm2818, %v3815, 0.0
        %v4272 = vsel %vm2819, %v3819, 0.0
        %v4273 = vsel %vm2820, %v3823, 0.0
        %v4274 = vsel %vm2821, %v3827, 0.0
        %v4275 = vsel %vm2822, %v3831, 0.0
        %v4276 = vsel %vm2823, %v3835, 0.0
        %v4277 = vsel %vm2824, %v3839, 0.0
        %v4278 = vsel %vm2825, %v3843, 0.0
        %v4279 = vsel %vm2826, %v3847, 0.0
        %v4280 = vsel %vm2827, %v3851, 0.0
        %v4281 = vadd.f32 %v3865, %v3866
        %v4282 = vadd.f32 %v4281, %v3867
        %v4283 = vadd.f32 %v4282, %v3868
        %v4284 = vadd.f32 %v4283, %v3869
        %v4285 = vadd.f32 %v4284, %v3870
        %v4286 = vadd.f32 %v4285, %v3871
        %v4287 = vadd.f32 %v4286, %v3872
        %v4288 = vadd.f32 %v4287, %v3873
        %v4289 = vadd.f32 %v4288, %v3874
        %v4290 = vadd.f32 %v4289, %v3875
        %v4291 = vadd.f32 %v4290, %v3876
        %v4292 = vadd.f32 %v4291, %v3877
        %4293 = vadd.xlane.f32.xlu0 %v4292
        %v4294 = vpop.xlane.xlu0 %4293
        %v4295 = vadd.f32 %v3878, %v3879
        %v4296 = vadd.f32 %v4295, %v3880
        %v4297 = vadd.f32 %v4296, %v3881
        %v4298 = vadd.f32 %v4297, %v3882
        %v4299 = vadd.f32 %v4298, %v3883
        %v4300 = vadd.f32 %v4299, %v3884
        %v4301 = vadd.f32 %v4300, %v3885
        %v4302 = vadd.f32 %v4301, %v3886
        %v4303 = vadd.f32 %v4302, %v3887
        %v4304 = vadd.f32 %v4303, %v3888
        %v4305 = vadd.f32 %v4304, %v3889
        %v4306 = vadd.f32 %v4305, %v3890
        %4307 = vadd.xlane.f32.xlu0 %v4306
        %v4308 = vpop.xlane.xlu0 %4307
        %v4309 = vadd.f32 %v3891, %v3892
        %v4310 = vadd.f32 %v4309, %v3893
        %v4311 = vadd.f32 %v4310, %v3894
        %v4312 = vadd.f32 %v4311, %v3895
        %v4313 = vadd.f32 %v4312, %v3896
        %v4314 = vadd.f32 %v4313, %v3897
        %v4315 = vadd.f32 %v4314, %v3898
        %v4316 = vadd.f32 %v4315, %v3899
        %v4317 = vadd.f32 %v4316, %v3900
        %v4318 = vadd.f32 %v4317, %v3901
        %v4319 = vadd.f32 %v4318, %v3902
        %v4320 = vadd.f32 %v4319, %v3903
        %4321 = vadd.xlane.f32.xlu0 %v4320
        %v4322 = vpop.xlane.xlu0 %4321
        %v4323 = vadd.f32 %v3904, %v3905
        %v4324 = vadd.f32 %v4323, %v3906
        %v4325 = vadd.f32 %v4324, %v3907
        %v4326 = vadd.f32 %v4325, %v3908
        %v4327 = vadd.f32 %v4326, %v3909
        %v4328 = vadd.f32 %v4327, %v3910
        %v4329 = vadd.f32 %v4328, %v3911
        %v4330 = vadd.f32 %v4329, %v3912
        %v4331 = vadd.f32 %v4330, %v3913
        %v4332 = vadd.f32 %v4331, %v3914
        %v4333 = vadd.f32 %v4332, %v3915
        %v4334 = vadd.f32 %v4333, %v3916
        %4335 = vadd.xlane.f32.xlu0 %v4334
        %v4336 = vpop.xlane.xlu0 %4335
        %v4337 = vadd.f32 %v3917, %v3918
        %v4338 = vadd.f32 %v4337, %v3919
        %v4339 = vadd.f32 %v4338, %v3920
        %v4340 = vadd.f32 %v4339, %v3921
        %v4341 = vadd.f32 %v4340, %v3922
        %v4342 = vadd.f32 %v4341, %v3923
        %v4343 = vadd.f32 %v4342, %v3924
        %v4344 = vadd.f32 %v4343, %v3925
        %v4345 = vadd.f32 %v4344, %v3926
        %v4346 = vadd.f32 %v4345, %v3927
        %v4347 = vadd.f32 %v4346, %v3928
        %v4348 = vadd.f32 %v4347, %v3929
        %4349 = vadd.xlane.f32.xlu0 %v4348
        %v4350 = vpop.xlane.xlu0 %4349
        %v4351 = vadd.f32 %v3930, %v3931
        %v4352 = vadd.f32 %v4351, %v3932
        %v4353 = vadd.f32 %v4352, %v3933
        %v4354 = vadd.f32 %v4353, %v3934
        %v4355 = vadd.f32 %v4354, %v3935
        %v4356 = vadd.f32 %v4355, %v3936
        %v4357 = vadd.f32 %v4356, %v3937
        %v4358 = vadd.f32 %v4357, %v3938
        %v4359 = vadd.f32 %v4358, %v3939
        %v4360 = vadd.f32 %v4359, %v3940
        %v4361 = vadd.f32 %v4360, %v3941
        %v4362 = vadd.f32 %v4361, %v3942
        %4363 = vadd.xlane.f32.xlu0 %v4362
        %v4364 = vpop.xlane.xlu0 %4363
        %v4365 = vadd.f32 %v3943, %v3944
        %v4366 = vadd.f32 %v4365, %v3945
        %v4367 = vadd.f32 %v4366, %v3946
        %v4368 = vadd.f32 %v4367, %v3947
        %v4369 = vadd.f32 %v4368, %v3948
        %v4370 = vadd.f32 %v4369, %v3949
        %v4371 = vadd.f32 %v4370, %v3950
        %v4372 = vadd.f32 %v4371, %v3951
        %v4373 = vadd.f32 %v4372, %v3952
        %v4374 = vadd.f32 %v4373, %v3953
        %v4375 = vadd.f32 %v4374, %v3954
        %v4376 = vadd.f32 %v4375, %v3955
        %4377 = vadd.xlane.f32.xlu0 %v4376
        %v4378 = vpop.xlane.xlu0 %4377
        %v4379 = vadd.f32 %v3956, %v3957
        %v4380 = vadd.f32 %v4379, %v3958
        %v4381 = vadd.f32 %v4380, %v3959
        %v4382 = vadd.f32 %v4381, %v3960
        %v4383 = vadd.f32 %v4382, %v3961
        %v4384 = vadd.f32 %v4383, %v3962
        %v4385 = vadd.f32 %v4384, %v3963
        %v4386 = vadd.f32 %v4385, %v3964
        %v4387 = vadd.f32 %v4386, %v3965
        %v4388 = vadd.f32 %v4387, %v3966
        %v4389 = vadd.f32 %v4388, %v3967
        %v4390 = vadd.f32 %v4389, %v3968
        %4391 = vadd.xlane.f32.xlu0 %v4390
        %v4392 = vpop.xlane.xlu0 %4391
        %v4393 = vadd.f32 %v3969, %v3970
        %v4394 = vadd.f32 %v4393, %v3971
        %v4395 = vadd.f32 %v4394, %v3972
        %v4396 = vadd.f32 %v4395, %v3973
        %v4397 = vadd.f32 %v4396, %v3974
        %v4398 = vadd.f32 %v4397, %v3975
        %v4399 = vadd.f32 %v4398, %v3976
        %v4400 = vadd.f32 %v4399, %v3977
        %v4401 = vadd.f32 %v4400, %v3978
        %v4402 = vadd.f32 %v4401, %v3979
        %v4403 = vadd.f32 %v4402, %v3980
        %v4404 = vadd.f32 %v4403, %v3981
        %4405 = vadd.xlane.f32.xlu0 %v4404
        %v4406 = vpop.xlane.xlu0 %4405
        %v4407 = vadd.f32 %v3982, %v3983
        %v4408 = vadd.f32 %v4407, %v3984
        %v4409 = vadd.f32 %v4408, %v3985
        %v4410 = vadd.f32 %v4409, %v3986
        %v4411 = vadd.f32 %v4410, %v3987
        %v4412 = vadd.f32 %v4411, %v3988
        %v4413 = vadd.f32 %v4412, %v3989
        %v4414 = vadd.f32 %v4413, %v3990
        %v4415 = vadd.f32 %v4414, %v3991
        %v4416 = vadd.f32 %v4415, %v3992
        %v4417 = vadd.f32 %v4416, %v3993
        %v4418 = vadd.f32 %v4417, %v3994
        %4419 = vadd.xlane.f32.xlu0 %v4418
        %v4420 = vpop.xlane.xlu0 %4419
        %v4421 = vadd.f32 %v3995, %v3996
        %v4422 = vadd.f32 %v4421, %v3997
        %v4423 = vadd.f32 %v4422, %v3998
        %v4424 = vadd.f32 %v4423, %v3999
        %v4425 = vadd.f32 %v4424, %v4000
        %v4426 = vadd.f32 %v4425, %v4001
        %v4427 = vadd.f32 %v4426, %v4002
        %v4428 = vadd.f32 %v4427, %v4003
        %v4429 = vadd.f32 %v4428, %v4004
        %v4430 = vadd.f32 %v4429, %v4005
        %v4431 = vadd.f32 %v4430, %v4006
        %v4432 = vadd.f32 %v4431, %v4007
        %4433 = vadd.xlane.f32.xlu0 %v4432
        %v4434 = vpop.xlane.xlu0 %4433
        %v4435 = vadd.f32 %v4008, %v4009
        %v4436 = vadd.f32 %v4435, %v4010
        %v4437 = vadd.f32 %v4436, %v4011
        %v4438 = vadd.f32 %v4437, %v4012
        %v4439 = vadd.f32 %v4438, %v4013
        %v4440 = vadd.f32 %v4439, %v4014
        %v4441 = vadd.f32 %v4440, %v4015
        %v4442 = vadd.f32 %v4441, %v4016
        %v4443 = vadd.f32 %v4442, %v4017
        %v4444 = vadd.f32 %v4443, %v4018
        %v4445 = vadd.f32 %v4444, %v4019
        %v4446 = vadd.f32 %v4445, %v4020
        %4447 = vadd.xlane.f32.xlu0 %v4446
        %v4448 = vpop.xlane.xlu0 %4447
        %v4449 = vadd.f32 %v4021, %v4022
        %v4450 = vadd.f32 %v4449, %v4023
        %v4451 = vadd.f32 %v4450, %v4024
        %v4452 = vadd.f32 %v4451, %v4025
        %v4453 = vadd.f32 %v4452, %v4026
        %v4454 = vadd.f32 %v4453, %v4027
        %v4455 = vadd.f32 %v4454, %v4028
        %v4456 = vadd.f32 %v4455, %v4029
        %v4457 = vadd.f32 %v4456, %v4030
        %v4458 = vadd.f32 %v4457, %v4031
        %v4459 = vadd.f32 %v4458, %v4032
        %v4460 = vadd.f32 %v4459, %v4033
        %4461 = vadd.xlane.f32.xlu0 %v4460
        %v4462 = vpop.xlane.xlu0 %4461
        %v4463 = vadd.f32 %v4034, %v4035
        %v4464 = vadd.f32 %v4463, %v4036
        %v4465 = vadd.f32 %v4464, %v4037
        %v4466 = vadd.f32 %v4465, %v4038
        %v4467 = vadd.f32 %v4466, %v4039
        %v4468 = vadd.f32 %v4467, %v4040
        %v4469 = vadd.f32 %v4468, %v4041
        %v4470 = vadd.f32 %v4469, %v4042
        %v4471 = vadd.f32 %v4470, %v4043
        %v4472 = vadd.f32 %v4471, %v4044
        %v4473 = vadd.f32 %v4472, %v4045
        %v4474 = vadd.f32 %v4473, %v4046
        %4475 = vadd.xlane.f32.xlu0 %v4474
        %v4476 = vpop.xlane.xlu0 %4475
        %v4477 = vadd.f32 %v4047, %v4048
        %v4478 = vadd.f32 %v4477, %v4049
        %v4479 = vadd.f32 %v4478, %v4050
        %v4480 = vadd.f32 %v4479, %v4051
        %v4481 = vadd.f32 %v4480, %v4052
        %v4482 = vadd.f32 %v4481, %v4053
        %v4483 = vadd.f32 %v4482, %v4054
        %v4484 = vadd.f32 %v4483, %v4055
        %v4485 = vadd.f32 %v4484, %v4056
        %v4486 = vadd.f32 %v4485, %v4057
        %v4487 = vadd.f32 %v4486, %v4058
        %v4488 = vadd.f32 %v4487, %v4059
        %4489 = vadd.xlane.f32.xlu0 %v4488
        %v4490 = vpop.xlane.xlu0 %4489
        %v4491 = vadd.f32 %v4060, %v4061
        %v4492 = vadd.f32 %v4491, %v4062
        %v4493 = vadd.f32 %v4492, %v4063
        %v4494 = vadd.f32 %v4493, %v4064
        %v4495 = vadd.f32 %v4494, %v4065
        %v4496 = vadd.f32 %v4495, %v4066
        %v4497 = vadd.f32 %v4496, %v4067
        %v4498 = vadd.f32 %v4497, %v4068
        %v4499 = vadd.f32 %v4498, %v4069
        %v4500 = vadd.f32 %v4499, %v4070
        %v4501 = vadd.f32 %v4500, %v4071
        %v4502 = vadd.f32 %v4501, %v4072
        %4503 = vadd.xlane.f32.xlu0 %v4502
        %v4504 = vpop.xlane.xlu0 %4503
        %v4505 = vadd.f32 %v4073, %v4074
        %v4506 = vadd.f32 %v4505, %v4075
        %v4507 = vadd.f32 %v4506, %v4076
        %v4508 = vadd.f32 %v4507, %v4077
        %v4509 = vadd.f32 %v4508, %v4078
        %v4510 = vadd.f32 %v4509, %v4079
        %v4511 = vadd.f32 %v4510, %v4080
        %v4512 = vadd.f32 %v4511, %v4081
        %v4513 = vadd.f32 %v4512, %v4082
        %v4514 = vadd.f32 %v4513, %v4083
        %v4515 = vadd.f32 %v4514, %v4084
        %v4516 = vadd.f32 %v4515, %v4085
        %4517 = vadd.xlane.f32.xlu0 %v4516
        %v4518 = vpop.xlane.xlu0 %4517
        %v4519 = vadd.f32 %v4086, %v4087
        %v4520 = vadd.f32 %v4519, %v4088
        %v4521 = vadd.f32 %v4520, %v4089
        %v4522 = vadd.f32 %v4521, %v4090
        %v4523 = vadd.f32 %v4522, %v4091
        %v4524 = vadd.f32 %v4523, %v4092
        %v4525 = vadd.f32 %v4524, %v4093
        %v4526 = vadd.f32 %v4525, %v4094
        %v4527 = vadd.f32 %v4526, %v4095
        %v4528 = vadd.f32 %v4527, %v4096
        %v4529 = vadd.f32 %v4528, %v4097
        %v4530 = vadd.f32 %v4529, %v4098
        %4531 = vadd.xlane.f32.xlu0 %v4530
        %v4532 = vpop.xlane.xlu0 %4531
        %v4533 = vadd.f32 %v4099, %v4100
        %v4534 = vadd.f32 %v4533, %v4101
        %v4535 = vadd.f32 %v4534, %v4102
        %v4536 = vadd.f32 %v4535, %v4103
        %v4537 = vadd.f32 %v4536, %v4104
        %v4538 = vadd.f32 %v4537, %v4105
        %v4539 = vadd.f32 %v4538, %v4106
        %v4540 = vadd.f32 %v4539, %v4107
        %v4541 = vadd.f32 %v4540, %v4108
        %v4542 = vadd.f32 %v4541, %v4109
        %v4543 = vadd.f32 %v4542, %v4110
        %v4544 = vadd.f32 %v4543, %v4111
        %4545 = vadd.xlane.f32.xlu0 %v4544
        %v4546 = vpop.xlane.xlu0 %4545
        %v4547 = vadd.f32 %v4112, %v4113
        %v4548 = vadd.f32 %v4547, %v4114
        %v4549 = vadd.f32 %v4548, %v4115
        %v4550 = vadd.f32 %v4549, %v4116
        %v4551 = vadd.f32 %v4550, %v4117
        %v4552 = vadd.f32 %v4551, %v4118
        %v4553 = vadd.f32 %v4552, %v4119
        %v4554 = vadd.f32 %v4553, %v4120
        %v4555 = vadd.f32 %v4554, %v4121
        %v4556 = vadd.f32 %v4555, %v4122
        %v4557 = vadd.f32 %v4556, %v4123
        %v4558 = vadd.f32 %v4557, %v4124
        %4559 = vadd.xlane.f32.xlu0 %v4558
        %v4560 = vpop.xlane.xlu0 %4559
        %v4561 = vadd.f32 %v4125, %v4126
        %v4562 = vadd.f32 %v4561, %v4127
        %v4563 = vadd.f32 %v4562, %v4128
        %v4564 = vadd.f32 %v4563, %v4129
        %v4565 = vadd.f32 %v4564, %v4130
        %v4566 = vadd.f32 %v4565, %v4131
        %v4567 = vadd.f32 %v4566, %v4132
        %v4568 = vadd.f32 %v4567, %v4133
        %v4569 = vadd.f32 %v4568, %v4134
        %v4570 = vadd.f32 %v4569, %v4135
        %v4571 = vadd.f32 %v4570, %v4136
        %v4572 = vadd.f32 %v4571, %v4137
        %4573 = vadd.xlane.f32.xlu0 %v4572
        %v4574 = vpop.xlane.xlu0 %4573
        %v4575 = vadd.f32 %v4138, %v4139
        %v4576 = vadd.f32 %v4575, %v4140
        %v4577 = vadd.f32 %v4576, %v4141
        %v4578 = vadd.f32 %v4577, %v4142
        %v4579 = vadd.f32 %v4578, %v4143
        %v4580 = vadd.f32 %v4579, %v4144
        %v4581 = vadd.f32 %v4580, %v4145
        %v4582 = vadd.f32 %v4581, %v4146
        %v4583 = vadd.f32 %v4582, %v4147
        %v4584 = vadd.f32 %v4583, %v4148
        %v4585 = vadd.f32 %v4584, %v4149
        %v4586 = vadd.f32 %v4585, %v4150
        %4587 = vadd.xlane.f32.xlu0 %v4586
        %v4588 = vpop.xlane.xlu0 %4587
        %v4589 = vadd.f32 %v4151, %v4152
        %v4590 = vadd.f32 %v4589, %v4153
        %v4591 = vadd.f32 %v4590, %v4154
        %v4592 = vadd.f32 %v4591, %v4155
        %v4593 = vadd.f32 %v4592, %v4156
        %v4594 = vadd.f32 %v4593, %v4157
        %v4595 = vadd.f32 %v4594, %v4158
        %v4596 = vadd.f32 %v4595, %v4159
        %v4597 = vadd.f32 %v4596, %v4160
        %v4598 = vadd.f32 %v4597, %v4161
        %v4599 = vadd.f32 %v4598, %v4162
        %v4600 = vadd.f32 %v4599, %v4163
        %4601 = vadd.xlane.f32.xlu0 %v4600
        %v4602 = vpop.xlane.xlu0 %4601
        %v4603 = vadd.f32 %v4164, %v4165
        %v4604 = vadd.f32 %v4603, %v4166
        %v4605 = vadd.f32 %v4604, %v4167
        %v4606 = vadd.f32 %v4605, %v4168
        %v4607 = vadd.f32 %v4606, %v4169
        %v4608 = vadd.f32 %v4607, %v4170
        %v4609 = vadd.f32 %v4608, %v4171
        %v4610 = vadd.f32 %v4609, %v4172
        %v4611 = vadd.f32 %v4610, %v4173
        %v4612 = vadd.f32 %v4611, %v4174
        %v4613 = vadd.f32 %v4612, %v4175
        %v4614 = vadd.f32 %v4613, %v4176
        %4615 = vadd.xlane.f32.xlu0 %v4614
        %v4616 = vpop.xlane.xlu0 %4615
        %v4617 = vadd.f32 %v4177, %v4178
        %v4618 = vadd.f32 %v4617, %v4179
        %v4619 = vadd.f32 %v4618, %v4180
        %v4620 = vadd.f32 %v4619, %v4181
        %v4621 = vadd.f32 %v4620, %v4182
        %v4622 = vadd.f32 %v4621, %v4183
        %v4623 = vadd.f32 %v4622, %v4184
        %v4624 = vadd.f32 %v4623, %v4185
        %v4625 = vadd.f32 %v4624, %v4186
        %v4626 = vadd.f32 %v4625, %v4187
        %v4627 = vadd.f32 %v4626, %v4188
        %v4628 = vadd.f32 %v4627, %v4189
        %4629 = vadd.xlane.f32.xlu0 %v4628
        %v4630 = vpop.xlane.xlu0 %4629
        %v4631 = vadd.f32 %v4190, %v4191
        %v4632 = vadd.f32 %v4631, %v4192
        %v4633 = vadd.f32 %v4632, %v4193
        %v4634 = vadd.f32 %v4633, %v4194
        %v4635 = vadd.f32 %v4634, %v4195
        %v4636 = vadd.f32 %v4635, %v4196
        %v4637 = vadd.f32 %v4636, %v4197
        %v4638 = vadd.f32 %v4637, %v4198
        %v4639 = vadd.f32 %v4638, %v4199
        %v4640 = vadd.f32 %v4639, %v4200
        %v4641 = vadd.f32 %v4640, %v4201
        %v4642 = vadd.f32 %v4641, %v4202
        %4643 = vadd.xlane.f32.xlu0 %v4642
        %v4644 = vpop.xlane.xlu0 %4643
        %v4645 = vadd.f32 %v4203, %v4204
        %v4646 = vadd.f32 %v4645, %v4205
        %v4647 = vadd.f32 %v4646, %v4206
        %v4648 = vadd.f32 %v4647, %v4207
        %v4649 = vadd.f32 %v4648, %v4208
        %v4650 = vadd.f32 %v4649, %v4209
        %v4651 = vadd.f32 %v4650, %v4210
        %v4652 = vadd.f32 %v4651, %v4211
        %v4653 = vadd.f32 %v4652, %v4212
        %v4654 = vadd.f32 %v4653, %v4213
        %v4655 = vadd.f32 %v4654, %v4214
        %v4656 = vadd.f32 %v4655, %v4215
        %4657 = vadd.xlane.f32.xlu0 %v4656
        %v4658 = vpop.xlane.xlu0 %4657
        %v4659 = vadd.f32 %v4216, %v4217
        %v4660 = vadd.f32 %v4659, %v4218
        %v4661 = vadd.f32 %v4660, %v4219
        %v4662 = vadd.f32 %v4661, %v4220
        %v4663 = vadd.f32 %v4662, %v4221
        %v4664 = vadd.f32 %v4663, %v4222
        %v4665 = vadd.f32 %v4664, %v4223
        %v4666 = vadd.f32 %v4665, %v4224
        %v4667 = vadd.f32 %v4666, %v4225
        %v4668 = vadd.f32 %v4667, %v4226
        %v4669 = vadd.f32 %v4668, %v4227
        %v4670 = vadd.f32 %v4669, %v4228
        %4671 = vadd.xlane.f32.xlu0 %v4670
        %v4672 = vpop.xlane.xlu0 %4671
        %v4673 = vadd.f32 %v4229, %v4230
        %v4674 = vadd.f32 %v4673, %v4231
        %v4675 = vadd.f32 %v4674, %v4232
        %v4676 = vadd.f32 %v4675, %v4233
        %v4677 = vadd.f32 %v4676, %v4234
        %v4678 = vadd.f32 %v4677, %v4235
        %v4679 = vadd.f32 %v4678, %v4236
        %v4680 = vadd.f32 %v4679, %v4237
        %v4681 = vadd.f32 %v4680, %v4238
        %v4682 = vadd.f32 %v4681, %v4239
        %v4683 = vadd.f32 %v4682, %v4240
        %v4684 = vadd.f32 %v4683, %v4241
        %4685 = vadd.xlane.f32.xlu0 %v4684
        %v4686 = vpop.xlane.xlu0 %4685
        %v4687 = vadd.f32 %v4242, %v4243
        %v4688 = vadd.f32 %v4687, %v4244
        %v4689 = vadd.f32 %v4688, %v4245
        %v4690 = vadd.f32 %v4689, %v4246
        %v4691 = vadd.f32 %v4690, %v4247
        %v4692 = vadd.f32 %v4691, %v4248
        %v4693 = vadd.f32 %v4692, %v4249
        %v4694 = vadd.f32 %v4693, %v4250
        %v4695 = vadd.f32 %v4694, %v4251
        %v4696 = vadd.f32 %v4695, %v4252
        %v4697 = vadd.f32 %v4696, %v4253
        %v4698 = vadd.f32 %v4697, %v4254
        %4699 = vadd.xlane.f32.xlu0 %v4698
        %v4700 = vpop.xlane.xlu0 %4699
        %v4701 = vadd.f32 %v4255, %v4256
        %v4702 = vadd.f32 %v4701, %v4257
        %v4703 = vadd.f32 %v4702, %v4258
        %v4704 = vadd.f32 %v4703, %v4259
        %v4705 = vadd.f32 %v4704, %v4260
        %v4706 = vadd.f32 %v4705, %v4261
        %v4707 = vadd.f32 %v4706, %v4262
        %v4708 = vadd.f32 %v4707, %v4263
        %v4709 = vadd.f32 %v4708, %v4264
        %v4710 = vadd.f32 %v4709, %v4265
        %v4711 = vadd.f32 %v4710, %v4266
        %v4712 = vadd.f32 %v4711, %v4267
        %4713 = vadd.xlane.f32.xlu0 %v4712
        %v4714 = vpop.xlane.xlu0 %4713
        %v4715 = vadd.f32 %v4268, %v4269
        %v4716 = vadd.f32 %v4715, %v4270
        %v4717 = vadd.f32 %v4716, %v4271
        %v4718 = vadd.f32 %v4717, %v4272
        %v4719 = vadd.f32 %v4718, %v4273
        %v4720 = vadd.f32 %v4719, %v4274
        %v4721 = vadd.f32 %v4720, %v4275
        %v4722 = vadd.f32 %v4721, %v4276
        %v4723 = vadd.f32 %v4722, %v4277
        %v4724 = vadd.f32 %v4723, %v4278
        %v4725 = vadd.f32 %v4724, %v4279
        %v4726 = vadd.f32 %v4725, %v4280
        %4727 = vadd.xlane.f32.xlu0 %v4726
        %v4728 = vpop.xlane.xlu0 %4727
        %v4729 = vmul.f32 %v4294, %v2208
        %v4730 = vmul.f32 %v4308, %v2209
        %v4731 = vmul.f32 %v4322, %v2210
        %v4732 = vmul.f32 %v4336, %v2211
        %v4733 = vmul.f32 %v4350, %v2212
        %v4734 = vmul.f32 %v4364, %v2213
        %v4735 = vmul.f32 %v4378, %v2214
        %v4736 = vmul.f32 %v4392, %v2215
        %v4737 = vmul.f32 %v4406, %v2216
        %v4738 = vmul.f32 %v4420, %v2217
        %v4739 = vmul.f32 %v4434, %v2218
        %v4740 = vmul.f32 %v4448, %v2219
        %v4741 = vmul.f32 %v4462, %v2220
        %v4742 = vmul.f32 %v4476, %v2221
        %v4743 = vmul.f32 %v4490, %v2222
        %v4744 = vmul.f32 %v4504, %v2223
        %v4745 = vmul.f32 %v4518, %v2224
        %v4746 = vmul.f32 %v4532, %v2225
        %v4747 = vmul.f32 %v4546, %v2226
        %v4748 = vmul.f32 %v4560, %v2227
        %v4749 = vmul.f32 %v4574, %v2228
        %v4750 = vmul.f32 %v4588, %v2229
        %v4751 = vmul.f32 %v4602, %v2230
        %v4752 = vmul.f32 %v4616, %v2231
        %v4753 = vmul.f32 %v4630, %v2232
        %v4754 = vmul.f32 %v4644, %v2233
        %v4755 = vmul.f32 %v4658, %v2234
        %v4756 = vmul.f32 %v4672, %v2235
        %v4757 = vmul.f32 %v4686, %v2236
        %v4758 = vmul.f32 %v4700, %v2237
        %v4759 = vmul.f32 %v4714, %v2238
        %v4760 = vmul.f32 %v4728, %v2239
        %vm4761 = vcmask 7168
        %v4762 = vsel %vm4761, %v3762, %v4729
        %v4763 = vsel %vm4761, %v3763, %v4730
        %v4764 = vsel %vm4761, %v3764, %v4731
        %v4765 = vsel %vm4761, %v3765, %v4732
        %v4766 = vsel %vm4761, %v3766, %v4733
        %v4767 = vsel %vm4761, %v3767, %v4734
        %v4768 = vsel %vm4761, %v3768, %v4735
        %v4769 = vsel %vm4761, %v3769, %v4736
        %v4770 = vsel %vm4761, %v3770, %v4737
        %v4771 = vsel %vm4761, %v3771, %v4738
        %v4772 = vsel %vm4761, %v3772, %v4739
        %v4773 = vsel %vm4761, %v3773, %v4740
        %v4774 = vsel %vm4761, %v3774, %v4741
        %v4775 = vsel %vm4761, %v3775, %v4742
        %v4776 = vsel %vm4761, %v3776, %v4743
        %v4777 = vsel %vm4761, %v3777, %v4744
        %v4778 = vsel %vm4761, %v3778, %v4745
        %v4779 = vsel %vm4761, %v3779, %v4746
        %v4780 = vsel %vm4761, %v3780, %v4747
        %v4781 = vsel %vm4761, %v3781, %v4748
        %v4782 = vsel %vm4761, %v3782, %v4749
        %v4783 = vsel %vm4761, %v3783, %v4750
        %v4784 = vsel %vm4761, %v3784, %v4751
        %v4785 = vsel %vm4761, %v3785, %v4752
        %v4786 = vsel %vm4761, %v3786, %v4753
        %v4787 = vsel %vm4761, %v3787, %v4754
        %v4788 = vsel %vm4761, %v3788, %v4755
        %v4789 = vsel %vm4761, %v3789, %v4756
        %v4790 = vsel %vm4761, %v3790, %v4757
        %v4791 = vsel %vm4761, %v3791, %v4758
        %v4792 = vsel %vm4761, %v3792, %v4759
        %v4793 = vsel %vm4761, %v3793, %v4760
        %vm4794 = vcmask 15360
        %v4795 = vsel %vm4794, %v4762, 0.0
        %v4796 = vsel %vm4794, %v4763, 0.0
        %v4797 = vsel %vm4794, %v4764, 0.0
        %v4798 = vsel %vm4794, %v4765, 0.0
        %v4799 = vsel %vm4794, %v4766, 0.0
        %v4800 = vsel %vm4794, %v4767, 0.0
        %v4801 = vsel %vm4794, %v4768, 0.0
        %v4802 = vsel %vm4794, %v4769, 0.0
        %v4803 = vsel %vm4794, %v4770, 0.0
        %v4804 = vsel %vm4794, %v4771, 0.0
        %v4805 = vsel %vm4794, %v4772, 0.0
        %v4806 = vsel %vm4794, %v4773, 0.0
        %v4807 = vsel %vm4794, %v4774, 0.0
        %v4808 = vsel %vm4794, %v4775, 0.0
        %v4809 = vsel %vm4794, %v4776, 0.0
        %v4810 = vsel %vm4794, %v4777, 0.0
        %v4811 = vsel %vm4794, %v4778, 0.0
        %v4812 = vsel %vm4794, %v4779, 0.0
        %v4813 = vsel %vm4794, %v4780, 0.0
        %v4814 = vsel %vm4794, %v4781, 0.0
        %v4815 = vsel %vm4794, %v4782, 0.0
        %v4816 = vsel %vm4794, %v4783, 0.0
        %v4817 = vsel %vm4794, %v4784, 0.0
        %v4818 = vsel %vm4794, %v4785, 0.0
        %v4819 = vsel %vm4794, %v4786, 0.0
        %v4820 = vsel %vm4794, %v4787, 0.0
        %v4821 = vsel %vm4794, %v4788, 0.0
        %v4822 = vsel %vm4794, %v4789, 0.0
        %v4823 = vsel %vm4794, %v4790, 0.0
        %v4824 = vsel %vm4794, %v4791, 0.0
        %v4825 = vsel %vm4794, %v4792, 0.0
        %v4826 = vsel %vm4794, %v4793, 0.0
        %vm4827 = vcmask 23552
        %v4828 = vsel %vm4827, %v4795, 0.0
        %v4829 = vsel %vm4827, %v4796, 0.0
        %v4830 = vsel %vm4827, %v4797, 0.0
        %v4831 = vsel %vm4827, %v4798, 0.0
        %v4832 = vsel %vm4827, %v4799, 0.0
        %v4833 = vsel %vm4827, %v4800, 0.0
        %v4834 = vsel %vm4827, %v4801, 0.0
        %v4835 = vsel %vm4827, %v4802, 0.0
        %v4836 = vsel %vm4827, %v4803, 0.0
        %v4837 = vsel %vm4827, %v4804, 0.0
        %v4838 = vsel %vm4827, %v4805, 0.0
        %v4839 = vsel %vm4827, %v4806, 0.0
        %v4840 = vsel %vm4827, %v4807, 0.0
        %v4841 = vsel %vm4827, %v4808, 0.0
        %v4842 = vsel %vm4827, %v4809, 0.0
        %v4843 = vsel %vm4827, %v4810, 0.0
        %v4844 = vsel %vm4827, %v4811, 0.0
        %v4845 = vsel %vm4827, %v4812, 0.0
        %v4846 = vsel %vm4827, %v4813, 0.0
        %v4847 = vsel %vm4827, %v4814, 0.0
        %v4848 = vsel %vm4827, %v4815, 0.0
        %v4849 = vsel %vm4827, %v4816, 0.0
        %v4850 = vsel %vm4827, %v4817, 0.0
        %v4851 = vsel %vm4827, %v4818, 0.0
        %v4852 = vsel %vm4827, %v4819, 0.0
        %v4853 = vsel %vm4827, %v4820, 0.0
        %v4854 = vsel %vm4827, %v4821, 0.0
        %v4855 = vsel %vm4827, %v4822, 0.0
        %v4856 = vsel %vm4827, %v4823, 0.0
        %v4857 = vsel %vm4827, %v4824, 0.0
        %v4858 = vsel %vm4827, %v4825, 0.0
        %v4859 = vsel %vm4827, %v4826, 0.0
        %vm4860 = vcmask 31744
        %v4861 = vsel %vm4860, %v4828, 0.0
        %v4862 = vsel %vm4860, %v4829, 0.0
        %v4863 = vsel %vm4860, %v4830, 0.0
        %v4864 = vsel %vm4860, %v4831, 0.0
        %v4865 = vsel %vm4860, %v4832, 0.0
        %v4866 = vsel %vm4860, %v4833, 0.0
        %v4867 = vsel %vm4860, %v4834, 0.0
        %v4868 = vsel %vm4860, %v4835, 0.0
        %v4869 = vsel %vm4860, %v4836, 0.0
        %v4870 = vsel %vm4860, %v4837, 0.0
        %v4871 = vsel %vm4860, %v4838, 0.0
        %v4872 = vsel %vm4860, %v4839, 0.0
        %v4873 = vsel %vm4860, %v4840, 0.0
        %v4874 = vsel %vm4860, %v4841, 0.0
        %v4875 = vsel %vm4860, %v4842, 0.0
        %v4876 = vsel %vm4860, %v4843, 0.0
        %v4877 = vsel %vm4860, %v4844, 0.0
        %v4878 = vsel %vm4860, %v4845, 0.0
        %v4879 = vsel %vm4860, %v4846, 0.0
        %v4880 = vsel %vm4860, %v4847, 0.0
        %v4881 = vsel %vm4860, %v4848, 0.0
        %v4882 = vsel %vm4860, %v4849, 0.0
        %v4883 = vsel %vm4860, %v4850, 0.0
        %v4884 = vsel %vm4860, %v4851, 0.0
        %v4885 = vsel %vm4860, %v4852, 0.0
        %v4886 = vsel %vm4860, %v4853, 0.0
        %v4887 = vsel %vm4860, %v4854, 0.0
        %v4888 = vsel %vm4860, %v4855, 0.0
        %v4889 = vsel %vm4860, %v4856, 0.0
        %v4890 = vsel %vm4860, %v4857, 0.0
        %v4891 = vsel %vm4860, %v4858, 0.0
        %v4892 = vsel %vm4860, %v4859, 0.0
        %vm4893 = vcmask 39936
        %v4894 = vsel %vm4893, %v4861, 0.0
        %v4895 = vsel %vm4893, %v4862, 0.0
        %v4896 = vsel %vm4893, %v4863, 0.0
        %v4897 = vsel %vm4893, %v4864, 0.0
        %v4898 = vsel %vm4893, %v4865, 0.0
        %v4899 = vsel %vm4893, %v4866, 0.0
        %v4900 = vsel %vm4893, %v4867, 0.0
        %v4901 = vsel %vm4893, %v4868, 0.0
        %v4902 = vsel %vm4893, %v4869, 0.0
        %v4903 = vsel %vm4893, %v4870, 0.0
        %v4904 = vsel %vm4893, %v4871, 0.0
        %v4905 = vsel %vm4893, %v4872, 0.0
        %v4906 = vsel %vm4893, %v4873, 0.0
        %v4907 = vsel %vm4893, %v4874, 0.0
        %v4908 = vsel %vm4893, %v4875, 0.0
        %v4909 = vsel %vm4893, %v4876, 0.0
        %v4910 = vsel %vm4893, %v4877, 0.0
        %v4911 = vsel %vm4893, %v4878, 0.0
        %v4912 = vsel %vm4893, %v4879, 0.0
        %v4913 = vsel %vm4893, %v4880, 0.0
        %v4914 = vsel %vm4893, %v4881, 0.0
        %v4915 = vsel %vm4893, %v4882, 0.0
        %v4916 = vsel %vm4893, %v4883, 0.0
        %v4917 = vsel %vm4893, %v4884, 0.0
        %v4918 = vsel %vm4893, %v4885, 0.0
        %v4919 = vsel %vm4893, %v4886, 0.0
        %v4920 = vsel %vm4893, %v4887, 0.0
        %v4921 = vsel %vm4893, %v4888, 0.0
        %v4922 = vsel %vm4893, %v4889, 0.0
        %v4923 = vsel %vm4893, %v4890, 0.0
        %v4924 = vsel %vm4893, %v4891, 0.0
        %v4925 = vsel %vm4893, %v4892, 0.0
        %vm4926 = vcmask 48128
        %v4927 = vsel %vm4926, %v4894, 0.0
        %v4928 = vsel %vm4926, %v4895, 0.0
        %v4929 = vsel %vm4926, %v4896, 0.0
        %v4930 = vsel %vm4926, %v4897, 0.0
        %v4931 = vsel %vm4926, %v4898, 0.0
        %v4932 = vsel %vm4926, %v4899, 0.0
        %v4933 = vsel %vm4926, %v4900, 0.0
        %v4934 = vsel %vm4926, %v4901, 0.0
        %v4935 = vsel %vm4926, %v4902, 0.0
        %v4936 = vsel %vm4926, %v4903, 0.0
        %v4937 = vsel %vm4926, %v4904, 0.0
        %v4938 = vsel %vm4926, %v4905, 0.0
        %v4939 = vsel %vm4926, %v4906, 0.0
        %v4940 = vsel %vm4926, %v4907, 0.0
        %v4941 = vsel %vm4926, %v4908, 0.0
        %v4942 = vsel %vm4926, %v4909, 0.0
        %v4943 = vsel %vm4926, %v4910, 0.0
        %v4944 = vsel %vm4926, %v4911, 0.0
        %v4945 = vsel %vm4926, %v4912, 0.0
        %v4946 = vsel %vm4926, %v4913, 0.0
        %v4947 = vsel %vm4926, %v4914, 0.0
        %v4948 = vsel %vm4926, %v4915, 0.0
        %v4949 = vsel %vm4926, %v4916, 0.0
        %v4950 = vsel %vm4926, %v4917, 0.0
        %v4951 = vsel %vm4926, %v4918, 0.0
        %v4952 = vsel %vm4926, %v4919, 0.0
        %v4953 = vsel %vm4926, %v4920, 0.0
        %v4954 = vsel %vm4926, %v4921, 0.0
        %v4955 = vsel %vm4926, %v4922, 0.0
        %v4956 = vsel %vm4926, %v4923, 0.0
        %v4957 = vsel %vm4926, %v4924, 0.0
        %v4958 = vsel %vm4926, %v4925, 0.0
        %vm4959 = vcmask 56320
        %v4960 = vsel %vm4959, %v4927, 0.0
        %v4961 = vsel %vm4959, %v4928, 0.0
        %v4962 = vsel %vm4959, %v4929, 0.0
        %v4963 = vsel %vm4959, %v4930, 0.0
        %v4964 = vsel %vm4959, %v4931, 0.0
        %v4965 = vsel %vm4959, %v4932, 0.0
        %v4966 = vsel %vm4959, %v4933, 0.0
        %v4967 = vsel %vm4959, %v4934, 0.0
        %v4968 = vsel %vm4959, %v4935, 0.0
        %v4969 = vsel %vm4959, %v4936, 0.0
        %v4970 = vsel %vm4959, %v4937, 0.0
        %v4971 = vsel %vm4959, %v4938, 0.0
        %v4972 = vsel %vm4959, %v4939, 0.0
        %v4973 = vsel %vm4959, %v4940, 0.0
        %v4974 = vsel %vm4959, %v4941, 0.0
        %v4975 = vsel %vm4959, %v4942, 0.0
        %v4976 = vsel %vm4959, %v4943, 0.0
        %v4977 = vsel %vm4959, %v4944, 0.0
        %v4978 = vsel %vm4959, %v4945, 0.0
        %v4979 = vsel %vm4959, %v4946, 0.0
        %v4980 = vsel %vm4959, %v4947, 0.0
        %v4981 = vsel %vm4959, %v4948, 0.0
        %v4982 = vsel %vm4959, %v4949, 0.0
        %v4983 = vsel %vm4959, %v4950, 0.0
        %v4984 = vsel %vm4959, %v4951, 0.0
        %v4985 = vsel %vm4959, %v4952, 0.0
        %v4986 = vsel %vm4959, %v4953, 0.0
        %v4987 = vsel %vm4959, %v4954, 0.0
        %v4988 = vsel %vm4959, %v4955, 0.0
        %v4989 = vsel %vm4959, %v4956, 0.0
        %v4990 = vsel %vm4959, %v4957, 0.0
        %v4991 = vsel %vm4959, %v4958, 0.0
        %4992 = vxpose.xlu0.b32.start [1/16] %v4960, 128
        %4993 = vxpose.xlu0.b32.cont [2/16] %v4961, 128
        %4994 = vxpose.xlu0.b32.cont [3/16] %v4962, 128
        %4995 = vxpose.xlu0.b32.cont [4/16] %v4963, 128
        %4996 = vxpose.xlu0.b32.cont [5/16] %v4964, 128
        %4997 = vxpose.xlu0.b32.cont [6/16] %v4965, 128
        %4998 = vxpose.xlu0.b32.cont [7/16] %v4966, 128
        %4999 = vxpose.xlu0.b32.cont [8/16] %v4967, 128
        %5000 = vxpose.xlu0.b32.cont [9/16] %v4968, 128
        %5001 = vxpose.xlu0.b32.cont [10/16] %v4969, 128
        %5002 = vxpose.xlu0.b32.cont [11/16] %v4970, 128
        %5003 = vxpose.xlu0.b32.cont [12/16] %v4971, 128
        %5004 = vxpose.xlu0.b32.cont [13/16] %v4972, 128
        %5005 = vxpose.xlu0.b32.cont [14/16] %v4973, 128
        %5006 = vxpose.xlu0.b32.cont [15/16] %v4974, 128
        %5007 = vxpose.xlu0.b32.end [16/16] %v4975, 128
        %v5008 = vpop.trf.xlu0
        %v5009 = vpop.trf.xlu0
        %v5010 = vpop.trf.xlu0
        %v5011 = vpop.trf.xlu0
        %v5012 = vpop.trf.xlu0
        %v5013 = vpop.trf.xlu0
        %v5014 = vpop.trf.xlu0
        %v5015 = vpop.trf.xlu0
        %v5016 = vpop.trf.xlu0
        %v5017 = vpop.trf.xlu0
        %v5018 = vpop.trf.xlu0
        %v5019 = vpop.trf.xlu0
        %v5020 = vpop.trf.xlu0
        %v5021 = vpop.trf.xlu0
        %v5022 = vpop.trf.xlu0
        %v5023 = vpop.trf.xlu0
        %5024 = vxpose.xlu0.b32.start [1/16] %v4976, 128
        %5025 = vxpose.xlu0.b32.cont [2/16] %v4977, 128
        %5026 = vxpose.xlu0.b32.cont [3/16] %v4978, 128
        %5027 = vxpose.xlu0.b32.cont [4/16] %v4979, 128
        %5028 = vxpose.xlu0.b32.cont [5/16] %v4980, 128
        %5029 = vxpose.xlu0.b32.cont [6/16] %v4981, 128
        %5030 = vxpose.xlu0.b32.cont [7/16] %v4982, 128
        %5031 = vxpose.xlu0.b32.cont [8/16] %v4983, 128
        %5032 = vxpose.xlu0.b32.cont [9/16] %v4984, 128
        %5033 = vxpose.xlu0.b32.cont [10/16] %v4985, 128
        %5034 = vxpose.xlu0.b32.cont [11/16] %v4986, 128
        %5035 = vxpose.xlu0.b32.cont [12/16] %v4987, 128
        %5036 = vxpose.xlu0.b32.cont [13/16] %v4988, 128
        %5037 = vxpose.xlu0.b32.cont [14/16] %v4989, 128
        %5038 = vxpose.xlu0.b32.cont [15/16] %v4990, 128
        %5039 = vxpose.xlu0.b32.end [16/16] %v4991, 128
        %v5040 = vpop.trf.xlu0
        %v5041 = vpop.trf.xlu0
        %v5042 = vpop.trf.xlu0
        %v5043 = vpop.trf.xlu0
        %v5044 = vpop.trf.xlu0
        %v5045 = vpop.trf.xlu0
        %v5046 = vpop.trf.xlu0
        %v5047 = vpop.trf.xlu0
        %v5048 = vpop.trf.xlu0
        %v5049 = vpop.trf.xlu0
        %v5050 = vpop.trf.xlu0
        %v5051 = vpop.trf.xlu0
        %v5052 = vpop.trf.xlu0
        %v5053 = vpop.trf.xlu0
        %v5054 = vpop.trf.xlu0
        %v5055 = vpop.trf.xlu0
        %5056 = vst [vmem:[%s245] sm:$0xff] %v5008
        %5057 = vst [vmem:[%s245 + $0x8] sm:$0xff] %v5040
        %s5058 = sand.u32 %s159, 1
        %s5059 = scalar_lea.sflag [#allocation3], %s5058
        %s5060 = sand.u32 %s159, 1
        %s5061 = smul.addr %s5060, 16
        %s5062 = scalar_lea.vmem [#allocation2], %s5061
        // Predicated region
        $region45: #{tpu_custom_call.1} parent=43 // pred_check
          %p5063 = pneg %p169
        $region46: #{tpu_custom_call.1} parent=43 // pred_check_branch
          %5065 = sbr.rel (%p5063) target = $region48
        $region47: #{tpu_custom_call.1} parent=43 // pred_region
          %s5066 = smul.u32 2, %s20
          %s5068 = ssub.s32 256, 256
          %5069 = vsyncadd %s5059, %s5068
          %s5070 = smul.addr %s5066, 128
          %s5071 = scalar_lea.hbm %s6, %s5070
          %s5073 = sshll.u32 %s5062, 4
          %s5074 = int_to_ptr.vmem [resolvable:$true] %s5073
          %5076 = dma.vmem_to_hbm [thread:$0]  %s5074, 256, %s5071, %s5059
        $region48: #{tpu_custom_call.1} parent=43 // pred_fallthru
          _
      $region44: #{tpu_custom_call.1} parent=5 // pred_fallthru
        _
      %p5077 = scmp.le.s32.totalorder 2, %s15
      // Predicated region
      $region49: #{tpu_custom_call.1} parent=5 // pred_check
        %p5078 = pneg %p5077
      $region50: #{tpu_custom_call.1} parent=5 // pred_check_branch
        %5080 = sbr.rel (%p5078) target = $region52
      $region51: #{tpu_custom_call.1} parent=5 // pred_region
        %s5081 = ssub.s32 %s15, 2
        // Predicated region
        $region53: #{tpu_custom_call.1} parent=51 // pred_check
          %p5082 = pneg %p175
        $region54: #{tpu_custom_call.1} parent=51 // pred_check_branch
          %5084 = sbr.rel (%p5082) target = $region56
        $region55: #{tpu_custom_call.1} parent=51 // pred_region
          %s5085 = sand.u32 %s160, 1
          %s5086 = scalar_lea.sflag [#allocation3], %s5085
          %s5087 = sand.u32 %s160, 1
          %s5088 = smul.addr %s5087, 16
          %s5089 = scalar_lea.vmem [#allocation2], %s5088
          %5090 = dma.done %s5086, 256
        $region56: #{tpu_custom_call.1} parent=51 // pred_fallthru
          _
      $region52: #{tpu_custom_call.1} parent=5 // pred_fallthru
        _
    $region6: #{tpu_custom_call.1} parent=1 // loop_footer
      %s19 = sadd.s32 1, %s15
    $region7: #{tpu_custom_call.1} parent=1 // loop_footer_branch
      %14 = sbr.rel target = $region3
    $region8: #{tpu_custom_call.1} parent=1 // loop_exit
      _
    %5091 = vsyncpa [#allocation3], 1
    %s5092 = scalar_lea.sflag [#allocation3], 1
    %5093 = vsyncpa %s5092, 1

</llo_original>
